<compile_context>
chip_gen: v7x
topology: tpu7x:2x2x1
jax: 0.10.0
libtpu: 0.0.40
codegen_flags: <defaults>
</compile_context>

<pallas_src>
import functools

import jax
import jax.numpy as jnp
from jax.experimental import pallas as pl
from jax.experimental.pallas import tpu as pltpu


def _round_up(x, m):
    return (x + m - 1) // m * m


def _vmem_spec(shape):
    n = len(shape)
    return pl.BlockSpec(shape, lambda *_: (0,) * n)


# ----------------------------------------------------------------------------
# Fused kernel: all LSTM layers + final Linear, one invocation, no grid.
# ----------------------------------------------------------------------------
def _fused_lstm_fc_kernel(num_layers, seq_len, batch_p, *refs):
    """Fully fused LSTM stack + FC.

    Inputs (in order):
      x_ref                 (T*Bp, D)   bf16, time-major flattened input
      per layer l:
        w_ih_t (Din,4Hp) bf16   [VMEM for l==0, pl.ANY (HBM) for l>=1]
        w_hh_t (Hp, 4Hp) bf16   [VMEM for l==0, pl.ANY (HBM) for l>=1]
        bias   (1,  4Hp) f32    [VMEM]            gate order i,f,g,o
      w_fc   (Hp, Op) bf16 [pl.ANY], b_fc (1, Op) f32 [VMEM]
    Output:
      out_ref (Bp, Op) f32
    Scratch:
      gx_sc   (T*Bp, 4Hp) f32   hoisted input-projection gates
      seq_sc  (T*Bp, Hp)  bf16  hidden sequence fed to the next layer
      per layer l>=1: w_ih_sc (Hp,4Hp) bf16, w_hh_sc (Hp,4Hp) bf16
      w_fc_sc (Hp, Op) bf16
      sem     DMA semaphores, one per async weight copy
    """
    T, Bp = seq_len, batch_p

    # ---- unpack refs ---------------------------------------------------
    idx = 0
    x_ref = refs[idx]; idx += 1
    layer_in = []
    for _ in range(num_layers):
        layer_in.append((refs[idx], refs[idx + 1], refs[idx + 2]))
        idx += 3
    w_fc_hbm = refs[idx]; idx += 1
    b_fc_ref = refs[idx]; idx += 1
    out_ref = refs[idx]; idx += 1
    gx_sc = refs[idx]; idx += 1
    seq_sc = refs[idx]; idx += 1
    deep_w_sc = []
    for _ in range(num_layers - 1):
        deep_w_sc.append((refs[idx], refs[idx + 1]))
        idx += 2
    w_fc_sc = refs[idx]; idx += 1
    sem = refs[idx]; idx += 1

    Hp = seq_sc.shape[-1]

    # ---- kick off weight DMAs so they hide behind layer-0 compute ------
    copies = []
    si = 0
    for l in range(1, num_layers):
        w_ih_hbm, w_hh_hbm, _ = layer_in[l]
        w_ih_sc, w_hh_sc = deep_w_sc[l - 1]
        cp_ih = pltpu.make_async_copy(w_ih_hbm, w_ih_sc, sem.at[si])
        cp_hh = pltpu.make_async_copy(w_hh_hbm, w_hh_sc, sem.at[si + 1])
        cp_ih.start()
        cp_hh.start()
        copies.append((cp_ih, cp_hh))
        si += 2
    fc_copy = pltpu.make_async_copy(w_fc_hbm, w_fc_sc, sem.at[si])
    fc_copy.start()

    # ---- LSTM stack -----------------------------------------------------
    h = None
    for layer in range(num_layers):
        _, _, b_ref = layer_in[layer]
        if layer == 0:
            w_ih_src, w_hh_src = layer_in[0][0], layer_in[0][1]
            x_in = x_ref[...]                        # (T*Bp, D) bf16
        else:
            cp_ih, cp_hh = copies[layer - 1]
            cp_ih.wait()
            cp_hh.wait()
            w_ih_src, w_hh_src = deep_w_sc[layer - 1]
            x_in = seq_sc[...]                       # (T*Bp, Hp) bf16

        # Hoisted input projection: one tall matmul for the whole sequence
        # (M = T*Bp) instead of T tiny matmuls on the serial path.
        gx_sc[...] = (
            jnp.dot(x_in, w_ih_src[...], preferred_element_type=jnp.float32)
            + b_ref[...]
        )

        # Serial recurrence: only h @ W_hh + elementwise gates per step.
        h = jnp.zeros((Bp, Hp), jnp.float32)
        c = jnp.zeros((Bp, Hp), jnp.float32)
        last_layer = layer == num_layers - 1
        for t in range(T):  # static unroll; T is small and static
            row = t * Bp    # python int -> contiguous, aligned slice
            gates = gx_sc[pl.ds(row, Bp), :] + jnp.dot(
                h.astype(jnp.bfloat16), w_hh_src[...],
                preferred_element_type=jnp.float32,
            )  # (Bp, 4Hp), gate blocks at 128-lane-aligned offsets
            i_g = jax.nn.sigmoid(gates[:, 0 * Hp:1 * Hp])
            f_g = jax.nn.sigmoid(gates[:, 1 * Hp:2 * Hp])
            g_g = jnp.tanh(gates[:, 2 * Hp:3 * Hp])
            o_g = jax.nn.sigmoid(gates[:, 3 * Hp:4 * Hp])
            c = f_g * c + i_g * g_g
            h = o_g * jnp.tanh(c)
            if not last_layer:
                seq_sc[pl.ds(row, Bp), :] = h.astype(seq_sc.dtype)

    # ---- Final Linear on the last timestep's hidden state ---------------
    fc_copy.wait()
    out_ref[...] = (
        jnp.dot(h.astype(jnp.bfloat16), w_fc_sc[...],
                preferred_element_type=jnp.float32)
        + b_fc_ref[...]
    ).astype(out_ref.dtype)


# ----------------------------------------------------------------------------
# Wrapper
# ----------------------------------------------------------------------------
@functools.partial(jax.jit, static_argnames=("out_dim",))
def lstm_model_forward(x, kparams, *, out_dim):
    """Equivalent of LSTMModel.forward. x: (B, T, input_dim) batch-first."""
    B, T, D = x.shape
    num_layers = len(kparams["lstm"])
    Hp = kparams["lstm"][0]["w_hh_t"].shape[0]
    Op = kparams["fc"]["w_t"].shape[1]
    Bp = max(8, _round_up(B, 8))  # sublane-aligned batch

    # Tiny one-shot prep (fused XLA op): pad batch to 8 sublanes, flatten to
    # time-major 2-D (contiguous lane-dense slices in-kernel), cast to bf16.
    x_p = jnp.pad(x.astype(jnp.float32), ((0, Bp - B), (0, 0), (0, 0)))
    x_tm = jnp.transpose(x_p, (1, 0, 2)).reshape(T * Bp, D).astype(jnp.bfloat16)

    inputs = [x_tm]
    in_specs = [_vmem_spec(x_tm.shape)]
    for layer, lp in enumerate(kparams["lstm"]):
        inputs += [lp["w_ih_t"], lp["w_hh_t"], lp["bias"]]
        if layer == 0:
            in_specs += [_vmem_spec(lp["w_ih_t"].shape),
                         _vmem_spec(lp["w_hh_t"].shape),
                         _vmem_spec(lp["bias"].shape)]
        else:
            # Deep-layer weights stay in HBM; the kernel DMAs them into VMEM
            # scratch overlapped with layer-0 compute.
            in_specs += [pl.BlockSpec(memory_space=pl.ANY),
                         pl.BlockSpec(memory_space=pl.ANY),
                         _vmem_spec(lp["bias"].shape)]
    inputs += [kparams["fc"]["w_t"], kparams["fc"]["bias"]]
    in_specs += [pl.BlockSpec(memory_space=pl.ANY),
                 _vmem_spec(kparams["fc"]["bias"].shape)]

    n_copies = 2 * (num_layers - 1) + 1
    scratch_shapes = [
        pltpu.VMEM((T * Bp, 4 * Hp), jnp.float32),   # hoisted gate inputs
        pltpu.VMEM((T * Bp, Hp), jnp.bfloat16),      # inter-layer hidden seq
    ]
    for _ in range(num_layers - 1):
        scratch_shapes += [pltpu.VMEM((Hp, 4 * Hp), jnp.bfloat16),
                           pltpu.VMEM((Hp, 4 * Hp), jnp.bfloat16)]
    scratch_shapes += [pltpu.VMEM((Hp, Op), jnp.bfloat16),
                       pltpu.SemaphoreType.DMA((n_copies,))]

    kernel = functools.partial(_fused_lstm_fc_kernel, num_layers, T, Bp)

    out_p = pl.pallas_call(
        kernel,
        out_shape=jax.ShapeDtypeStruct((Bp, Op), jnp.float32),
        in_specs=in_specs,
        out_specs=_vmem_spec((Bp, Op)),
        scratch_shapes=scratch_shapes,
    )(*inputs)
    return out_p[:B, :out_dim]


# ----------------------------------------------------------------------------
# Parameters: PyTorch-layout init + one-time padding/pre-transpose for kernel
# ----------------------------------------------------------------------------
def init_params(key, input_dim, hidden_dim, output_dim, num_layers):
    """PyTorch-layout parameters (nn.LSTM / nn.Linear shapes and init range)."""
    k = 1.0 / (hidden_dim ** 0.5)
    params = {"lstm": [], "fc": {}}
    for layer in range(num_layers):
        d_in = input_dim if layer == 0 else hidden_dim
        key, k1, k2, k3, k4 = jax.random.split(key, 5)
        params["lstm"].append(
            {
                "w_ih": jax.random.uniform(k1, (4 * hidden_dim, d_in), jnp.float32, -k, k),
                "w_hh": jax.random.uniform(k2, (4 * hidden_dim, hidden_dim), jnp.float32, -k, k),
                "b_ih": jax.random.uniform(k3, (4 * hidden_dim,), jnp.float32, -k, k),
                "b_hh": jax.random.uniform(k4, (4 * hidden_dim,), jnp.float32, -k, k),
            }
        )
    key, k5, k6 = jax.random.split(key, 3)
    params["fc"] = {
        "w": jax.random.uniform(k5, (output_dim, hidden_dim), jnp.float32, -k, k),
        "b": jax.random.uniform(k6, (output_dim,), jnp.float32, -k, k),
    }
    return params


def _pad_gate_cols(w_t, h, hp):
    """(K, 4h) -> (K, 4hp): zero-pad each of the 4 gate blocks to hp columns."""
    k = w_t.shape[0]
    return jnp.pad(w_t.reshape(k, 4, h), ((0, 0), (0, 0), (0, hp - h))).reshape(k, 4 * hp)


def prepare_kernel_params(params, hidden_dim):
    """One-time pre-transpose + zero-padding + bf16 cast of weights.

    Hidden size is padded to a multiple of 128 so gate slices are lane-aligned;
    padded gate columns have zero weights/bias -> padded h/c remain exactly 0.
    FC output is padded to 128 lanes for a lane-dense (unmasked) output store.
    Matmul weights are cast to bf16 (MXU-native); biases stay f32 and are added
    in the f32 accumulation domain.
    """
    hp = _round_up(hidden_dim, 128)
    kp = {"lstm": [], "fc": {}}
    for layer, lp in enumerate(params["lstm"]):
        w_ih_t = _pad_gate_cols(lp["w_ih"].T, hidden_dim, hp)          # (Din, 4Hp)
        if layer > 0:  # input of deeper layers is the padded hidden (Hp feats)
            w_ih_t = jnp.pad(w_ih_t, ((0, hp - hidden_dim), (0, 0)))
        w_hh_t = _pad_gate_cols(lp["w_hh"].T, hidden_dim, hp)          # (H, 4Hp)
        w_hh_t = jnp.pad(w_hh_t, ((0, hp - hidden_dim), (0, 0)))       # (Hp, 4Hp)
        bias = _pad_gate_cols((lp["b_ih"] + lp["b_hh"])[None, :], hidden_dim, hp)
        kp["lstm"].append(
            {
                "w_ih_t": w_ih_t.astype(jnp.bfloat16),
                "w_hh_t": w_hh_t.astype(jnp.bfloat16),
                "bias": bias,  # f32
            }
        )
    out_dim = params["fc"]["w"].shape[0]
    op = _round_up(max(out_dim, 128), 128)
    w_fc_t = jnp.pad(params["fc"]["w"].T,
                     ((0, hp - hidden_dim), (0, op - out_dim)))         # (Hp, Op)
    b_fc = jnp.pad(params["fc"]["b"], (0, op - out_dim))[None, :]       # (1, Op)
    kp["fc"] = {"w_t": w_fc_t.astype(jnp.bfloat16), "bias": b_fc}
    return kp


# ----------------------------------------------------------------------------
# Pure-JAX reference (PyTorch semantics, f32) for the correctness check
# ----------------------------------------------------------------------------
def reference_forward(x, params):
    b = x.shape[0]
    hdim = params["lstm"][0]["w_hh"].shape[1]
    seq = x  # (B, T, D)
    for lp in params["lstm"]:
        def step(carry, x_t, lp=lp, h_=hdim):
            h, c = carry
            gates = x_t @ lp["w_ih"].T + h @ lp["w_hh"].T + lp["b_ih"] + lp["b_hh"]
            i = jax.nn.sigmoid(gates[:, 0 * h_:1 * h_])
            f = jax.nn.sigmoid(gates[:, 1 * h_:2 * h_])
            g = jnp.tanh(gates[:, 2 * h_:3 * h_])
            o = jax.nn.sigmoid(gates[:, 3 * h_:4 * h_])
            c = f * c + i * g
            h = o * jnp.tanh(c)
            return (h, c), h

        init = (jnp.zeros((b, hdim), jnp.float32), jnp.zeros((b, hdim), jnp.float32))
        _, hs = jax.lax.scan(step, init, jnp.transpose(seq, (1, 0, 2)))
        seq = jnp.transpose(hs, (1, 0, 2))
    return seq[:, -1, :] @ params["fc"]["w"].T + params["fc"]["b"]


if __name__ == "__main__":
    B, T, INPUT_DIM, HIDDEN_DIM, OUTPUT_DIM, NUM_LAYERS = 2, 8, 16, 32, 4, 2

    key = jax.random.PRNGKey(0)
    key, xk = jax.random.split(key)
    x = jax.random.normal(xk, (B, T, INPUT_DIM), jnp.float32)

    params = init_params(key, INPUT_DIM, HIDDEN_DIM, OUTPUT_DIM, NUM_LAYERS)
    kparams = prepare_kernel_params(params, HIDDEN_DIM)

    out = lstm_model_forward(x, kparams, out_dim=OUTPUT_DIM)
    out = jax.block_until_ready(out)

    ref = reference_forward(x, params)
    assert out.shape == (B, OUTPUT_DIM)
    max_err = float(jnp.max(jnp.abs(out - ref)))
    # bf16 MXU operands (f32 accumulation, f32 gate math) vs. a pure-f32
    # reference: expect a few e-3 of drift, so check at 2e-2.
    assert jnp.allclose(out, ref, atol=2e-2, rtol=2e-2), f"max abs err {max_err}"
    print("KERNEL_OK")
</pallas_src>

<mosaic_0001>
module attributes {stable_mosaic.version = 11 : i64} {
  func.func @_fused_lstm_fc_kernel(%arg0: memref<64x16xbf16, #tpu.memory_space<vmem>>, %arg1: memref<16x512xbf16, #tpu.memory_space<vmem>>, %arg2: memref<128x512xbf16, #tpu.memory_space<vmem>>, %arg3: memref<1x512xf32, #tpu.memory_space<vmem>>, %arg4: memref<128x512xbf16, #tpu.memory_space<any>>, %arg5: memref<128x512xbf16, #tpu.memory_space<any>>, %arg6: memref<1x512xf32, #tpu.memory_space<vmem>>, %arg7: memref<128x128xbf16, #tpu.memory_space<any>>, %arg8: memref<1x128xf32, #tpu.memory_space<vmem>>, %arg9: memref<8x128xf32, #tpu.memory_space<vmem>>, %arg10: memref<64x512xf32, #tpu.memory_space<vmem>>, %arg11: memref<64x128xbf16, #tpu.memory_space<vmem>>, %arg12: memref<128x512xbf16, #tpu.memory_space<vmem>>, %arg13: memref<128x512xbf16, #tpu.memory_space<vmem>>, %arg14: memref<128x128xbf16, #tpu.memory_space<vmem>>, %arg15: memref<3x!tpu.dma_semaphore, #tpu.memory_space<semaphore_mem>>) attributes {dimension_semantics = [], scalar_prefetch = 0 : i64, scratch_operands = 6 : i64, tpu.core_type = #tpu.core_type<tc>} {
    %c0_i32 = arith.constant 0 : i32
    %0 = tpu.memref_slice %arg15[%c0_i32] : memref<3x!tpu.dma_semaphore, #tpu.memory_space<semaphore_mem>> -> memref<1x!tpu.dma_semaphore, #tpu.memory_space<semaphore_mem>>
    %1 = tpu.memref_squeeze %0 : memref<1x!tpu.dma_semaphore, #tpu.memory_space<semaphore_mem>> -> memref<!tpu.dma_semaphore, #tpu.memory_space<semaphore_mem>>
    tpu.enqueue_dma source(%arg4 : memref<128x512xbf16, #tpu.memory_space<any>>) target(%arg12 : memref<128x512xbf16, #tpu.memory_space<vmem>>) target_semaphore(%1 : memref<!tpu.dma_semaphore, #tpu.memory_space<semaphore_mem>>)
    %c1_i32 = arith.constant 1 : i32
    %2 = tpu.memref_slice %arg15[%c1_i32] : memref<3x!tpu.dma_semaphore, #tpu.memory_space<semaphore_mem>> -> memref<1x!tpu.dma_semaphore, #tpu.memory_space<semaphore_mem>>
    %3 = tpu.memref_squeeze %2 : memref<1x!tpu.dma_semaphore, #tpu.memory_space<semaphore_mem>> -> memref<!tpu.dma_semaphore, #tpu.memory_space<semaphore_mem>>
    tpu.enqueue_dma source(%arg5 : memref<128x512xbf16, #tpu.memory_space<any>>) target(%arg13 : memref<128x512xbf16, #tpu.memory_space<vmem>>) target_semaphore(%3 : memref<!tpu.dma_semaphore, #tpu.memory_space<semaphore_mem>>)
    %c2_i32 = arith.constant 2 : i32
    %4 = tpu.memref_slice %arg15[%c2_i32] : memref<3x!tpu.dma_semaphore, #tpu.memory_space<semaphore_mem>> -> memref<1x!tpu.dma_semaphore, #tpu.memory_space<semaphore_mem>>
    %5 = tpu.memref_squeeze %4 : memref<1x!tpu.dma_semaphore, #tpu.memory_space<semaphore_mem>> -> memref<!tpu.dma_semaphore, #tpu.memory_space<semaphore_mem>>
    tpu.enqueue_dma source(%arg7 : memref<128x128xbf16, #tpu.memory_space<any>>) target(%arg14 : memref<128x128xbf16, #tpu.memory_space<vmem>>) target_semaphore(%5 : memref<!tpu.dma_semaphore, #tpu.memory_space<semaphore_mem>>)
    %c0 = arith.constant 0 : index
    %c0_0 = arith.constant 0 : index
    %6 = vector.load %arg0[%c0, %c0_0] : memref<64x16xbf16, #tpu.memory_space<vmem>>, vector<64x16xbf16>
    %c0_1 = arith.constant 0 : index
    %c0_2 = arith.constant 0 : index
    %7 = vector.load %arg1[%c0_1, %c0_2] : memref<16x512xbf16, #tpu.memory_space<vmem>>, vector<16x512xbf16>
    %cst = arith.constant dense<0.000000e+00> : vector<64x512xf32>
    %8 = tpu.matmul %6, %7, %cst {dimension_numbers = #tpu.dot_dimension_numbers<[1], [0], [0], [1], [0, 0, 1, 1], [], []>} : vector<64x16xbf16>, vector<16x512xbf16>, vector<64x512xf32> -> vector<64x512xf32>
    %c0_3 = arith.constant 0 : index
    %c0_4 = arith.constant 0 : index
    %9 = vector.load %arg3[%c0_3, %c0_4] : memref<1x512xf32, #tpu.memory_space<vmem>>, vector<1x512xf32>
    %10 = vector.broadcast %9 : vector<1x512xf32> to vector<64x512xf32>
    %11 = arith.addf %8, %10 : vector<64x512xf32>
    %c0_5 = arith.constant 0 : index
    %c0_6 = arith.constant 0 : index
    %12 = vector.load %arg10[%c0_5, %c0_6] : memref<64x512xf32, #tpu.memory_space<vmem>>, vector<64x512xf32>
    tpu.vector_store %arg10[%c0_5, %c0_6], %11 {strides = array<i32>} : memref<64x512xf32, #tpu.memory_space<vmem>>, vector<64x512xf32>,
    %cst_7 = arith.constant 0.000000e+00 : f32
    %13 = vector.broadcast %cst_7 : f32 to vector<8x128xf32>
    %cst_8 = arith.constant 0.000000e+00 : f32
    %14 = vector.broadcast %cst_8 : f32 to vector<8x128xf32>
    %c0_9 = arith.constant 0 : index
    %c0_10 = arith.constant 0 : index
    %15 = vector.load %arg10[%c0_9, %c0_10] : memref<64x512xf32, #tpu.memory_space<vmem>>, vector<8x512xf32>
    %16 = arith.truncf %13 : vector<8x128xf32> to vector<8x128xbf16>
    %c0_11 = arith.constant 0 : index
    %c0_12 = arith.constant 0 : index
    %17 = vector.load %arg2[%c0_11, %c0_12] : memref<128x512xbf16, #tpu.memory_space<vmem>>, vector<128x512xbf16>
    %cst_13 = arith.constant dense<0.000000e+00> : vector<8x512xf32>
    %18 = tpu.matmul %16, %17, %cst_13 {dimension_numbers = #tpu.dot_dimension_numbers<[1], [0], [0], [1], [0, 0, 1, 1], [], []>} : vector<8x128xbf16>, vector<128x512xbf16>, vector<8x512xf32> -> vector<8x512xf32>
    %19 = arith.addf %15, %18 : vector<8x512xf32>
    %20 = vector.extract_strided_slice %19 {offsets = [0, 0], sizes = [8, 128], strides = [1, 1]} : vector<8x512xf32> to vector<8x128xf32>
    %21 = arith.negf %20 : vector<8x128xf32>
    %22 = math.exp %21 : vector<8x128xf32>
    %cst_14 = arith.constant 1.000000e+00 : f32
    %23 = vector.broadcast %cst_14 : f32 to vector<8x128xf32>
    %24 = arith.addf %23, %22 : vector<8x128xf32>
    %25 = arith.divf %23, %24 : vector<8x128xf32>
    %26 = vector.extract_strided_slice %19 {offsets = [0, 128], sizes = [8, 128], strides = [1, 1]} : vector<8x512xf32> to vector<8x128xf32>
    %27 = arith.negf %26 : vector<8x128xf32>
    %28 = math.exp %27 : vector<8x128xf32>
    %cst_15 = arith.constant 1.000000e+00 : f32
    %29 = vector.broadcast %cst_15 : f32 to vector<8x128xf32>
    %30 = arith.addf %29, %28 : vector<8x128xf32>
    %31 = arith.divf %29, %30 : vector<8x128xf32>
    %32 = vector.extract_strided_slice %19 {offsets = [0, 256], sizes = [8, 128], strides = [1, 1]} : vector<8x512xf32> to vector<8x128xf32>
    %33 = math.tanh %32 : vector<8x128xf32>
    %34 = vector.extract_strided_slice %19 {offsets = [0, 384], sizes = [8, 128], strides = [1, 1]} : vector<8x512xf32> to vector<8x128xf32>
    %35 = arith.negf %34 : vector<8x128xf32>
    %36 = math.exp %35 : vector<8x128xf32>
    %cst_16 = arith.constant 1.000000e+00 : f32
    %37 = vector.broadcast %cst_16 : f32 to vector<8x128xf32>
    %38 = arith.addf %37, %36 : vector<8x128xf32>
    %39 = arith.divf %37, %38 : vector<8x128xf32>
    %40 = arith.mulf %31, %14 : vector<8x128xf32>
    %41 = arith.mulf %25, %33 : vector<8x128xf32>
    %42 = arith.addf %40, %41 : vector<8x128xf32>
    %43 = math.tanh %42 : vector<8x128xf32>
    %44 = arith.mulf %39, %43 : vector<8x128xf32>
    %45 = arith.truncf %44 : vector<8x128xf32> to vector<8x128xbf16>
    %c0_17 = arith.constant 0 : index
    %c0_18 = arith.constant 0 : index
    %46 = vector.load %arg11[%c0_17, %c0_18] : memref<64x128xbf16, #tpu.memory_space<vmem>>, vector<8x128xbf16>
    tpu.vector_store %arg11[%c0_17, %c0_18], %45 {strides = array<i32>} : memref<64x128xbf16, #tpu.memory_space<vmem>>, vector<8x128xbf16>,
    %c8 = arith.constant 8 : index
    %c0_19 = arith.constant 0 : index
    %47 = vector.load %arg10[%c8, %c0_19] : memref<64x512xf32, #tpu.memory_space<vmem>>, vector<8x512xf32>
    %48 = arith.truncf %44 : vector<8x128xf32> to vector<8x128xbf16>
    %c0_20 = arith.constant 0 : index
    %c0_21 = arith.constant 0 : index
    %49 = vector.load %arg2[%c0_20, %c0_21] : memref<128x512xbf16, #tpu.memory_space<vmem>>, vector<128x512xbf16>
    %cst_22 = arith.constant dense<0.000000e+00> : vector<8x512xf32>
    %50 = tpu.matmul %48, %49, %cst_22 {dimension_numbers = #tpu.dot_dimension_numbers<[1], [0], [0], [1], [0, 0, 1, 1], [], []>} : vector<8x128xbf16>, vector<128x512xbf16>, vector<8x512xf32> -> vector<8x512xf32>
    %51 = arith.addf %47, %50 : vector<8x512xf32>
    %52 = vector.extract_strided_slice %51 {offsets = [0, 0], sizes = [8, 128], strides = [1, 1]} : vector<8x512xf32> to vector<8x128xf32>
    %53 = arith.negf %52 : vector<8x128xf32>
    %54 = math.exp %53 : vector<8x128xf32>
    %cst_23 = arith.constant 1.000000e+00 : f32
    %55 = vector.broadcast %cst_23 : f32 to vector<8x128xf32>
    %56 = arith.addf %55, %54 : vector<8x128xf32>
    %57 = arith.divf %55, %56 : vector<8x128xf32>
    %58 = vector.extract_strided_slice %51 {offsets = [0, 128], sizes = [8, 128], strides = [1, 1]} : vector<8x512xf32> to vector<8x128xf32>
    %59 = arith.negf %58 : vector<8x128xf32>
    %60 = math.exp %59 : vector<8x128xf32>
    %cst_24 = arith.constant 1.000000e+00 : f32
    %61 = vector.broadcast %cst_24 : f32 to vector<8x128xf32>
    %62 = arith.addf %61, %60 : vector<8x128xf32>
    %63 = arith.divf %61, %62 : vector<8x128xf32>
    %64 = vector.extract_strided_slice %51 {offsets = [0, 256], sizes = [8, 128], strides = [1, 1]} : vector<8x512xf32> to vector<8x128xf32>
    %65 = math.tanh %64 : vector<8x128xf32>
    %66 = vector.extract_strided_slice %51 {offsets = [0, 384], sizes = [8, 128], strides = [1, 1]} : vector<8x512xf32> to vector<8x128xf32>
    %67 = arith.negf %66 : vector<8x128xf32>
    %68 = math.exp %67 : vector<8x128xf32>
    %cst_25 = arith.constant 1.000000e+00 : f32
    %69 = vector.broadcast %cst_25 : f32 to vector<8x128xf32>
    %70 = arith.addf %69, %68 : vector<8x128xf32>
    %71 = arith.divf %69, %70 : vector<8x128xf32>
    %72 = arith.mulf %63, %42 : vector<8x128xf32>
    %73 = arith.mulf %57, %65 : vector<8x128xf32>
    %74 = arith.addf %72, %73 : vector<8x128xf32>
    %75 = math.tanh %74 : vector<8x128xf32>
    %76 = arith.mulf %71, %75 : vector<8x128xf32>
    %77 = arith.truncf %76 : vector<8x128xf32> to vector<8x128xbf16>
    %c8_26 = arith.constant 8 : index
    %c0_27 = arith.constant 0 : index
    %78 = vector.load %arg11[%c8_26, %c0_27] : memref<64x128xbf16, #tpu.memory_space<vmem>>, vector<8x128xbf16>
    tpu.vector_store %arg11[%c8_26, %c0_27], %77 {strides = array<i32>} : memref<64x128xbf16, #tpu.memory_space<vmem>>, vector<8x128xbf16>,
    %c16 = arith.constant 16 : index
    %c0_28 = arith.constant 0 : index
    %79 = vector.load %arg10[%c16, %c0_28] : memref<64x512xf32, #tpu.memory_space<vmem>>, vector<8x512xf32>
    %80 = arith.truncf %76 : vector<8x128xf32> to vector<8x128xbf16>
    %c0_29 = arith.constant 0 : index
    %c0_30 = arith.constant 0 : index
    %81 = vector.load %arg2[%c0_29, %c0_30] : memref<128x512xbf16, #tpu.memory_space<vmem>>, vector<128x512xbf16>
    %cst_31 = arith.constant dense<0.000000e+00> : vector<8x512xf32>
    %82 = tpu.matmul %80, %81, %cst_31 {dimension_numbers = #tpu.dot_dimension_numbers<[1], [0], [0], [1], [0, 0, 1, 1], [], []>} : vector<8x128xbf16>, vector<128x512xbf16>, vector<8x512xf32> -> vector<8x512xf32>
    %83 = arith.addf %79, %82 : vector<8x512xf32>
    %84 = vector.extract_strided_slice %83 {offsets = [0, 0], sizes = [8, 128], strides = [1, 1]} : vector<8x512xf32> to vector<8x128xf32>
    %85 = arith.negf %84 : vector<8x128xf32>
    %86 = math.exp %85 : vector<8x128xf32>
    %cst_32 = arith.constant 1.000000e+00 : f32
    %87 = vector.broadcast %cst_32 : f32 to vector<8x128xf32>
    %88 = arith.addf %87, %86 : vector<8x128xf32>
    %89 = arith.divf %87, %88 : vector<8x128xf32>
    %90 = vector.extract_strided_slice %83 {offsets = [0, 128], sizes = [8, 128], strides = [1, 1]} : vector<8x512xf32> to vector<8x128xf32>
    %91 = arith.negf %90 : vector<8x128xf32>
    %92 = math.exp %91 : vector<8x128xf32>
    %cst_33 = arith.constant 1.000000e+00 : f32
    %93 = vector.broadcast %cst_33 : f32 to vector<8x128xf32>
    %94 = arith.addf %93, %92 : vector<8x128xf32>
    %95 = arith.divf %93, %94 : vector<8x128xf32>
    %96 = vector.extract_strided_slice %83 {offsets = [0, 256], sizes = [8, 128], strides = [1, 1]} : vector<8x512xf32> to vector<8x128xf32>
    %97 = math.tanh %96 : vector<8x128xf32>
    %98 = vector.extract_strided_slice %83 {offsets = [0, 384], sizes = [8, 128], strides = [1, 1]} : vector<8x512xf32> to vector<8x128xf32>
    %99 = arith.negf %98 : vector<8x128xf32>
    %100 = math.exp %99 : vector<8x128xf32>
    %cst_34 = arith.constant 1.000000e+00 : f32
    %101 = vector.broadcast %cst_34 : f32 to vector<8x128xf32>
    %102 = arith.addf %101, %100 : vector<8x128xf32>
    %103 = arith.divf %101, %102 : vector<8x128xf32>
    %104 = arith.mulf %95, %74 : vector<8x128xf32>
    %105 = arith.mulf %89, %97 : vector<8x128xf32>
    %106 = arith.addf %104, %105 : vector<8x128xf32>
    %107 = math.tanh %106 : vector<8x128xf32>
    %108 = arith.mulf %103, %107 : vector<8x128xf32>
    %109 = arith.truncf %108 : vector<8x128xf32> to vector<8x128xbf16>
    %c16_35 = arith.constant 16 : index
    %c0_36 = arith.constant 0 : index
    %110 = vector.load %arg11[%c16_35, %c0_36] : memref<64x128xbf16, #tpu.memory_space<vmem>>, vector<8x128xbf16>
    tpu.vector_store %arg11[%c16_35, %c0_36], %109 {strides = array<i32>} : memref<64x128xbf16, #tpu.memory_space<vmem>>, vector<8x128xbf16>,
    %c24 = arith.constant 24 : index
    %c0_37 = arith.constant 0 : index
    %111 = vector.load %arg10[%c24, %c0_37] : memref<64x512xf32, #tpu.memory_space<vmem>>, vector<8x512xf32>
    %112 = arith.truncf %108 : vector<8x128xf32> to vector<8x128xbf16>
    %c0_38 = arith.constant 0 : index
    %c0_39 = arith.constant 0 : index
    %113 = vector.load %arg2[%c0_38, %c0_39] : memref<128x512xbf16, #tpu.memory_space<vmem>>, vector<128x512xbf16>
    %cst_40 = arith.constant dense<0.000000e+00> : vector<8x512xf32>
    %114 = tpu.matmul %112, %113, %cst_40 {dimension_numbers = #tpu.dot_dimension_numbers<[1], [0], [0], [1], [0, 0, 1, 1], [], []>} : vector<8x128xbf16>, vector<128x512xbf16>, vector<8x512xf32> -> vector<8x512xf32>
    %115 = arith.addf %111, %114 : vector<8x512xf32>
    %116 = vector.extract_strided_slice %115 {offsets = [0, 0], sizes = [8, 128], strides = [1, 1]} : vector<8x512xf32> to vector<8x128xf32>
    %117 = arith.negf %116 : vector<8x128xf32>
    %118 = math.exp %117 : vector<8x128xf32>
    %cst_41 = arith.constant 1.000000e+00 : f32
    %119 = vector.broadcast %cst_41 : f32 to vector<8x128xf32>
    %120 = arith.addf %119, %118 : vector<8x128xf32>
    %121 = arith.divf %119, %120 : vector<8x128xf32>
    %122 = vector.extract_strided_slice %115 {offsets = [0, 128], sizes = [8, 128], strides = [1, 1]} : vector<8x512xf32> to vector<8x128xf32>
    %123 = arith.negf %122 : vector<8x128xf32>
    %124 = math.exp %123 : vector<8x128xf32>
    %cst_42 = arith.constant 1.000000e+00 : f32
    %125 = vector.broadcast %cst_42 : f32 to vector<8x128xf32>
    %126 = arith.addf %125, %124 : vector<8x128xf32>
    %127 = arith.divf %125, %126 : vector<8x128xf32>
    %128 = vector.extract_strided_slice %115 {offsets = [0, 256], sizes = [8, 128], strides = [1, 1]} : vector<8x512xf32> to vector<8x128xf32>
    %129 = math.tanh %128 : vector<8x128xf32>
    %130 = vector.extract_strided_slice %115 {offsets = [0, 384], sizes = [8, 128], strides = [1, 1]} : vector<8x512xf32> to vector<8x128xf32>
    %131 = arith.negf %130 : vector<8x128xf32>
    %132 = math.exp %131 : vector<8x128xf32>
    %cst_43 = arith.constant 1.000000e+00 : f32
    %133 = vector.broadcast %cst_43 : f32 to vector<8x128xf32>
    %134 = arith.addf %133, %132 : vector<8x128xf32>
    %135 = arith.divf %133, %134 : vector<8x128xf32>
    %136 = arith.mulf %127, %106 : vector<8x128xf32>
    %137 = arith.mulf %121, %129 : vector<8x128xf32>
    %138 = arith.addf %136, %137 : vector<8x128xf32>
    %139 = math.tanh %138 : vector<8x128xf32>
    %140 = arith.mulf %135, %139 : vector<8x128xf32>
    %141 = arith.truncf %140 : vector<8x128xf32> to vector<8x128xbf16>
    %c24_44 = arith.constant 24 : index
    %c0_45 = arith.constant 0 : index
    %142 = vector.load %arg11[%c24_44, %c0_45] : memref<64x128xbf16, #tpu.memory_space<vmem>>, vector<8x128xbf16>
    tpu.vector_store %arg11[%c24_44, %c0_45], %141 {strides = array<i32>} : memref<64x128xbf16, #tpu.memory_space<vmem>>, vector<8x128xbf16>,
    %c32 = arith.constant 32 : index
    %c0_46 = arith.constant 0 : index
    %143 = vector.load %arg10[%c32, %c0_46] : memref<64x512xf32, #tpu.memory_space<vmem>>, vector<8x512xf32>
    %144 = arith.truncf %140 : vector<8x128xf32> to vector<8x128xbf16>
    %c0_47 = arith.constant 0 : index
    %c0_48 = arith.constant 0 : index
    %145 = vector.load %arg2[%c0_47, %c0_48] : memref<128x512xbf16, #tpu.memory_space<vmem>>, vector<128x512xbf16>
    %cst_49 = arith.constant dense<0.000000e+00> : vector<8x512xf32>
    %146 = tpu.matmul %144, %145, %cst_49 {dimension_numbers = #tpu.dot_dimension_numbers<[1], [0], [0], [1], [0, 0, 1, 1], [], []>} : vector<8x128xbf16>, vector<128x512xbf16>, vector<8x512xf32> -> vector<8x512xf32>
    %147 = arith.addf %143, %146 : vector<8x512xf32>
    %148 = vector.extract_strided_slice %147 {offsets = [0, 0], sizes = [8, 128], strides = [1, 1]} : vector<8x512xf32> to vector<8x128xf32>
    %149 = arith.negf %148 : vector<8x128xf32>
    %150 = math.exp %149 : vector<8x128xf32>
    %cst_50 = arith.constant 1.000000e+00 : f32
    %151 = vector.broadcast %cst_50 : f32 to vector<8x128xf32>
    %152 = arith.addf %151, %150 : vector<8x128xf32>
    %153 = arith.divf %151, %152 : vector<8x128xf32>
    %154 = vector.extract_strided_slice %147 {offsets = [0, 128], sizes = [8, 128], strides = [1, 1]} : vector<8x512xf32> to vector<8x128xf32>
    %155 = arith.negf %154 : vector<8x128xf32>
    %156 = math.exp %155 : vector<8x128xf32>
    %cst_51 = arith.constant 1.000000e+00 : f32
    %157 = vector.broadcast %cst_51 : f32 to vector<8x128xf32>
    %158 = arith.addf %157, %156 : vector<8x128xf32>
    %159 = arith.divf %157, %158 : vector<8x128xf32>
    %160 = vector.extract_strided_slice %147 {offsets = [0, 256], sizes = [8, 128], strides = [1, 1]} : vector<8x512xf32> to vector<8x128xf32>
    %161 = math.tanh %160 : vector<8x128xf32>
    %162 = vector.extract_strided_slice %147 {offsets = [0, 384], sizes = [8, 128], strides = [1, 1]} : vector<8x512xf32> to vector<8x128xf32>
    %163 = arith.negf %162 : vector<8x128xf32>
    %164 = math.exp %163 : vector<8x128xf32>
    %cst_52 = arith.constant 1.000000e+00 : f32
    %165 = vector.broadcast %cst_52 : f32 to vector<8x128xf32>
    %166 = arith.addf %165, %164 : vector<8x128xf32>
    %167 = arith.divf %165, %166 : vector<8x128xf32>
    %168 = arith.mulf %159, %138 : vector<8x128xf32>
    %169 = arith.mulf %153, %161 : vector<8x128xf32>
    %170 = arith.addf %168, %169 : vector<8x128xf32>
    %171 = math.tanh %170 : vector<8x128xf32>
    %172 = arith.mulf %167, %171 : vector<8x128xf32>
    %173 = arith.truncf %172 : vector<8x128xf32> to vector<8x128xbf16>
    %c32_53 = arith.constant 32 : index
    %c0_54 = arith.constant 0 : index
    %174 = vector.load %arg11[%c32_53, %c0_54] : memref<64x128xbf16, #tpu.memory_space<vmem>>, vector<8x128xbf16>
    tpu.vector_store %arg11[%c32_53, %c0_54], %173 {strides = array<i32>} : memref<64x128xbf16, #tpu.memory_space<vmem>>, vector<8x128xbf16>,
    %c40 = arith.constant 40 : index
    %c0_55 = arith.constant 0 : index
    %175 = vector.load %arg10[%c40, %c0_55] : memref<64x512xf32, #tpu.memory_space<vmem>>, vector<8x512xf32>
    %176 = arith.truncf %172 : vector<8x128xf32> to vector<8x128xbf16>
    %c0_56 = arith.constant 0 : index
    %c0_57 = arith.constant 0 : index
    %177 = vector.load %arg2[%c0_56, %c0_57] : memref<128x512xbf16, #tpu.memory_space<vmem>>, vector<128x512xbf16>
    %cst_58 = arith.constant dense<0.000000e+00> : vector<8x512xf32>
    %178 = tpu.matmul %176, %177, %cst_58 {dimension_numbers = #tpu.dot_dimension_numbers<[1], [0], [0], [1], [0, 0, 1, 1], [], []>} : vector<8x128xbf16>, vector<128x512xbf16>, vector<8x512xf32> -> vector<8x512xf32>
    %179 = arith.addf %175, %178 : vector<8x512xf32>
    %180 = vector.extract_strided_slice %179 {offsets = [0, 0], sizes = [8, 128], strides = [1, 1]} : vector<8x512xf32> to vector<8x128xf32>
    %181 = arith.negf %180 : vector<8x128xf32>
    %182 = math.exp %181 : vector<8x128xf32>
    %cst_59 = arith.constant 1.000000e+00 : f32
    %183 = vector.broadcast %cst_59 : f32 to vector<8x128xf32>
    %184 = arith.addf %183, %182 : vector<8x128xf32>
    %185 = arith.divf %183, %184 : vector<8x128xf32>
    %186 = vector.extract_strided_slice %179 {offsets = [0, 128], sizes = [8, 128], strides = [1, 1]} : vector<8x512xf32> to vector<8x128xf32>
    %187 = arith.negf %186 : vector<8x128xf32>
    %188 = math.exp %187 : vector<8x128xf32>
    %cst_60 = arith.constant 1.000000e+00 : f32
    %189 = vector.broadcast %cst_60 : f32 to vector<8x128xf32>
    %190 = arith.addf %189, %188 : vector<8x128xf32>
    %191 = arith.divf %189, %190 : vector<8x128xf32>
    %192 = vector.extract_strided_slice %179 {offsets = [0, 256], sizes = [8, 128], strides = [1, 1]} : vector<8x512xf32> to vector<8x128xf32>
    %193 = math.tanh %192 : vector<8x128xf32>
    %194 = vector.extract_strided_slice %179 {offsets = [0, 384], sizes = [8, 128], strides = [1, 1]} : vector<8x512xf32> to vector<8x128xf32>
    %195 = arith.negf %194 : vector<8x128xf32>
    %196 = math.exp %195 : vector<8x128xf32>
    %cst_61 = arith.constant 1.000000e+00 : f32
    %197 = vector.broadcast %cst_61 : f32 to vector<8x128xf32>
    %198 = arith.addf %197, %196 : vector<8x128xf32>
    %199 = arith.divf %197, %198 : vector<8x128xf32>
    %200 = arith.mulf %191, %170 : vector<8x128xf32>
    %201 = arith.mulf %185, %193 : vector<8x128xf32>
    %202 = arith.addf %200, %201 : vector<8x128xf32>
    %203 = math.tanh %202 : vector<8x128xf32>
    %204 = arith.mulf %199, %203 : vector<8x128xf32>
    %205 = arith.truncf %204 : vector<8x128xf32> to vector<8x128xbf16>
    %c40_62 = arith.constant 40 : index
    %c0_63 = arith.constant 0 : index
    %206 = vector.load %arg11[%c40_62, %c0_63] : memref<64x128xbf16, #tpu.memory_space<vmem>>, vector<8x128xbf16>
    tpu.vector_store %arg11[%c40_62, %c0_63], %205 {strides = array<i32>} : memref<64x128xbf16, #tpu.memory_space<vmem>>, vector<8x128xbf16>,
    %c48 = arith.constant 48 : index
    %c0_64 = arith.constant 0 : index
    %207 = vector.load %arg10[%c48, %c0_64] : memref<64x512xf32, #tpu.memory_space<vmem>>, vector<8x512xf32>
    %208 = arith.truncf %204 : vector<8x128xf32> to vector<8x128xbf16>
    %c0_65 = arith.constant 0 : index
    %c0_66 = arith.constant 0 : index
    %209 = vector.load %arg2[%c0_65, %c0_66] : memref<128x512xbf16, #tpu.memory_space<vmem>>, vector<128x512xbf16>
    %cst_67 = arith.constant dense<0.000000e+00> : vector<8x512xf32>
    %210 = tpu.matmul %208, %209, %cst_67 {dimension_numbers = #tpu.dot_dimension_numbers<[1], [0], [0], [1], [0, 0, 1, 1], [], []>} : vector<8x128xbf16>, vector<128x512xbf16>, vector<8x512xf32> -> vector<8x512xf32>
    %211 = arith.addf %207, %210 : vector<8x512xf32>
    %212 = vector.extract_strided_slice %211 {offsets = [0, 0], sizes = [8, 128], strides = [1, 1]} : vector<8x512xf32> to vector<8x128xf32>
    %213 = arith.negf %212 : vector<8x128xf32>
    %214 = math.exp %213 : vector<8x128xf32>
    %cst_68 = arith.constant 1.000000e+00 : f32
    %215 = vector.broadcast %cst_68 : f32 to vector<8x128xf32>
    %216 = arith.addf %215, %214 : vector<8x128xf32>
    %217 = arith.divf %215, %216 : vector<8x128xf32>
    %218 = vector.extract_strided_slice %211 {offsets = [0, 128], sizes = [8, 128], strides = [1, 1]} : vector<8x512xf32> to vector<8x128xf32>
    %219 = arith.negf %218 : vector<8x128xf32>
    %220 = math.exp %219 : vector<8x128xf32>
    %cst_69 = arith.constant 1.000000e+00 : f32
    %221 = vector.broadcast %cst_69 : f32 to vector<8x128xf32>
    %222 = arith.addf %221, %220 : vector<8x128xf32>
    %223 = arith.divf %221, %222 : vector<8x128xf32>
    %224 = vector.extract_strided_slice %211 {offsets = [0, 256], sizes = [8, 128], strides = [1, 1]} : vector<8x512xf32> to vector<8x128xf32>
    %225 = math.tanh %224 : vector<8x128xf32>
    %226 = vector.extract_strided_slice %211 {offsets = [0, 384], sizes = [8, 128], strides = [1, 1]} : vector<8x512xf32> to vector<8x128xf32>
    %227 = arith.negf %226 : vector<8x128xf32>
    %228 = math.exp %227 : vector<8x128xf32>
    %cst_70 = arith.constant 1.000000e+00 : f32
    %229 = vector.broadcast %cst_70 : f32 to vector<8x128xf32>
    %230 = arith.addf %229, %228 : vector<8x128xf32>
    %231 = arith.divf %229, %230 : vector<8x128xf32>
    %232 = arith.mulf %223, %202 : vector<8x128xf32>
    %233 = arith.mulf %217, %225 : vector<8x128xf32>
    %234 = arith.addf %232, %233 : vector<8x128xf32>
    %235 = math.tanh %234 : vector<8x128xf32>
    %236 = arith.mulf %231, %235 : vector<8x128xf32>
    %237 = arith.truncf %236 : vector<8x128xf32> to vector<8x128xbf16>
    %c48_71 = arith.constant 48 : index
    %c0_72 = arith.constant 0 : index
    %238 = vector.load %arg11[%c48_71, %c0_72] : memref<64x128xbf16, #tpu.memory_space<vmem>>, vector<8x128xbf16>
    tpu.vector_store %arg11[%c48_71, %c0_72], %237 {strides = array<i32>} : memref<64x128xbf16, #tpu.memory_space<vmem>>, vector<8x128xbf16>,
    %c56 = arith.constant 56 : index
    %c0_73 = arith.constant 0 : index
    %239 = vector.load %arg10[%c56, %c0_73] : memref<64x512xf32, #tpu.memory_space<vmem>>, vector<8x512xf32>
    %240 = arith.truncf %236 : vector<8x128xf32> to vector<8x128xbf16>
    %c0_74 = arith.constant 0 : index
    %c0_75 = arith.constant 0 : index
    %241 = vector.load %arg2[%c0_74, %c0_75] : memref<128x512xbf16, #tpu.memory_space<vmem>>, vector<128x512xbf16>
    %cst_76 = arith.constant dense<0.000000e+00> : vector<8x512xf32>
    %242 = tpu.matmul %240, %241, %cst_76 {dimension_numbers = #tpu.dot_dimension_numbers<[1], [0], [0], [1], [0, 0, 1, 1], [], []>} : vector<8x128xbf16>, vector<128x512xbf16>, vector<8x512xf32> -> vector<8x512xf32>
    %243 = arith.addf %239, %242 : vector<8x512xf32>
    %244 = vector.extract_strided_slice %243 {offsets = [0, 0], sizes = [8, 128], strides = [1, 1]} : vector<8x512xf32> to vector<8x128xf32>
    %245 = arith.negf %244 : vector<8x128xf32>
    %246 = math.exp %245 : vector<8x128xf32>
    %cst_77 = arith.constant 1.000000e+00 : f32
    %247 = vector.broadcast %cst_77 : f32 to vector<8x128xf32>
    %248 = arith.addf %247, %246 : vector<8x128xf32>
    %249 = arith.divf %247, %248 : vector<8x128xf32>
    %250 = vector.extract_strided_slice %243 {offsets = [0, 128], sizes = [8, 128], strides = [1, 1]} : vector<8x512xf32> to vector<8x128xf32>
    %251 = arith.negf %250 : vector<8x128xf32>
    %252 = math.exp %251 : vector<8x128xf32>
    %cst_78 = arith.constant 1.000000e+00 : f32
    %253 = vector.broadcast %cst_78 : f32 to vector<8x128xf32>
    %254 = arith.addf %253, %252 : vector<8x128xf32>
    %255 = arith.divf %253, %254 : vector<8x128xf32>
    %256 = vector.extract_strided_slice %243 {offsets = [0, 256], sizes = [8, 128], strides = [1, 1]} : vector<8x512xf32> to vector<8x128xf32>
    %257 = math.tanh %256 : vector<8x128xf32>
    %258 = vector.extract_strided_slice %243 {offsets = [0, 384], sizes = [8, 128], strides = [1, 1]} : vector<8x512xf32> to vector<8x128xf32>
    %259 = arith.negf %258 : vector<8x128xf32>
    %260 = math.exp %259 : vector<8x128xf32>
    %cst_79 = arith.constant 1.000000e+00 : f32
    %261 = vector.broadcast %cst_79 : f32 to vector<8x128xf32>
    %262 = arith.addf %261, %260 : vector<8x128xf32>
    %263 = arith.divf %261, %262 : vector<8x128xf32>
    %264 = arith.mulf %255, %234 : vector<8x128xf32>
    %265 = arith.mulf %249, %257 : vector<8x128xf32>
    %266 = arith.addf %264, %265 : vector<8x128xf32>
    %267 = math.tanh %266 : vector<8x128xf32>
    %268 = arith.mulf %263, %267 : vector<8x128xf32>
    %269 = arith.truncf %268 : vector<8x128xf32> to vector<8x128xbf16>
    %c56_80 = arith.constant 56 : index
    %c0_81 = arith.constant 0 : index
    %270 = vector.load %arg11[%c56_80, %c0_81] : memref<64x128xbf16, #tpu.memory_space<vmem>>, vector<8x128xbf16>
    tpu.vector_store %arg11[%c56_80, %c0_81], %269 {strides = array<i32>} : memref<64x128xbf16, #tpu.memory_space<vmem>>, vector<8x128xbf16>,
    %c0_i32_82 = arith.constant 0 : i32
    %271 = tpu.memref_slice %arg15[%c0_i32_82] : memref<3x!tpu.dma_semaphore, #tpu.memory_space<semaphore_mem>> -> memref<1x!tpu.dma_semaphore, #tpu.memory_space<semaphore_mem>>
    %272 = tpu.memref_squeeze %271 : memref<1x!tpu.dma_semaphore, #tpu.memory_space<semaphore_mem>> -> memref<!tpu.dma_semaphore, #tpu.memory_space<semaphore_mem>>
    tpu.wait_dma2 semaphore(%272 : memref<!tpu.dma_semaphore, #tpu.memory_space<semaphore_mem>>) src(%arg4 : memref<128x512xbf16, #tpu.memory_space<any>>) dst(%arg12 : memref<128x512xbf16, #tpu.memory_space<vmem>>)
    %c1_i32_83 = arith.constant 1 : i32
    %273 = tpu.memref_slice %arg15[%c1_i32_83] : memref<3x!tpu.dma_semaphore, #tpu.memory_space<semaphore_mem>> -> memref<1x!tpu.dma_semaphore, #tpu.memory_space<semaphore_mem>>
    %274 = tpu.memref_squeeze %273 : memref<1x!tpu.dma_semaphore, #tpu.memory_space<semaphore_mem>> -> memref<!tpu.dma_semaphore, #tpu.memory_space<semaphore_mem>>
    tpu.wait_dma2 semaphore(%274 : memref<!tpu.dma_semaphore, #tpu.memory_space<semaphore_mem>>) src(%arg5 : memref<128x512xbf16, #tpu.memory_space<any>>) dst(%arg13 : memref<128x512xbf16, #tpu.memory_space<vmem>>)
    %c0_84 = arith.constant 0 : index
    %c0_85 = arith.constant 0 : index
    %275 = vector.load %arg11[%c0_84, %c0_85] : memref<64x128xbf16, #tpu.memory_space<vmem>>, vector<64x128xbf16>
    %c0_86 = arith.constant 0 : index
    %c0_87 = arith.constant 0 : index
    %276 = vector.load %arg12[%c0_86, %c0_87] : memref<128x512xbf16, #tpu.memory_space<vmem>>, vector<128x512xbf16>
    %cst_88 = arith.constant dense<0.000000e+00> : vector<64x512xf32>
    %277 = tpu.matmul %275, %276, %cst_88 {dimension_numbers = #tpu.dot_dimension_numbers<[1], [0], [0], [1], [0, 0, 1, 1], [], []>} : vector<64x128xbf16>, vector<128x512xbf16>, vector<64x512xf32> -> vector<64x512xf32>
    %c0_89 = arith.constant 0 : index
    %c0_90 = arith.constant 0 : index
    %278 = vector.load %arg6[%c0_89, %c0_90] : memref<1x512xf32, #tpu.memory_space<vmem>>, vector<1x512xf32>
    %279 = vector.broadcast %278 : vector<1x512xf32> to vector<64x512xf32>
    %280 = arith.addf %277, %279 : vector<64x512xf32>
    %c0_91 = arith.constant 0 : index
    %c0_92 = arith.constant 0 : index
    %281 = vector.load %arg10[%c0_91, %c0_92] : memref<64x512xf32, #tpu.memory_space<vmem>>, vector<64x512xf32>
    tpu.vector_store %arg10[%c0_91, %c0_92], %280 {strides = array<i32>} : memref<64x512xf32, #tpu.memory_space<vmem>>, vector<64x512xf32>,
    %cst_93 = arith.constant 0.000000e+00 : f32
    %282 = vector.broadcast %cst_93 : f32 to vector<8x128xf32>
    %cst_94 = arith.constant 0.000000e+00 : f32
    %283 = vector.broadcast %cst_94 : f32 to vector<8x128xf32>
    %c0_95 = arith.constant 0 : index
    %c0_96 = arith.constant 0 : index
    %284 = vector.load %arg10[%c0_95, %c0_96] : memref<64x512xf32, #tpu.memory_space<vmem>>, vector<8x512xf32>
    %285 = arith.truncf %282 : vector<8x128xf32> to vector<8x128xbf16>
    %c0_97 = arith.constant 0 : index
    %c0_98 = arith.constant 0 : index
    %286 = vector.load %arg13[%c0_97, %c0_98] : memref<128x512xbf16, #tpu.memory_space<vmem>>, vector<128x512xbf16>
    %cst_99 = arith.constant dense<0.000000e+00> : vector<8x512xf32>
    %287 = tpu.matmul %285, %286, %cst_99 {dimension_numbers = #tpu.dot_dimension_numbers<[1], [0], [0], [1], [0, 0, 1, 1], [], []>} : vector<8x128xbf16>, vector<128x512xbf16>, vector<8x512xf32> -> vector<8x512xf32>
    %288 = arith.addf %284, %287 : vector<8x512xf32>
    %289 = vector.extract_strided_slice %288 {offsets = [0, 0], sizes = [8, 128], strides = [1, 1]} : vector<8x512xf32> to vector<8x128xf32>
    %290 = arith.negf %289 : vector<8x128xf32>
    %291 = math.exp %290 : vector<8x128xf32>
    %cst_100 = arith.constant 1.000000e+00 : f32
    %292 = vector.broadcast %cst_100 : f32 to vector<8x128xf32>
    %293 = arith.addf %292, %291 : vector<8x128xf32>
    %294 = arith.divf %292, %293 : vector<8x128xf32>
    %295 = vector.extract_strided_slice %288 {offsets = [0, 128], sizes = [8, 128], strides = [1, 1]} : vector<8x512xf32> to vector<8x128xf32>
    %296 = arith.negf %295 : vector<8x128xf32>
    %297 = math.exp %296 : vector<8x128xf32>
    %cst_101 = arith.constant 1.000000e+00 : f32
    %298 = vector.broadcast %cst_101 : f32 to vector<8x128xf32>
    %299 = arith.addf %298, %297 : vector<8x128xf32>
    %300 = arith.divf %298, %299 : vector<8x128xf32>
    %301 = vector.extract_strided_slice %288 {offsets = [0, 256], sizes = [8, 128], strides = [1, 1]} : vector<8x512xf32> to vector<8x128xf32>
    %302 = math.tanh %301 : vector<8x128xf32>
    %303 = vector.extract_strided_slice %288 {offsets = [0, 384], sizes = [8, 128], strides = [1, 1]} : vector<8x512xf32> to vector<8x128xf32>
    %304 = arith.negf %303 : vector<8x128xf32>
    %305 = math.exp %304 : vector<8x128xf32>
    %cst_102 = arith.constant 1.000000e+00 : f32
    %306 = vector.broadcast %cst_102 : f32 to vector<8x128xf32>
    %307 = arith.addf %306, %305 : vector<8x128xf32>
    %308 = arith.divf %306, %307 : vector<8x128xf32>
    %309 = arith.mulf %300, %283 : vector<8x128xf32>
    %310 = arith.mulf %294, %302 : vector<8x128xf32>
    %311 = arith.addf %309, %310 : vector<8x128xf32>
    %312 = math.tanh %311 : vector<8x128xf32>
    %313 = arith.mulf %308, %312 : vector<8x128xf32>
    %c8_103 = arith.constant 8 : index
    %c0_104 = arith.constant 0 : index
    %314 = vector.load %arg10[%c8_103, %c0_104] : memref<64x512xf32, #tpu.memory_space<vmem>>, vector<8x512xf32>
    %315 = arith.truncf %313 : vector<8x128xf32> to vector<8x128xbf16>
    %c0_105 = arith.constant 0 : index
    %c0_106 = arith.constant 0 : index
    %316 = vector.load %arg13[%c0_105, %c0_106] : memref<128x512xbf16, #tpu.memory_space<vmem>>, vector<128x512xbf16>
    %cst_107 = arith.constant dense<0.000000e+00> : vector<8x512xf32>
    %317 = tpu.matmul %315, %316, %cst_107 {dimension_numbers = #tpu.dot_dimension_numbers<[1], [0], [0], [1], [0, 0, 1, 1], [], []>} : vector<8x128xbf16>, vector<128x512xbf16>, vector<8x512xf32> -> vector<8x512xf32>
    %318 = arith.addf %314, %317 : vector<8x512xf32>
    %319 = vector.extract_strided_slice %318 {offsets = [0, 0], sizes = [8, 128], strides = [1, 1]} : vector<8x512xf32> to vector<8x128xf32>
    %320 = arith.negf %319 : vector<8x128xf32>
    %321 = math.exp %320 : vector<8x128xf32>
    %cst_108 = arith.constant 1.000000e+00 : f32
    %322 = vector.broadcast %cst_108 : f32 to vector<8x128xf32>
    %323 = arith.addf %322, %321 : vector<8x128xf32>
    %324 = arith.divf %322, %323 : vector<8x128xf32>
    %325 = vector.extract_strided_slice %318 {offsets = [0, 128], sizes = [8, 128], strides = [1, 1]} : vector<8x512xf32> to vector<8x128xf32>
    %326 = arith.negf %325 : vector<8x128xf32>
    %327 = math.exp %326 : vector<8x128xf32>
    %cst_109 = arith.constant 1.000000e+00 : f32
    %328 = vector.broadcast %cst_109 : f32 to vector<8x128xf32>
    %329 = arith.addf %328, %327 : vector<8x128xf32>
    %330 = arith.divf %328, %329 : vector<8x128xf32>
    %331 = vector.extract_strided_slice %318 {offsets = [0, 256], sizes = [8, 128], strides = [1, 1]} : vector<8x512xf32> to vector<8x128xf32>
    %332 = math.tanh %331 : vector<8x128xf32>
    %333 = vector.extract_strided_slice %318 {offsets = [0, 384], sizes = [8, 128], strides = [1, 1]} : vector<8x512xf32> to vector<8x128xf32>
    %334 = arith.negf %333 : vector<8x128xf32>
    %335 = math.exp %334 : vector<8x128xf32>
    %cst_110 = arith.constant 1.000000e+00 : f32
    %336 = vector.broadcast %cst_110 : f32 to vector<8x128xf32>
    %337 = arith.addf %336, %335 : vector<8x128xf32>
    %338 = arith.divf %336, %337 : vector<8x128xf32>
    %339 = arith.mulf %330, %311 : vector<8x128xf32>
    %340 = arith.mulf %324, %332 : vector<8x128xf32>
    %341 = arith.addf %339, %340 : vector<8x128xf32>
    %342 = math.tanh %341 : vector<8x128xf32>
    %343 = arith.mulf %338, %342 : vector<8x128xf32>
    %c16_111 = arith.constant 16 : index
    %c0_112 = arith.constant 0 : index
    %344 = vector.load %arg10[%c16_111, %c0_112] : memref<64x512xf32, #tpu.memory_space<vmem>>, vector<8x512xf32>
    %345 = arith.truncf %343 : vector<8x128xf32> to vector<8x128xbf16>
    %c0_113 = arith.constant 0 : index
    %c0_114 = arith.constant 0 : index
    %346 = vector.load %arg13[%c0_113, %c0_114] : memref<128x512xbf16, #tpu.memory_space<vmem>>, vector<128x512xbf16>
    %cst_115 = arith.constant dense<0.000000e+00> : vector<8x512xf32>
    %347 = tpu.matmul %345, %346, %cst_115 {dimension_numbers = #tpu.dot_dimension_numbers<[1], [0], [0], [1], [0, 0, 1, 1], [], []>} : vector<8x128xbf16>, vector<128x512xbf16>, vector<8x512xf32> -> vector<8x512xf32>
    %348 = arith.addf %344, %347 : vector<8x512xf32>
    %349 = vector.extract_strided_slice %348 {offsets = [0, 0], sizes = [8, 128], strides = [1, 1]} : vector<8x512xf32> to vector<8x128xf32>
    %350 = arith.negf %349 : vector<8x128xf32>
    %351 = math.exp %350 : vector<8x128xf32>
    %cst_116 = arith.constant 1.000000e+00 : f32
    %352 = vector.broadcast %cst_116 : f32 to vector<8x128xf32>
    %353 = arith.addf %352, %351 : vector<8x128xf32>
    %354 = arith.divf %352, %353 : vector<8x128xf32>
    %355 = vector.extract_strided_slice %348 {offsets = [0, 128], sizes = [8, 128], strides = [1, 1]} : vector<8x512xf32> to vector<8x128xf32>
    %356 = arith.negf %355 : vector<8x128xf32>
    %357 = math.exp %356 : vector<8x128xf32>
    %cst_117 = arith.constant 1.000000e+00 : f32
    %358 = vector.broadcast %cst_117 : f32 to vector<8x128xf32>
    %359 = arith.addf %358, %357 : vector<8x128xf32>
    %360 = arith.divf %358, %359 : vector<8x128xf32>
    %361 = vector.extract_strided_slice %348 {offsets = [0, 256], sizes = [8, 128], strides = [1, 1]} : vector<8x512xf32> to vector<8x128xf32>
    %362 = math.tanh %361 : vector<8x128xf32>
    %363 = vector.extract_strided_slice %348 {offsets = [0, 384], sizes = [8, 128], strides = [1, 1]} : vector<8x512xf32> to vector<8x128xf32>
    %364 = arith.negf %363 : vector<8x128xf32>
    %365 = math.exp %364 : vector<8x128xf32>
    %cst_118 = arith.constant 1.000000e+00 : f32
    %366 = vector.broadcast %cst_118 : f32 to vector<8x128xf32>
    %367 = arith.addf %366, %365 : vector<8x128xf32>
    %368 = arith.divf %366, %367 : vector<8x128xf32>
    %369 = arith.mulf %360, %341 : vector<8x128xf32>
    %370 = arith.mulf %354, %362 : vector<8x128xf32>
    %371 = arith.addf %369, %370 : vector<8x128xf32>
    %372 = math.tanh %371 : vector<8x128xf32>
    %373 = arith.mulf %368, %372 : vector<8x128xf32>
    %c24_119 = arith.constant 24 : index
    %c0_120 = arith.constant 0 : index
    %374 = vector.load %arg10[%c24_119, %c0_120] : memref<64x512xf32, #tpu.memory_space<vmem>>, vector<8x512xf32>
    %375 = arith.truncf %373 : vector<8x128xf32> to vector<8x128xbf16>
    %c0_121 = arith.constant 0 : index
    %c0_122 = arith.constant 0 : index
    %376 = vector.load %arg13[%c0_121, %c0_122] : memref<128x512xbf16, #tpu.memory_space<vmem>>, vector<128x512xbf16>
    %cst_123 = arith.constant dense<0.000000e+00> : vector<8x512xf32>
    %377 = tpu.matmul %375, %376, %cst_123 {dimension_numbers = #tpu.dot_dimension_numbers<[1], [0], [0], [1], [0, 0, 1, 1], [], []>} : vector<8x128xbf16>, vector<128x512xbf16>, vector<8x512xf32> -> vector<8x512xf32>
    %378 = arith.addf %374, %377 : vector<8x512xf32>
    %379 = vector.extract_strided_slice %378 {offsets = [0, 0], sizes = [8, 128], strides = [1, 1]} : vector<8x512xf32> to vector<8x128xf32>
    %380 = arith.negf %379 : vector<8x128xf32>
    %381 = math.exp %380 : vector<8x128xf32>
    %cst_124 = arith.constant 1.000000e+00 : f32
    %382 = vector.broadcast %cst_124 : f32 to vector<8x128xf32>
    %383 = arith.addf %382, %381 : vector<8x128xf32>
    %384 = arith.divf %382, %383 : vector<8x128xf32>
    %385 = vector.extract_strided_slice %378 {offsets = [0, 128], sizes = [8, 128], strides = [1, 1]} : vector<8x512xf32> to vector<8x128xf32>
    %386 = arith.negf %385 : vector<8x128xf32>
    %387 = math.exp %386 : vector<8x128xf32>
    %cst_125 = arith.constant 1.000000e+00 : f32
    %388 = vector.broadcast %cst_125 : f32 to vector<8x128xf32>
    %389 = arith.addf %388, %387 : vector<8x128xf32>
    %390 = arith.divf %388, %389 : vector<8x128xf32>
    %391 = vector.extract_strided_slice %378 {offsets = [0, 256], sizes = [8, 128], strides = [1, 1]} : vector<8x512xf32> to vector<8x128xf32>
    %392 = math.tanh %391 : vector<8x128xf32>
    %393 = vector.extract_strided_slice %378 {offsets = [0, 384], sizes = [8, 128], strides = [1, 1]} : vector<8x512xf32> to vector<8x128xf32>
    %394 = arith.negf %393 : vector<8x128xf32>
    %395 = math.exp %394 : vector<8x128xf32>
    %cst_126 = arith.constant 1.000000e+00 : f32
    %396 = vector.broadcast %cst_126 : f32 to vector<8x128xf32>
    %397 = arith.addf %396, %395 : vector<8x128xf32>
    %398 = arith.divf %396, %397 : vector<8x128xf32>
    %399 = arith.mulf %390, %371 : vector<8x128xf32>
    %400 = arith.mulf %384, %392 : vector<8x128xf32>
    %401 = arith.addf %399, %400 : vector<8x128xf32>
    %402 = math.tanh %401 : vector<8x128xf32>
    %403 = arith.mulf %398, %402 : vector<8x128xf32>
    %c32_127 = arith.constant 32 : index
    %c0_128 = arith.constant 0 : index
    %404 = vector.load %arg10[%c32_127, %c0_128] : memref<64x512xf32, #tpu.memory_space<vmem>>, vector<8x512xf32>
    %405 = arith.truncf %403 : vector<8x128xf32> to vector<8x128xbf16>
    %c0_129 = arith.constant 0 : index
    %c0_130 = arith.constant 0 : index
    %406 = vector.load %arg13[%c0_129, %c0_130] : memref<128x512xbf16, #tpu.memory_space<vmem>>, vector<128x512xbf16>
    %cst_131 = arith.constant dense<0.000000e+00> : vector<8x512xf32>
    %407 = tpu.matmul %405, %406, %cst_131 {dimension_numbers = #tpu.dot_dimension_numbers<[1], [0], [0], [1], [0, 0, 1, 1], [], []>} : vector<8x128xbf16>, vector<128x512xbf16>, vector<8x512xf32> -> vector<8x512xf32>
    %408 = arith.addf %404, %407 : vector<8x512xf32>
    %409 = vector.extract_strided_slice %408 {offsets = [0, 0], sizes = [8, 128], strides = [1, 1]} : vector<8x512xf32> to vector<8x128xf32>
    %410 = arith.negf %409 : vector<8x128xf32>
    %411 = math.exp %410 : vector<8x128xf32>
    %cst_132 = arith.constant 1.000000e+00 : f32
    %412 = vector.broadcast %cst_132 : f32 to vector<8x128xf32>
    %413 = arith.addf %412, %411 : vector<8x128xf32>
    %414 = arith.divf %412, %413 : vector<8x128xf32>
    %415 = vector.extract_strided_slice %408 {offsets = [0, 128], sizes = [8, 128], strides = [1, 1]} : vector<8x512xf32> to vector<8x128xf32>
    %416 = arith.negf %415 : vector<8x128xf32>
    %417 = math.exp %416 : vector<8x128xf32>
    %cst_133 = arith.constant 1.000000e+00 : f32
    %418 = vector.broadcast %cst_133 : f32 to vector<8x128xf32>
    %419 = arith.addf %418, %417 : vector<8x128xf32>
    %420 = arith.divf %418, %419 : vector<8x128xf32>
    %421 = vector.extract_strided_slice %408 {offsets = [0, 256], sizes = [8, 128], strides = [1, 1]} : vector<8x512xf32> to vector<8x128xf32>
    %422 = math.tanh %421 : vector<8x128xf32>
    %423 = vector.extract_strided_slice %408 {offsets = [0, 384], sizes = [8, 128], strides = [1, 1]} : vector<8x512xf32> to vector<8x128xf32>
    %424 = arith.negf %423 : vector<8x128xf32>
    %425 = math.exp %424 : vector<8x128xf32>
    %cst_134 = arith.constant 1.000000e+00 : f32
    %426 = vector.broadcast %cst_134 : f32 to vector<8x128xf32>
    %427 = arith.addf %426, %425 : vector<8x128xf32>
    %428 = arith.divf %426, %427 : vector<8x128xf32>
    %429 = arith.mulf %420, %401 : vector<8x128xf32>
    %430 = arith.mulf %414, %422 : vector<8x128xf32>
    %431 = arith.addf %429, %430 : vector<8x128xf32>
    %432 = math.tanh %431 : vector<8x128xf32>
    %433 = arith.mulf %428, %432 : vector<8x128xf32>
    %c40_135 = arith.constant 40 : index
    %c0_136 = arith.constant 0 : index
    %434 = vector.load %arg10[%c40_135, %c0_136] : memref<64x512xf32, #tpu.memory_space<vmem>>, vector<8x512xf32>
    %435 = arith.truncf %433 : vector<8x128xf32> to vector<8x128xbf16>
    %c0_137 = arith.constant 0 : index
    %c0_138 = arith.constant 0 : index
    %436 = vector.load %arg13[%c0_137, %c0_138] : memref<128x512xbf16, #tpu.memory_space<vmem>>, vector<128x512xbf16>
    %cst_139 = arith.constant dense<0.000000e+00> : vector<8x512xf32>
    %437 = tpu.matmul %435, %436, %cst_139 {dimension_numbers = #tpu.dot_dimension_numbers<[1], [0], [0], [1], [0, 0, 1, 1], [], []>} : vector<8x128xbf16>, vector<128x512xbf16>, vector<8x512xf32> -> vector<8x512xf32>
    %438 = arith.addf %434, %437 : vector<8x512xf32>
    %439 = vector.extract_strided_slice %438 {offsets = [0, 0], sizes = [8, 128], strides = [1, 1]} : vector<8x512xf32> to vector<8x128xf32>
    %440 = arith.negf %439 : vector<8x128xf32>
    %441 = math.exp %440 : vector<8x128xf32>
    %cst_140 = arith.constant 1.000000e+00 : f32
    %442 = vector.broadcast %cst_140 : f32 to vector<8x128xf32>
    %443 = arith.addf %442, %441 : vector<8x128xf32>
    %444 = arith.divf %442, %443 : vector<8x128xf32>
    %445 = vector.extract_strided_slice %438 {offsets = [0, 128], sizes = [8, 128], strides = [1, 1]} : vector<8x512xf32> to vector<8x128xf32>
    %446 = arith.negf %445 : vector<8x128xf32>
    %447 = math.exp %446 : vector<8x128xf32>
    %cst_141 = arith.constant 1.000000e+00 : f32
    %448 = vector.broadcast %cst_141 : f32 to vector<8x128xf32>
    %449 = arith.addf %448, %447 : vector<8x128xf32>
    %450 = arith.divf %448, %449 : vector<8x128xf32>
    %451 = vector.extract_strided_slice %438 {offsets = [0, 256], sizes = [8, 128], strides = [1, 1]} : vector<8x512xf32> to vector<8x128xf32>
    %452 = math.tanh %451 : vector<8x128xf32>
    %453 = vector.extract_strided_slice %438 {offsets = [0, 384], sizes = [8, 128], strides = [1, 1]} : vector<8x512xf32> to vector<8x128xf32>
    %454 = arith.negf %453 : vector<8x128xf32>
    %455 = math.exp %454 : vector<8x128xf32>
    %cst_142 = arith.constant 1.000000e+00 : f32
    %456 = vector.broadcast %cst_142 : f32 to vector<8x128xf32>
    %457 = arith.addf %456, %455 : vector<8x128xf32>
    %458 = arith.divf %456, %457 : vector<8x128xf32>
    %459 = arith.mulf %450, %431 : vector<8x128xf32>
    %460 = arith.mulf %444, %452 : vector<8x128xf32>
    %461 = arith.addf %459, %460 : vector<8x128xf32>
    %462 = math.tanh %461 : vector<8x128xf32>
    %463 = arith.mulf %458, %462 : vector<8x128xf32>
    %c48_143 = arith.constant 48 : index
    %c0_144 = arith.constant 0 : index
    %464 = vector.load %arg10[%c48_143, %c0_144] : memref<64x512xf32, #tpu.memory_space<vmem>>, vector<8x512xf32>
    %465 = arith.truncf %463 : vector<8x128xf32> to vector<8x128xbf16>
    %c0_145 = arith.constant 0 : index
    %c0_146 = arith.constant 0 : index
    %466 = vector.load %arg13[%c0_145, %c0_146] : memref<128x512xbf16, #tpu.memory_space<vmem>>, vector<128x512xbf16>
    %cst_147 = arith.constant dense<0.000000e+00> : vector<8x512xf32>
    %467 = tpu.matmul %465, %466, %cst_147 {dimension_numbers = #tpu.dot_dimension_numbers<[1], [0], [0], [1], [0, 0, 1, 1], [], []>} : vector<8x128xbf16>, vector<128x512xbf16>, vector<8x512xf32> -> vector<8x512xf32>
    %468 = arith.addf %464, %467 : vector<8x512xf32>
    %469 = vector.extract_strided_slice %468 {offsets = [0, 0], sizes = [8, 128], strides = [1, 1]} : vector<8x512xf32> to vector<8x128xf32>
    %470 = arith.negf %469 : vector<8x128xf32>
    %471 = math.exp %470 : vector<8x128xf32>
    %cst_148 = arith.constant 1.000000e+00 : f32
    %472 = vector.broadcast %cst_148 : f32 to vector<8x128xf32>
    %473 = arith.addf %472, %471 : vector<8x128xf32>
    %474 = arith.divf %472, %473 : vector<8x128xf32>
    %475 = vector.extract_strided_slice %468 {offsets = [0, 128], sizes = [8, 128], strides = [1, 1]} : vector<8x512xf32> to vector<8x128xf32>
    %476 = arith.negf %475 : vector<8x128xf32>
    %477 = math.exp %476 : vector<8x128xf32>
    %cst_149 = arith.constant 1.000000e+00 : f32
    %478 = vector.broadcast %cst_149 : f32 to vector<8x128xf32>
    %479 = arith.addf %478, %477 : vector<8x128xf32>
    %480 = arith.divf %478, %479 : vector<8x128xf32>
    %481 = vector.extract_strided_slice %468 {offsets = [0, 256], sizes = [8, 128], strides = [1, 1]} : vector<8x512xf32> to vector<8x128xf32>
    %482 = math.tanh %481 : vector<8x128xf32>
    %483 = vector.extract_strided_slice %468 {offsets = [0, 384], sizes = [8, 128], strides = [1, 1]} : vector<8x512xf32> to vector<8x128xf32>
    %484 = arith.negf %483 : vector<8x128xf32>
    %485 = math.exp %484 : vector<8x128xf32>
    %cst_150 = arith.constant 1.000000e+00 : f32
    %486 = vector.broadcast %cst_150 : f32 to vector<8x128xf32>
    %487 = arith.addf %486, %485 : vector<8x128xf32>
    %488 = arith.divf %486, %487 : vector<8x128xf32>
    %489 = arith.mulf %480, %461 : vector<8x128xf32>
    %490 = arith.mulf %474, %482 : vector<8x128xf32>
    %491 = arith.addf %489, %490 : vector<8x128xf32>
    %492 = math.tanh %491 : vector<8x128xf32>
    %493 = arith.mulf %488, %492 : vector<8x128xf32>
    %c56_151 = arith.constant 56 : index
    %c0_152 = arith.constant 0 : index
    %494 = vector.load %arg10[%c56_151, %c0_152] : memref<64x512xf32, #tpu.memory_space<vmem>>, vector<8x512xf32>
    %495 = arith.truncf %493 : vector<8x128xf32> to vector<8x128xbf16>
    %c0_153 = arith.constant 0 : index
    %c0_154 = arith.constant 0 : index
    %496 = vector.load %arg13[%c0_153, %c0_154] : memref<128x512xbf16, #tpu.memory_space<vmem>>, vector<128x512xbf16>
    %cst_155 = arith.constant dense<0.000000e+00> : vector<8x512xf32>
    %497 = tpu.matmul %495, %496, %cst_155 {dimension_numbers = #tpu.dot_dimension_numbers<[1], [0], [0], [1], [0, 0, 1, 1], [], []>} : vector<8x128xbf16>, vector<128x512xbf16>, vector<8x512xf32> -> vector<8x512xf32>
    %498 = arith.addf %494, %497 : vector<8x512xf32>
    %499 = vector.extract_strided_slice %498 {offsets = [0, 0], sizes = [8, 128], strides = [1, 1]} : vector<8x512xf32> to vector<8x128xf32>
    %500 = arith.negf %499 : vector<8x128xf32>
    %501 = math.exp %500 : vector<8x128xf32>
    %cst_156 = arith.constant 1.000000e+00 : f32
    %502 = vector.broadcast %cst_156 : f32 to vector<8x128xf32>
    %503 = arith.addf %502, %501 : vector<8x128xf32>
    %504 = arith.divf %502, %503 : vector<8x128xf32>
    %505 = vector.extract_strided_slice %498 {offsets = [0, 128], sizes = [8, 128], strides = [1, 1]} : vector<8x512xf32> to vector<8x128xf32>
    %506 = arith.negf %505 : vector<8x128xf32>
    %507 = math.exp %506 : vector<8x128xf32>
    %cst_157 = arith.constant 1.000000e+00 : f32
    %508 = vector.broadcast %cst_157 : f32 to vector<8x128xf32>
    %509 = arith.addf %508, %507 : vector<8x128xf32>
    %510 = arith.divf %508, %509 : vector<8x128xf32>
    %511 = vector.extract_strided_slice %498 {offsets = [0, 256], sizes = [8, 128], strides = [1, 1]} : vector<8x512xf32> to vector<8x128xf32>
    %512 = math.tanh %511 : vector<8x128xf32>
    %513 = vector.extract_strided_slice %498 {offsets = [0, 384], sizes = [8, 128], strides = [1, 1]} : vector<8x512xf32> to vector<8x128xf32>
    %514 = arith.negf %513 : vector<8x128xf32>
    %515 = math.exp %514 : vector<8x128xf32>
    %cst_158 = arith.constant 1.000000e+00 : f32
    %516 = vector.broadcast %cst_158 : f32 to vector<8x128xf32>
    %517 = arith.addf %516, %515 : vector<8x128xf32>
    %518 = arith.divf %516, %517 : vector<8x128xf32>
    %519 = arith.mulf %510, %491 : vector<8x128xf32>
    %520 = arith.mulf %504, %512 : vector<8x128xf32>
    %521 = arith.addf %519, %520 : vector<8x128xf32>
    %522 = math.tanh %521 : vector<8x128xf32>
    %523 = arith.mulf %518, %522 : vector<8x128xf32>
    %c2_i32_159 = arith.constant 2 : i32
    %524 = tpu.memref_slice %arg15[%c2_i32_159] : memref<3x!tpu.dma_semaphore, #tpu.memory_space<semaphore_mem>> -> memref<1x!tpu.dma_semaphore, #tpu.memory_space<semaphore_mem>>
    %525 = tpu.memref_squeeze %524 : memref<1x!tpu.dma_semaphore, #tpu.memory_space<semaphore_mem>> -> memref<!tpu.dma_semaphore, #tpu.memory_space<semaphore_mem>>
    tpu.wait_dma2 semaphore(%525 : memref<!tpu.dma_semaphore, #tpu.memory_space<semaphore_mem>>) src(%arg7 : memref<128x128xbf16, #tpu.memory_space<any>>) dst(%arg14 : memref<128x128xbf16, #tpu.memory_space<vmem>>)
    %526 = arith.truncf %523 : vector<8x128xf32> to vector<8x128xbf16>
    %c0_160 = arith.constant 0 : index
    %c0_161 = arith.constant 0 : index
    %527 = vector.load %arg14[%c0_160, %c0_161] : memref<128x128xbf16, #tpu.memory_space<vmem>>, vector<128x128xbf16>
    %cst_162 = arith.constant dense<0.000000e+00> : vector<8x128xf32>
    %528 = tpu.matmul %526, %527, %cst_162 {dimension_numbers = #tpu.dot_dimension_numbers<[1], [0], [0], [1], [0, 0, 1, 1], [], []>} : vector<8x128xbf16>, vector<128x128xbf16>, vector<8x128xf32> -> vector<8x128xf32>
    %c0_163 = arith.constant 0 : index
    %c0_164 = arith.constant 0 : index
    %529 = vector.load %arg8[%c0_163, %c0_164] : memref<1x128xf32, #tpu.memory_space<vmem>>, vector<1x128xf32>
    %530 = vector.broadcast %529 : vector<1x128xf32> to vector<8x128xf32>
    %531 = arith.addf %528, %530 : vector<8x128xf32>
    %c0_165 = arith.constant 0 : index
    %c0_166 = arith.constant 0 : index
    %532 = vector.load %arg9[%c0_165, %c0_166] : memref<8x128xf32, #tpu.memory_space<vmem>>, vector<8x128xf32>
    tpu.vector_store %arg9[%c0_165, %c0_166], %531 {strides = array<i32>} : memref<8x128xf32, #tpu.memory_space<vmem>>, vector<8x128xf32>,
    return
  }
}

</mosaic_0001>

<llo_original>
// kernel: lstm_model_forward.1
$region0: #{lstm_model_forward.1}
  #allocation0 [shape = 'u32[]', space=smem, size = 0x4, offset = 0x4, fixed_abs, tag = 'smem constant byte address 0x4 - core index']
  #allocation1 [shape = 'u32[144,128]{1,0:T(1,128)}', space=vmem, size = 0x12000, scoped, tag = 'internal scratch']
  #allocation2 [shape = 'f32[64,512]{1,0:T(8,128)}', space=vmem, size = 0x20000, scoped, tag = 'scratch operand']
  #allocation3 [shape = 'bf16[64,128]{1,0:T(16,128)(2,1)}', space=vmem, size = 0x4000, scoped, tag = 'scratch operand']
  #allocation4 [shape = 'bf16[128,512]{1,0:T(16,128)(2,1)}', space=vmem, size = 0x20000, scoped, tag = 'scratch operand']
  #allocation5 [shape = 'bf16[128,512]{1,0:T(16,128)(2,1)}', space=vmem, size = 0x20000, scoped, tag = 'scratch operand']
  #allocation6 [shape = 'bf16[128,128]{1,0:T(16,128)(2,1)}', space=vmem, size = 0x8000, scoped, tag = 'scratch operand']
  #allocation7 [shape = 's32[3]{0}', space=sflag, size = 0xc, scoped, tag = 'scratch operand']
  #allocation10 [shape = 's32[]', space=sflag, size = 0x4, offset = 0, fixed_abs, tag = 'sflag constant byte address 0x0 - dummy sync flag']
  #allocation12 [shape = 's32[]', space=sflag, size = 0x4, offset = 0, fixed_abs, tag = 'sflag constant byte address 0x0 - dummy sync flag']
  #allocation14 [shape = 's32[]', space=sflag, size = 0x4, offset = 0, fixed_abs, tag = 'sflag constant byte address 0x0 - dummy sync flag']
  %s0 = inlined_call_operand.vmem [shape: bf16[64,16], index: 0, kind: input, shape index: {}]
  %s1 = inlined_call_operand.vmem [shape: bf16[16,512], index: 1, kind: input, shape index: {}]
  %s2 = inlined_call_operand.hbm [shape: bf16[128,512], index: 2, kind: input, shape index: {}]
  %s3 = inlined_call_operand.vmem [shape: f32[1,512], index: 3, kind: input, shape index: {}]
  %s4 = inlined_call_operand.hbm [shape: bf16[128,512], index: 4, kind: input, shape index: {}]
  %s5 = inlined_call_operand.hbm [shape: bf16[128,512], index: 5, kind: input, shape index: {}]
  %s6 = inlined_call_operand.vmem [shape: f32[1,512], index: 6, kind: input, shape index: {}]
  %s7 = inlined_call_operand.vmem [shape: bf16[128,128], index: 7, kind: input, shape index: {}]
  %s8 = inlined_call_operand.vmem [shape: f32[1,128], index: 8, kind: input, shape index: {}]
  %s9 = inlined_call_operand.vmem [shape: f32[8,128], index: 9, kind: output, shape index: {}]
  %s10 = sld [smem:[#allocation0]]
  $region72: #{lstm_model_forward.1} parent=0
    _
  %s12 = ssub.s32 1, %s10
  %s13 = scalar_select 0, %s12, %s10
  $region1: #{lstm_model_forward.1} parent=0
    #allocation8 [shape = 'u8[131072]{0}', space=vmem, size = 0x20000, scoped, tag = 'input window, operand 2, single buffered']
    #allocation9 [shape = 's32[1]{0}', space=sflag, size = 0x4, scoped, tag = 'scoped memory for lstm_model_forward.1']
    #allocation11 [shape = 'u32[9]{0}', space=smem, size = 0x24, scoped, tag = 'DMA stride descriptor']
    #allocation13 [shape = 'u32[9]{0}', space=smem, size = 0x24, scoped, tag = 'DMA stride descriptor']
    %14 = vsyncpa [#allocation9], 0
    // Predicated region
    $region2: #{lstm_model_forward.1} parent=1 // pred_check
      _
    $region3: #{lstm_model_forward.1} parent=1 // pred_check_branch
      %16 = sbr.rel (0) target = $region5
    $region4: #{lstm_model_forward.1} parent=1 // pred_region
      _
    $region5: #{lstm_model_forward.1} parent=1 // pred_fallthru
      _
    // Predicated region
    $region6: #{lstm_model_forward.1} parent=1 // pred_check
      _
    $region7: #{lstm_model_forward.1} parent=1 // pred_check_branch
      %18 = sbr.rel (0) target = $region9
    $region8: #{lstm_model_forward.1} parent=1 // pred_region
      _
    $region9: #{lstm_model_forward.1} parent=1 // pred_fallthru
      _
    // Predicated region
    $region10: #{lstm_model_forward.1} parent=1 // pred_check
      _
    $region11: #{lstm_model_forward.1} parent=1 // pred_check_branch
      %20 = sbr.rel (0) target = $region13
    $region12: #{lstm_model_forward.1} parent=1 // pred_region
      %s22 = ssub.s32 4096, 4096
      %23 = vsyncadd [#allocation9], %s22
      %s24 = sshll.u32 [#allocation8], 4
      %s25 = int_to_ptr.vmem [resolvable:$true] %s24
      %30 = dma.hbm_to_vmem [thread:$0]  %s2, 4096, %s25, [#allocation9], 256, 256, 16
    $region13: #{lstm_model_forward.1} parent=1 // pred_fallthru
      _
    // Predicated region
    $region14: #{lstm_model_forward.1} parent=1 // pred_check
      _
    $region15: #{lstm_model_forward.1} parent=1 // pred_check_branch
      %32 = sbr.rel (0) target = $region17
    $region16: #{lstm_model_forward.1} parent=1 // pred_region
      _
    $region17: #{lstm_model_forward.1} parent=1 // pred_fallthru
      _
    // Predicated region
    $region18: #{lstm_model_forward.1} parent=1 // pred_check
      _
    $region19: #{lstm_model_forward.1} parent=1 // pred_check_branch
      %34 = sbr.rel (0) target = $region21
    $region20: #{lstm_model_forward.1} parent=1 // pred_region
      _
    $region21: #{lstm_model_forward.1} parent=1 // pred_fallthru
      _
    // Predicated region
    $region22: #{lstm_model_forward.1} parent=1 // pred_check
      _
    $region23: #{lstm_model_forward.1} parent=1 // pred_check_branch
      %36 = sbr.rel (0) target = $region25
    $region24: #{lstm_model_forward.1} parent=1 // pred_region
      _
    $region25: #{lstm_model_forward.1} parent=1 // pred_fallthru
      _
    // Predicated region
    $region26: #{lstm_model_forward.1} parent=1 // pred_check
      _
    $region27: #{lstm_model_forward.1} parent=1 // pred_check_branch
      %38 = sbr.rel (0) target = $region29
    $region28: #{lstm_model_forward.1} parent=1 // pred_region
      %39 = dma.done [#allocation9], 4096
    $region29: #{lstm_model_forward.1} parent=1 // pred_fallthru
      _
    %s42 = sshll.u32 1, 14
    %s43 = sxor.u32 4294967295, %s42
    %s45 = sld [smem:[#allocation0]]
    %s46 = sadd.s32 2, %s45
    %s48 = sshll.u32 7, 26
    %s49 = sxor.u32 4294967295, %s48
    %s50 = sand.u32 0, %s49
    %s51 = sshll.u32 %s46, 26
    %s52 = sor.u32 %s50, %s51
    %s53 = sshll.u32 [#allocation4], 4
    %s54 = int_to_ptr.vmem [resolvable:$true] %s53
    %57 = sst [smem:[#allocation11]] 512
    %s58 = scalar_lea.smem [#allocation11], 1
    %59 = sst [smem:[%s58]] 512
    %s60 = scalar_lea.smem [#allocation11], 2
    %61 = sst [smem:[%s60]] 4
    %s62 = scalar_lea.smem [#allocation11], 3
    %63 = sst [smem:[%s62]] 64
    %s64 = scalar_lea.smem [#allocation11], 4
    %65 = sst [smem:[%s64]] 128
    %s66 = scalar_lea.smem [#allocation11], 5
    %67 = sst [smem:[%s66]] 2
    %s68 = scalar_lea.smem [#allocation11], 6
    %69 = sst [smem:[%s68]] 256
    %s70 = scalar_lea.smem [#allocation11], 7
    %71 = sst [smem:[%s70]] 64
    %s72 = scalar_lea.smem [#allocation11], 8
    %73 = sst [smem:[%s72]] 4
    %75 = dma.general %s4, 4096, %s54, [#allocation7], [#allocation10], [#allocation11], %s52, 0
    %s76 = scalar_lea.sflag [#allocation7], 1
    %s78 = sshll.u32 1, 14
    %s79 = sxor.u32 4294967295, %s78
    %s81 = sadd.s32 2, %s45
    %s83 = sshll.u32 7, 26
    %s84 = sxor.u32 4294967295, %s83
    %s85 = sand.u32 0, %s84
    %s86 = sshll.u32 %s81, 26
    %s87 = sor.u32 %s85, %s86
    %s88 = sshll.u32 [#allocation5], 4
    %s89 = int_to_ptr.vmem [resolvable:$true] %s88
    %92 = sst [smem:[#allocation13]] 512
    %s93 = scalar_lea.smem [#allocation13], 1
    %94 = sst [smem:[%s93]] 512
    %s95 = scalar_lea.smem [#allocation13], 2
    %96 = sst [smem:[%s95]] 4
    %s97 = scalar_lea.smem [#allocation13], 3
    %98 = sst [smem:[%s97]] 64
    %s99 = scalar_lea.smem [#allocation13], 4
    %100 = sst [smem:[%s99]] 128
    %s101 = scalar_lea.smem [#allocation13], 5
    %102 = sst [smem:[%s101]] 2
    %s103 = scalar_lea.smem [#allocation13], 6
    %104 = sst [smem:[%s103]] 256
    %s105 = scalar_lea.smem [#allocation13], 7
    %106 = sst [smem:[%s105]] 64
    %s107 = scalar_lea.smem [#allocation13], 8
    %108 = sst [smem:[%s107]] 4
    %110 = dma.general %s5, 4096, %s89, %s76, [#allocation12], [#allocation13], %s87, 0
    %s111 = scalar_lea.sflag [#allocation7], 2
    %p113 = scmp.lt.u32.totalorder 64, 8
    %p114 = pneg %p113
    // Predicated region
    $region30: #{lstm_model_forward.1} parent=1 // pred_check
      _
    $region31: #{lstm_model_forward.1} parent=1 // pred_check_branch
      %116 = sbr.rel (%p113) target = $region33
    $region32: #{lstm_model_forward.1} parent=1 // pred_region
      %s131 = sand.u32 64, 7
      %p132 = scmp.eq.s32.totalorder %s131, 0
      // Predicated region
      $region45: #{lstm_model_forward.1} parent=32 // pred_check
        %p133 = pneg %p132
      $region46: #{lstm_model_forward.1} parent=32 // pred_check_branch
        %135 = sbr.rel (%p133) target = $region48
      $region47: #{lstm_model_forward.1} parent=32 // pred_region
        loop: start=0, step=1, limit=1
        $region49: #{lstm_model_forward.1} parent=47 // loop_pre_header
          _
        $region50: #{lstm_model_forward.1} parent=47 // loop_header
          %s137 = sphi 0, %s141
          %p138 = scmp.ge.s32.totalorder %s137, 1
          %s142 = sphi %s7, %s7
          %s143 = sphi [#allocation6], [#allocation6]
        $region51: #{lstm_model_forward.1} parent=47 // loop_header_branch
          %140 = sbr.rel (%p138) target = $region55
        $region52: #{lstm_model_forward.1} parent=47 // loop_body
          %v144 = vld [vmem:[%s142] sm:$0xff]
          %145 = vst [vmem:[%s143] sm:$0xff] %v144
          %v146 = vld [vmem:[%s142 + $0x8] sm:$0xff]
          %147 = vst [vmem:[%s143 + $0x8] sm:$0xff] %v146
          %v148 = vld [vmem:[%s142 + $0x10] sm:$0xff]
          %149 = vst [vmem:[%s143 + $0x10] sm:$0xff] %v148
          %v150 = vld [vmem:[%s142 + $0x18] sm:$0xff]
          %151 = vst [vmem:[%s143 + $0x18] sm:$0xff] %v150
          %v152 = vld [vmem:[%s142 + $0x20] sm:$0xff]
          %153 = vst [vmem:[%s143 + $0x20] sm:$0xff] %v152
          %v154 = vld [vmem:[%s142 + $0x28] sm:$0xff]
          %155 = vst [vmem:[%s143 + $0x28] sm:$0xff] %v154
          %v156 = vld [vmem:[%s142 + $0x30] sm:$0xff]
          %157 = vst [vmem:[%s143 + $0x30] sm:$0xff] %v156
          %v158 = vld [vmem:[%s142 + $0x38] sm:$0xff]
          %159 = vst [vmem:[%s143 + $0x38] sm:$0xff] %v158
        $region53: #{lstm_model_forward.1} parent=47 // loop_footer
          %s141 = sadd.s32 1, %s137
        $region54: #{lstm_model_forward.1} parent=47 // loop_footer_branch
          %136 = sbr.rel target = $region50
        $region55: #{lstm_model_forward.1} parent=47 // loop_exit
          _
      $region48: #{lstm_model_forward.1} parent=32 // pred_fallthru
        _
      %p160 = pneg %p132
      // Predicated region
      $region56: #{lstm_model_forward.1} parent=32 // pred_check
        _
      $region57: #{lstm_model_forward.1} parent=32 // pred_check_branch
        %162 = sbr.rel (%p132) target = $region59
      $region58: #{lstm_model_forward.1} parent=32 // pred_region
        %s163 = sand.u32 64, 7
      $region59: #{lstm_model_forward.1} parent=32 // pred_fallthru
        _
    $region33: #{lstm_model_forward.1} parent=1 // pred_fallthru
      _
    // Predicated region
    $region34: #{lstm_model_forward.1} parent=1 // pred_check
      %p117 = pneg %p113
    $region35: #{lstm_model_forward.1} parent=1 // pred_check_branch
      %119 = sbr.rel (%p117) target = $region37
    $region36: #{lstm_model_forward.1} parent=1 // pred_region
      %s120 = sshllo.u32 0, 64
      loop: start=0, step=1, limit=1
      $region38: #{lstm_model_forward.1} parent=36 // loop_pre_header
        _
      $region39: #{lstm_model_forward.1} parent=36 // loop_header
        %s122 = sphi 0, %s126
        %p123 = scmp.ge.s32.totalorder %s122, 1
        %s127 = sphi %s7, %s7
        %s128 = sphi [#allocation6], [#allocation6]
      $region40: #{lstm_model_forward.1} parent=36 // loop_header_branch
        %125 = sbr.rel (%p123) target = $region44
      $region41: #{lstm_model_forward.1} parent=36 // loop_body
        %v129 = vld [vmem:[%s127] sm:%s120]
        %130 = vst [vmem:[%s128] sm:%s120] %v129
      $region42: #{lstm_model_forward.1} parent=36 // loop_footer
        %s126 = sadd.s32 1, %s122
      $region43: #{lstm_model_forward.1} parent=36 // loop_footer_branch
        %121 = sbr.rel target = $region39
      $region44: #{lstm_model_forward.1} parent=36 // loop_exit
        _
    $region37: #{lstm_model_forward.1} parent=1 // pred_fallthru
      _
    // Predicated region
    $region60: #{lstm_model_forward.1} parent=1 // pred_check
      _
    $region61: #{lstm_model_forward.1} parent=1 // pred_check_branch
      %166 = sbr.rel (0) target = $region63
    $region62: #{lstm_model_forward.1} parent=1 // pred_region
      %167 = vsyncadd %s111, 1024
    $region63: #{lstm_model_forward.1} parent=1 // pred_fallthru
      _
    %v168 = vld [vmem:[%s0] sm:$0xf]
    %v169 = vld [vmem:[%s0 + $0x4] sm:$0xf]
    %v170 = vld [vmem:[%s0 + $0x8] sm:$0xf]
    %v171 = vld [vmem:[%s0 + $0xc] sm:$0xf]
    %v172 = vld [vmem:[%s0 + $0x10] sm:$0xf]
    %v173 = vld [vmem:[%s0 + $0x14] sm:$0xf]
    %v174 = vld [vmem:[%s0 + $0x18] sm:$0xf]
    %v175 = vld [vmem:[%s0 + $0x1c] sm:$0xf]
    %v176 = vld [vmem:[%s1] sm:$0xff]
    %v177 = vld [vmem:[%s1 + $0x8] sm:$0xff]
    %v178 = vld [vmem:[%s1 + $0x10] sm:$0xff]
    %v179 = vld [vmem:[%s1 + $0x18] sm:$0xff]
    %v180 = vld [vmem:[%s3] sm:$0xf]
    %v182 = vlaneseq
    %v183 = vshrl.u32 %v182, 7
    %v184 = vsub.s32 0, %v183
    %v185 = vrot.slane %v180, %v184
    %v186 = vlaneseq
    %v187 = vshrl.u32 %v186, 7
    %v188 = vsub.s32 1, %v187
    %v189 = vrot.slane %v180, %v188
    %v190 = vlaneseq
    %v191 = vshrl.u32 %v190, 7
    %v192 = vsub.s32 2, %v191
    %v193 = vrot.slane %v180, %v192
    %v194 = vlaneseq
    %v195 = vshrl.u32 %v194, 7
    %v196 = vsub.s32 3, %v195
    %v197 = vrot.slane %v180, %v196
    %v210 = vunpack.c.l.b16 %v168
    %v211 = vunpack.c.l.b16 %v169
    %v212 = vunpack.c.l.b16 %v170
    %v213 = vunpack.c.l.b16 %v171
    %v214 = vunpack.c.l.b16 %v172
    %v215 = vunpack.c.l.b16 %v173
    %v216 = vunpack.c.l.b16 %v174
    %v217 = vunpack.c.l.b16 %v175
    %v218 = vpack.c.b16 %v211, %v210
    %v219 = vpack.c.b16 %v213, %v212
    %v220 = vpack.c.b16 %v215, %v214
    %v221 = vpack.c.b16 %v217, %v216
    %v226 = vunpack.c.l.b16 %v176
    %v227 = vunpack.c.h.b16 %v176
    %v228 = vunpack.c.l.b16 %v177
    %v229 = vunpack.c.h.b16 %v177
    %v230 = vunpack.c.l.b16 %v178
    %v231 = vunpack.c.h.b16 %v178
    %v232 = vunpack.c.l.b16 %v179
    %v233 = vunpack.c.h.b16 %v179
    %v234 = vpack.c.b16 %v230, %v226
    %v235 = vpack.c.b16 %v231, %v227
    %v236 = vpack.c.b16 %v232, %v228
    %v237 = vpack.c.b16 %v233, %v229
    %vm242 = vcmask 130048
    %v244 = vsel %vm242, %v218, 0
    %v247 = vsel %vm242, %v219, 0
    %v250 = vsel %vm242, %v220, 0
    %v253 = vsel %vm242, %v221, 0
    %255 = vmatprep.subr.bf16.mxu0 %v235
    %256 = vmatpush1.bf16.msra.mxu0 %v234
    %257 = vmatprep.subr.bf16.mxu0 0
    %258 = vmatpush1.bf16.msra.mxu0 0
    %259 = vmatprep.subr.bf16.mxu0 0
    %260 = vmatpush1.bf16.msra.mxu0 0
    %261 = vmatprep.subr.bf16.mxu0 0
    %262 = vmatpush1.bf16.msra.mxu0 0
    %263 = vmatprep.subr.bf16.mxu0 0
    %264 = vmatpush1.bf16.msra.mxu0 0
    %265 = vmatprep.subr.bf16.mxu0 0
    %266 = vmatpush1.bf16.msra.mxu0 0
    %267 = vmatprep.subr.bf16.mxu0 0
    %268 = vmatpush1.bf16.msra.mxu0 0
    %269 = vmatprep.subr.bf16.mxu0 0
    %270 = vmatpush1.bf16.msra.mxu0 0
    %271 = vmatprep.subr.bf16.mxu0 0
    %272 = vmatpush1.bf16.msra.mxu0 0
    %273 = vmatprep.subr.bf16.mxu0 0
    %274 = vmatpush1.bf16.msra.mxu0 0
    %275 = vmatprep.subr.bf16.mxu0 0
    %276 = vmatpush1.bf16.msra.mxu0 0
    %277 = vmatprep.subr.bf16.mxu0 0
    %278 = vmatpush1.bf16.msra.mxu0 0
    %279 = vmatprep.subr.bf16.mxu0 0
    %280 = vmatpush1.bf16.msra.mxu0 0
    %281 = vmatprep.subr.bf16.mxu0 0
    %282 = vmatpush1.bf16.msra.mxu0 0
    %283 = vmatprep.subr.bf16.mxu0 0
    %284 = vmatpush1.bf16.msra.mxu0 0
    %285 = vmatprep.subr.bf16.mxu0 0
    %286 = vmatpush1.bf16.msra.mxu0 0
    %287 = vmatprep.mubr.bf16.mxu0 0
    %288 = vmatmul.mubr.bf16.gmra.mrb[0].mxu0 %v244
    %v289 = vpop.f32.mrb[0].mxu0
    %v290 = vadd.f32 %v185, %v289
    %v291 = vpop.f32.mrb[0].mxu0
    %v292 = vadd.f32 %v189, %v291
    %v293 = vpop.f32.mrb[0].mxu0
    %v294 = vadd.f32 %v185, %v293
    %v295 = vpop.f32.mrb[0].mxu0
    %v296 = vadd.f32 %v189, %v295
    %297 = vmatprep.mubr.bf16.mxu0 0
    %298 = vmatmul.mubr.bf16.gmra.mrb[0].mxu0 %v247
    %v299 = vpop.f32.mrb[0].mxu0
    %v300 = vadd.f32 %v185, %v299
    %v301 = vpop.f32.mrb[0].mxu0
    %v302 = vadd.f32 %v189, %v301
    %v303 = vpop.f32.mrb[0].mxu0
    %v304 = vadd.f32 %v185, %v303
    %v305 = vpop.f32.mrb[0].mxu0
    %v306 = vadd.f32 %v189, %v305
    %307 = vmatprep.mubr.bf16.mxu0 0
    %308 = vmatmul.mubr.bf16.gmra.mrb[0].mxu0 %v250
    %v309 = vpop.f32.mrb[0].mxu0
    %v310 = vadd.f32 %v185, %v309
    %v311 = vpop.f32.mrb[0].mxu0
    %v312 = vadd.f32 %v189, %v311
    %v313 = vpop.f32.mrb[0].mxu0
    %v314 = vadd.f32 %v185, %v313
    %v315 = vpop.f32.mrb[0].mxu0
    %v316 = vadd.f32 %v189, %v315
    %317 = vmatprep.mubr.bf16.mxu0 0
    %318 = vmatmul.mubr.bf16.gmra.mrb[0].mxu0 %v253
    %v319 = vpop.f32.mrb[0].mxu0
    %v320 = vadd.f32 %v185, %v319
    %v321 = vpop.f32.mrb[0].mxu0
    %v322 = vadd.f32 %v189, %v321
    %v323 = vpop.f32.mrb[0].mxu0
    %v324 = vadd.f32 %v185, %v323
    %v325 = vpop.f32.mrb[0].mxu0
    %v326 = vadd.f32 %v189, %v325
    %327 = vdwg.mxu0
    %328 = vmatprep.subr.bf16.mxu0 %v237
    %329 = vmatpush1.bf16.msra.mxu0 %v236
    %330 = vmatprep.subr.bf16.mxu0 0
    %331 = vmatpush1.bf16.msra.mxu0 0
    %332 = vmatprep.subr.bf16.mxu0 0
    %333 = vmatpush1.bf16.msra.mxu0 0
    %334 = vmatprep.subr.bf16.mxu0 0
    %335 = vmatpush1.bf16.msra.mxu0 0
    %336 = vmatprep.subr.bf16.mxu0 0
    %337 = vmatpush1.bf16.msra.mxu0 0
    %338 = vmatprep.subr.bf16.mxu0 0
    %339 = vmatpush1.bf16.msra.mxu0 0
    %340 = vmatprep.subr.bf16.mxu0 0
    %341 = vmatpush1.bf16.msra.mxu0 0
    %342 = vmatprep.subr.bf16.mxu0 0
    %343 = vmatpush1.bf16.msra.mxu0 0
    %344 = vmatprep.subr.bf16.mxu0 0
    %345 = vmatpush1.bf16.msra.mxu0 0
    %346 = vmatprep.subr.bf16.mxu0 0
    %347 = vmatpush1.bf16.msra.mxu0 0
    %348 = vmatprep.subr.bf16.mxu0 0
    %349 = vmatpush1.bf16.msra.mxu0 0
    %350 = vmatprep.subr.bf16.mxu0 0
    %351 = vmatpush1.bf16.msra.mxu0 0
    %352 = vmatprep.subr.bf16.mxu0 0
    %353 = vmatpush1.bf16.msra.mxu0 0
    %354 = vmatprep.subr.bf16.mxu0 0
    %355 = vmatpush1.bf16.msra.mxu0 0
    %356 = vmatprep.subr.bf16.mxu0 0
    %357 = vmatpush1.bf16.msra.mxu0 0
    %358 = vmatprep.subr.bf16.mxu0 0
    %359 = vmatpush1.bf16.msra.mxu0 0
    %360 = vmatprep.mubr.bf16.mxu0 0
    %361 = vmatmul.mubr.bf16.gmra.mrb[0].mxu0 %v244
    %v362 = vpop.f32.mrb[0].mxu0
    %v363 = vadd.f32 %v193, %v362
    %v364 = vpop.f32.mrb[0].mxu0
    %v365 = vadd.f32 %v197, %v364
    %v366 = vpop.f32.mrb[0].mxu0
    %v367 = vadd.f32 %v193, %v366
    %v368 = vpop.f32.mrb[0].mxu0
    %v369 = vadd.f32 %v197, %v368
    %370 = vmatprep.mubr.bf16.mxu0 0
    %371 = vmatmul.mubr.bf16.gmra.mrb[0].mxu0 %v247
    %v372 = vpop.f32.mrb[0].mxu0
    %v373 = vadd.f32 %v193, %v372
    %v374 = vpop.f32.mrb[0].mxu0
    %v375 = vadd.f32 %v197, %v374
    %v376 = vpop.f32.mrb[0].mxu0
    %v377 = vadd.f32 %v193, %v376
    %v378 = vpop.f32.mrb[0].mxu0
    %v379 = vadd.f32 %v197, %v378
    %380 = vmatprep.mubr.bf16.mxu0 0
    %381 = vmatmul.mubr.bf16.gmra.mrb[0].mxu0 %v250
    %v382 = vpop.f32.mrb[0].mxu0
    %v383 = vadd.f32 %v193, %v382
    %v384 = vpop.f32.mrb[0].mxu0
    %v385 = vadd.f32 %v197, %v384
    %v386 = vpop.f32.mrb[0].mxu0
    %v387 = vadd.f32 %v193, %v386
    %v388 = vpop.f32.mrb[0].mxu0
    %v389 = vadd.f32 %v197, %v388
    %390 = vmatprep.mubr.bf16.mxu0 0
    %391 = vmatmul.mubr.bf16.gmra.mrb[0].mxu0 %v253
    %v392 = vpop.f32.mrb[0].mxu0
    %v393 = vadd.f32 %v193, %v392
    %v394 = vpop.f32.mrb[0].mxu0
    %v395 = vadd.f32 %v197, %v394
    %v396 = vpop.f32.mrb[0].mxu0
    %v397 = vadd.f32 %v193, %v396
    %v398 = vpop.f32.mrb[0].mxu0
    %v399 = vadd.f32 %v197, %v398
    %400 = vdwg.mxu0
    %401 = vst [vmem:[#allocation2] sm:$0xff] %v290
    %402 = vst [vmem:[#allocation2 + $0x8] sm:$0xff] %v292
    %403 = vst [vmem:[#allocation2 + $0x10] sm:$0xff] %v363
    %404 = vst [vmem:[#allocation2 + $0x18] sm:$0xff] %v365
    %405 = vst [vmem:[#allocation2 + $0x20] sm:$0xff] %v294
    %406 = vst [vmem:[#allocation2 + $0x28] sm:$0xff] %v296
    %407 = vst [vmem:[#allocation2 + $0x30] sm:$0xff] %v367
    %408 = vst [vmem:[#allocation2 + $0x38] sm:$0xff] %v369
    %409 = vst [vmem:[#allocation2 + $0x40] sm:$0xff] %v300
    %410 = vst [vmem:[#allocation2 + $0x48] sm:$0xff] %v302
    %411 = vst [vmem:[#allocation2 + $0x50] sm:$0xff] %v373
    %412 = vst [vmem:[#allocation2 + $0x58] sm:$0xff] %v375
    %413 = vst [vmem:[#allocation2 + $0x60] sm:$0xff] %v304
    %414 = vst [vmem:[#allocation2 + $0x68] sm:$0xff] %v306
    %415 = vst [vmem:[#allocation2 + $0x70] sm:$0xff] %v377
    %416 = vst [vmem:[#allocation2 + $0x78] sm:$0xff] %v379
    %417 = vst [vmem:[#allocation2 + $0x80] sm:$0xff] %v310
    %418 = vst [vmem:[#allocation2 + $0x88] sm:$0xff] %v312
    %419 = vst [vmem:[#allocation2 + $0x90] sm:$0xff] %v383
    %420 = vst [vmem:[#allocation2 + $0x98] sm:$0xff] %v385
    %421 = vst [vmem:[#allocation2 + $0xa0] sm:$0xff] %v314
    %422 = vst [vmem:[#allocation2 + $0xa8] sm:$0xff] %v316
    %423 = vst [vmem:[#allocation2 + $0xb0] sm:$0xff] %v387
    %424 = vst [vmem:[#allocation2 + $0xb8] sm:$0xff] %v389
    %425 = vst [vmem:[#allocation2 + $0xc0] sm:$0xff] %v320
    %426 = vst [vmem:[#allocation2 + $0xc8] sm:$0xff] %v322
    %427 = vst [vmem:[#allocation2 + $0xd0] sm:$0xff] %v393
    %428 = vst [vmem:[#allocation2 + $0xd8] sm:$0xff] %v395
    %429 = vst [vmem:[#allocation2 + $0xe0] sm:$0xff] %v324
    %430 = vst [vmem:[#allocation2 + $0xe8] sm:$0xff] %v326
    %431 = vst [vmem:[#allocation2 + $0xf0] sm:$0xff] %v397
    %432 = vst [vmem:[#allocation2 + $0xf8] sm:$0xff] %v399
    %v433 = vld [vmem:[#allocation2] sm:$0xff]
    %v434 = vld [vmem:[#allocation2 + $0x8] sm:$0xff]
    %v435 = vld [vmem:[#allocation2 + $0x10] sm:$0xff]
    %v436 = vld [vmem:[#allocation2 + $0x18] sm:$0xff]
    %v437 = vld [vmem:[#allocation8] sm:$0xff]
    %v438 = vld [vmem:[#allocation8 + $0x8] sm:$0xff]
    %v439 = vld [vmem:[#allocation8 + $0x10] sm:$0xff]
    %v440 = vld [vmem:[#allocation8 + $0x18] sm:$0xff]
    %v441 = vld [vmem:[#allocation8 + $0x20] sm:$0xff]
    %v442 = vld [vmem:[#allocation8 + $0x28] sm:$0xff]
    %v443 = vld [vmem:[#allocation8 + $0x30] sm:$0xff]
    %v444 = vld [vmem:[#allocation8 + $0x38] sm:$0xff]
    %v445 = vld [vmem:[#allocation8 + $0x40] sm:$0xff]
    %v446 = vld [vmem:[#allocation8 + $0x48] sm:$0xff]
    %v447 = vld [vmem:[#allocation8 + $0x50] sm:$0xff]
    %v448 = vld [vmem:[#allocation8 + $0x58] sm:$0xff]
    %v449 = vld [vmem:[#allocation8 + $0x60] sm:$0xff]
    %v450 = vld [vmem:[#allocation8 + $0x68] sm:$0xff]
    %v451 = vld [vmem:[#allocation8 + $0x70] sm:$0xff]
    %v452 = vld [vmem:[#allocation8 + $0x78] sm:$0xff]
    %v453 = vld [vmem:[#allocation8 + $0x80] sm:$0xff]
    %v454 = vld [vmem:[#allocation8 + $0x88] sm:$0xff]
    %v455 = vld [vmem:[#allocation8 + $0x90] sm:$0xff]
    %v456 = vld [vmem:[#allocation8 + $0x98] sm:$0xff]
    %v457 = vld [vmem:[#allocation8 + $0xa0] sm:$0xff]
    %v458 = vld [vmem:[#allocation8 + $0xa8] sm:$0xff]
    %v459 = vld [vmem:[#allocation8 + $0xb0] sm:$0xff]
    %v460 = vld [vmem:[#allocation8 + $0xb8] sm:$0xff]
    %v461 = vld [vmem:[#allocation8 + $0xc0] sm:$0xff]
    %v462 = vld [vmem:[#allocation8 + $0xc8] sm:$0xff]
    %v463 = vld [vmem:[#allocation8 + $0xd0] sm:$0xff]
    %v464 = vld [vmem:[#allocation8 + $0xd8] sm:$0xff]
    %v465 = vld [vmem:[#allocation8 + $0xe0] sm:$0xff]
    %v466 = vld [vmem:[#allocation8 + $0xe8] sm:$0xff]
    %v467 = vld [vmem:[#allocation8 + $0xf0] sm:$0xff]
    %v468 = vld [vmem:[#allocation8 + $0xf8] sm:$0xff]
    %v501 = vunpack.c.l.b16 %v437
    %v502 = vunpack.c.h.b16 %v437
    %v503 = vunpack.c.l.b16 %v438
    %v504 = vunpack.c.h.b16 %v438
    %v505 = vunpack.c.l.b16 %v439
    %v506 = vunpack.c.h.b16 %v439
    %v507 = vunpack.c.l.b16 %v440
    %v508 = vunpack.c.h.b16 %v440
    %v509 = vunpack.c.l.b16 %v441
    %v510 = vunpack.c.h.b16 %v441
    %v511 = vunpack.c.l.b16 %v442
    %v512 = vunpack.c.h.b16 %v442
    %v513 = vunpack.c.l.b16 %v443
    %v514 = vunpack.c.h.b16 %v443
    %v515 = vunpack.c.l.b16 %v444
    %v516 = vunpack.c.h.b16 %v444
    %v517 = vunpack.c.l.b16 %v445
    %v518 = vunpack.c.h.b16 %v445
    %v519 = vunpack.c.l.b16 %v446
    %v520 = vunpack.c.h.b16 %v446
    %v521 = vunpack.c.l.b16 %v447
    %v522 = vunpack.c.h.b16 %v447
    %v523 = vunpack.c.l.b16 %v448
    %v524 = vunpack.c.h.b16 %v448
    %v525 = vunpack.c.l.b16 %v449
    %v526 = vunpack.c.h.b16 %v449
    %v527 = vunpack.c.l.b16 %v450
    %v528 = vunpack.c.h.b16 %v450
    %v529 = vunpack.c.l.b16 %v451
    %v530 = vunpack.c.h.b16 %v451
    %v531 = vunpack.c.l.b16 %v452
    %v532 = vunpack.c.h.b16 %v452
    %v533 = vunpack.c.l.b16 %v453
    %v534 = vunpack.c.h.b16 %v453
    %v535 = vunpack.c.l.b16 %v454
    %v536 = vunpack.c.h.b16 %v454
    %v537 = vunpack.c.l.b16 %v455
    %v538 = vunpack.c.h.b16 %v455
    %v539 = vunpack.c.l.b16 %v456
    %v540 = vunpack.c.h.b16 %v456
    %v541 = vunpack.c.l.b16 %v457
    %v542 = vunpack.c.h.b16 %v457
    %v543 = vunpack.c.l.b16 %v458
    %v544 = vunpack.c.h.b16 %v458
    %v545 = vunpack.c.l.b16 %v459
    %v546 = vunpack.c.h.b16 %v459
    %v547 = vunpack.c.l.b16 %v460
    %v548 = vunpack.c.h.b16 %v460
    %v549 = vunpack.c.l.b16 %v461
    %v550 = vunpack.c.h.b16 %v461
    %v551 = vunpack.c.l.b16 %v462
    %v552 = vunpack.c.h.b16 %v462
    %v553 = vunpack.c.l.b16 %v463
    %v554 = vunpack.c.h.b16 %v463
    %v555 = vunpack.c.l.b16 %v464
    %v556 = vunpack.c.h.b16 %v464
    %v557 = vunpack.c.l.b16 %v465
    %v558 = vunpack.c.h.b16 %v465
    %v559 = vunpack.c.l.b16 %v466
    %v560 = vunpack.c.h.b16 %v466
    %v561 = vunpack.c.l.b16 %v467
    %v562 = vunpack.c.h.b16 %v467
    %v563 = vunpack.c.l.b16 %v468
    %v564 = vunpack.c.h.b16 %v468
    %v565 = vpack.c.b16 %v505, %v501
    %v566 = vpack.c.b16 %v506, %v502
    %v567 = vpack.c.b16 %v507, %v503
    %v568 = vpack.c.b16 %v508, %v504
    %v569 = vpack.c.b16 %v513, %v509
    %v570 = vpack.c.b16 %v514, %v510
    %v571 = vpack.c.b16 %v515, %v511
    %v572 = vpack.c.b16 %v516, %v512
    %v573 = vpack.c.b16 %v521, %v517
    %v574 = vpack.c.b16 %v522, %v518
    %v575 = vpack.c.b16 %v523, %v519
    %v576 = vpack.c.b16 %v524, %v520
    %v577 = vpack.c.b16 %v529, %v525
    %v578 = vpack.c.b16 %v530, %v526
    %v579 = vpack.c.b16 %v531, %v527
    %v580 = vpack.c.b16 %v532, %v528
    %v581 = vpack.c.b16 %v537, %v533
    %v582 = vpack.c.b16 %v538, %v534
    %v583 = vpack.c.b16 %v539, %v535
    %v584 = vpack.c.b16 %v540, %v536
    %v585 = vpack.c.b16 %v545, %v541
    %v586 = vpack.c.b16 %v546, %v542
    %v587 = vpack.c.b16 %v547, %v543
    %v588 = vpack.c.b16 %v548, %v544
    %v589 = vpack.c.b16 %v553, %v549
    %v590 = vpack.c.b16 %v554, %v550
    %v591 = vpack.c.b16 %v555, %v551
    %v592 = vpack.c.b16 %v556, %v552
    %v593 = vpack.c.b16 %v561, %v557
    %v594 = vpack.c.b16 %v562, %v558
    %v595 = vpack.c.b16 %v563, %v559
    %v596 = vpack.c.b16 %v564, %v560
    %629 = vmatprep.subr.bf16.mxu0 %v566
    %630 = vmatpush1.bf16.msra.mxu0 %v565
    %631 = vmatprep.subr.bf16.mxu0 %v570
    %632 = vmatpush1.bf16.msra.mxu0 %v569
    %633 = vmatprep.subr.bf16.mxu0 %v574
    %634 = vmatpush1.bf16.msra.mxu0 %v573
    %635 = vmatprep.subr.bf16.mxu0 %v578
    %636 = vmatpush1.bf16.msra.mxu0 %v577
    %637 = vmatprep.subr.bf16.mxu0 %v582
    %638 = vmatpush1.bf16.msra.mxu0 %v581
    %639 = vmatprep.subr.bf16.mxu0 %v586
    %640 = vmatpush1.bf16.msra.mxu0 %v585
    %641 = vmatprep.subr.bf16.mxu0 %v590
    %642 = vmatpush1.bf16.msra.mxu0 %v589
    %643 = vmatprep.subr.bf16.mxu0 %v594
    %644 = vmatpush1.bf16.msra.mxu0 %v593
    %645 = vmatprep.subr.bf16.mxu0 0
    %646 = vmatpush1.bf16.msra.mxu0 0
    %647 = vmatprep.subr.bf16.mxu0 0
    %648 = vmatpush1.bf16.msra.mxu0 0
    %649 = vmatprep.subr.bf16.mxu0 0
    %650 = vmatpush1.bf16.msra.mxu0 0
    %651 = vmatprep.subr.bf16.mxu0 0
    %652 = vmatpush1.bf16.msra.mxu0 0
    %653 = vmatprep.subr.bf16.mxu0 0
    %654 = vmatpush1.bf16.msra.mxu0 0
    %655 = vmatprep.subr.bf16.mxu0 0
    %656 = vmatpush1.bf16.msra.mxu0 0
    %657 = vmatprep.subr.bf16.mxu0 0
    %658 = vmatpush1.bf16.msra.mxu0 0
    %659 = vmatprep.subr.bf16.mxu0 0
    %660 = vmatpush1.bf16.msra.mxu0 0
    %661 = vmatprep.mubr.bf16.mxu0 0
    %662 = vmatmul.mubr.bf16.gmra.mrb[0].mxu0 0
    %v663 = vpop.f32.mrb[0].mxu0
    %v664 = vadd.f32 0.0, %v663
    %v665 = vpop.f32.mrb[0].mxu0
    %v666 = vadd.f32 0.0, %v665
    %v667 = vpop.f32.mrb[0].mxu0
    %v668 = vpop.f32.mrb[0].mxu0
    %669 = vdwg.mxu0
    %670 = vmatprep.subr.bf16.mxu0 %v568
    %671 = vmatpush1.bf16.msra.mxu0 %v567
    %672 = vmatprep.subr.bf16.mxu0 %v572
    %673 = vmatpush1.bf16.msra.mxu0 %v571
    %674 = vmatprep.subr.bf16.mxu0 %v576
    %675 = vmatpush1.bf16.msra.mxu0 %v575
    %676 = vmatprep.subr.bf16.mxu0 %v580
    %677 = vmatpush1.bf16.msra.mxu0 %v579
    %678 = vmatprep.subr.bf16.mxu0 %v584
    %679 = vmatpush1.bf16.msra.mxu0 %v583
    %680 = vmatprep.subr.bf16.mxu0 %v588
    %681 = vmatpush1.bf16.msra.mxu0 %v587
    %682 = vmatprep.subr.bf16.mxu0 %v592
    %683 = vmatpush1.bf16.msra.mxu0 %v591
    %684 = vmatprep.subr.bf16.mxu0 %v596
    %685 = vmatpush1.bf16.msra.mxu0 %v595
    %686 = vmatprep.subr.bf16.mxu0 0
    %687 = vmatpush1.bf16.msra.mxu0 0
    %688 = vmatprep.subr.bf16.mxu0 0
    %689 = vmatpush1.bf16.msra.mxu0 0
    %690 = vmatprep.subr.bf16.mxu0 0
    %691 = vmatpush1.bf16.msra.mxu0 0
    %692 = vmatprep.subr.bf16.mxu0 0
    %693 = vmatpush1.bf16.msra.mxu0 0
    %694 = vmatprep.subr.bf16.mxu0 0
    %695 = vmatpush1.bf16.msra.mxu0 0
    %696 = vmatprep.subr.bf16.mxu0 0
    %697 = vmatpush1.bf16.msra.mxu0 0
    %698 = vmatprep.subr.bf16.mxu0 0
    %699 = vmatpush1.bf16.msra.mxu0 0
    %700 = vmatprep.subr.bf16.mxu0 0
    %701 = vmatpush1.bf16.msra.mxu0 0
    %702 = vmatprep.mubr.bf16.mxu0 0
    %703 = vmatmul.mubr.bf16.gmra.mrb[0].mxu0 0
    %v704 = vpop.f32.mrb[0].mxu0
    %v705 = vadd.f32 0.0, %v704
    %v706 = vpop.f32.mrb[0].mxu0
    %v707 = vadd.f32 0.0, %v706
    %v708 = vpop.f32.mrb[0].mxu0
    %v709 = vpop.f32.mrb[0].mxu0
    %710 = vdwg.mxu0
    %v711 = vadd.f32 %v433, %v664
    %v712 = vadd.f32 %v434, %v666
    %v713 = vadd.f32 %v435, %v705
    %v714 = vadd.f32 %v436, %v707
    %v715 = vxor.u32 %v711, 2147483648
    %v716 = vmul.f32 %v715, 1.442695
    %v717 = vpow.pop %v716
    %v718 = vadd.f32 %v717, 1.0
    %v719 = vrcp.pop %v718
    %v720 = vmul.f32 1.0, %v719
    %v721 = vxor.u32 %v712, 2147483648
    %v722 = vmul.f32 %v721, 1.442695
    %v723 = vpow.pop %v722
    %v724 = vadd.f32 %v723, 1.0
    %v725 = vrcp.pop %v724
    %v726 = vmul.f32 1.0, %v725
    %v727 = vtanh.pop %v713
    %v728 = vxor.u32 %v714, 2147483648
    %v729 = vmul.f32 %v728, 1.442695
    %v730 = vpow.pop %v729
    %v731 = vadd.f32 %v730, 1.0
    %v732 = vrcp.pop %v731
    %v733 = vmul.f32 1.0, %v732
    %v734 = vmul.f32 %v726, 0.0
    %v735 = vmul.f32 %v720, %v727
    %v736 = vadd.f32 %v734, %v735
    %v737 = vtanh.pop %v736
    %v738 = vmul.f32 %v733, %v737
    %v739 = vpack.c.bf16 %v738, %v738
    %740 = vst [vmem:[#allocation3] sm:$0xf] %v739
    %v741 = vld [vmem:[#allocation2 + $0x20] sm:$0xff]
    %v742 = vld [vmem:[#allocation2 + $0x28] sm:$0xff]
    %v743 = vld [vmem:[#allocation2 + $0x30] sm:$0xff]
    %v744 = vld [vmem:[#allocation2 + $0x38] sm:$0xff]
    %v745 = vld [vmem:[#allocation8] sm:$0xff]
    %v746 = vld [vmem:[#allocation8 + $0x8] sm:$0xff]
    %v747 = vld [vmem:[#allocation8 + $0x10] sm:$0xff]
    %v748 = vld [vmem:[#allocation8 + $0x18] sm:$0xff]
    %v749 = vld [vmem:[#allocation8 + $0x20] sm:$0xff]
    %v750 = vld [vmem:[#allocation8 + $0x28] sm:$0xff]
    %v751 = vld [vmem:[#allocation8 + $0x30] sm:$0xff]
    %v752 = vld [vmem:[#allocation8 + $0x38] sm:$0xff]
    %v753 = vld [vmem:[#allocation8 + $0x40] sm:$0xff]
    %v754 = vld [vmem:[#allocation8 + $0x48] sm:$0xff]
    %v755 = vld [vmem:[#allocation8 + $0x50] sm:$0xff]
    %v756 = vld [vmem:[#allocation8 + $0x58] sm:$0xff]
    %v757 = vld [vmem:[#allocation8 + $0x60] sm:$0xff]
    %v758 = vld [vmem:[#allocation8 + $0x68] sm:$0xff]
    %v759 = vld [vmem:[#allocation8 + $0x70] sm:$0xff]
    %v760 = vld [vmem:[#allocation8 + $0x78] sm:$0xff]
    %v761 = vld [vmem:[#allocation8 + $0x80] sm:$0xff]
    %v762 = vld [vmem:[#allocation8 + $0x88] sm:$0xff]
    %v763 = vld [vmem:[#allocation8 + $0x90] sm:$0xff]
    %v764 = vld [vmem:[#allocation8 + $0x98] sm:$0xff]
    %v765 = vld [vmem:[#allocation8 + $0xa0] sm:$0xff]
    %v766 = vld [vmem:[#allocation8 + $0xa8] sm:$0xff]
    %v767 = vld [vmem:[#allocation8 + $0xb0] sm:$0xff]
    %v768 = vld [vmem:[#allocation8 + $0xb8] sm:$0xff]
    %v769 = vld [vmem:[#allocation8 + $0xc0] sm:$0xff]
    %v770 = vld [vmem:[#allocation8 + $0xc8] sm:$0xff]
    %v771 = vld [vmem:[#allocation8 + $0xd0] sm:$0xff]
    %v772 = vld [vmem:[#allocation8 + $0xd8] sm:$0xff]
    %v773 = vld [vmem:[#allocation8 + $0xe0] sm:$0xff]
    %v774 = vld [vmem:[#allocation8 + $0xe8] sm:$0xff]
    %v775 = vld [vmem:[#allocation8 + $0xf0] sm:$0xff]
    %v776 = vld [vmem:[#allocation8 + $0xf8] sm:$0xff]
    %v809 = vunpack.c.l.b16 %v745
    %v810 = vunpack.c.h.b16 %v745
    %v811 = vunpack.c.l.b16 %v746
    %v812 = vunpack.c.h.b16 %v746
    %v813 = vunpack.c.l.b16 %v747
    %v814 = vunpack.c.h.b16 %v747
    %v815 = vunpack.c.l.b16 %v748
    %v816 = vunpack.c.h.b16 %v748
    %v817 = vunpack.c.l.b16 %v749
    %v818 = vunpack.c.h.b16 %v749
    %v819 = vunpack.c.l.b16 %v750
    %v820 = vunpack.c.h.b16 %v750
    %v821 = vunpack.c.l.b16 %v751
    %v822 = vunpack.c.h.b16 %v751
    %v823 = vunpack.c.l.b16 %v752
    %v824 = vunpack.c.h.b16 %v752
    %v825 = vunpack.c.l.b16 %v753
    %v826 = vunpack.c.h.b16 %v753
    %v827 = vunpack.c.l.b16 %v754
    %v828 = vunpack.c.h.b16 %v754
    %v829 = vunpack.c.l.b16 %v755
    %v830 = vunpack.c.h.b16 %v755
    %v831 = vunpack.c.l.b16 %v756
    %v832 = vunpack.c.h.b16 %v756
    %v833 = vunpack.c.l.b16 %v757
    %v834 = vunpack.c.h.b16 %v757
    %v835 = vunpack.c.l.b16 %v758
    %v836 = vunpack.c.h.b16 %v758
    %v837 = vunpack.c.l.b16 %v759
    %v838 = vunpack.c.h.b16 %v759
    %v839 = vunpack.c.l.b16 %v760
    %v840 = vunpack.c.h.b16 %v760
    %v841 = vunpack.c.l.b16 %v761
    %v842 = vunpack.c.h.b16 %v761
    %v843 = vunpack.c.l.b16 %v762
    %v844 = vunpack.c.h.b16 %v762
    %v845 = vunpack.c.l.b16 %v763
    %v846 = vunpack.c.h.b16 %v763
    %v847 = vunpack.c.l.b16 %v764
    %v848 = vunpack.c.h.b16 %v764
    %v849 = vunpack.c.l.b16 %v765
    %v850 = vunpack.c.h.b16 %v765
    %v851 = vunpack.c.l.b16 %v766
    %v852 = vunpack.c.h.b16 %v766
    %v853 = vunpack.c.l.b16 %v767
    %v854 = vunpack.c.h.b16 %v767
    %v855 = vunpack.c.l.b16 %v768
    %v856 = vunpack.c.h.b16 %v768
    %v857 = vunpack.c.l.b16 %v769
    %v858 = vunpack.c.h.b16 %v769
    %v859 = vunpack.c.l.b16 %v770
    %v860 = vunpack.c.h.b16 %v770
    %v861 = vunpack.c.l.b16 %v771
    %v862 = vunpack.c.h.b16 %v771
    %v863 = vunpack.c.l.b16 %v772
    %v864 = vunpack.c.h.b16 %v772
    %v865 = vunpack.c.l.b16 %v773
    %v866 = vunpack.c.h.b16 %v773
    %v867 = vunpack.c.l.b16 %v774
    %v868 = vunpack.c.h.b16 %v774
    %v869 = vunpack.c.l.b16 %v775
    %v870 = vunpack.c.h.b16 %v775
    %v871 = vunpack.c.l.b16 %v776
    %v872 = vunpack.c.h.b16 %v776
    %v873 = vpack.c.b16 %v813, %v809
    %v874 = vpack.c.b16 %v814, %v810
    %v875 = vpack.c.b16 %v815, %v811
    %v876 = vpack.c.b16 %v816, %v812
    %v877 = vpack.c.b16 %v821, %v817
    %v878 = vpack.c.b16 %v822, %v818
    %v879 = vpack.c.b16 %v823, %v819
    %v880 = vpack.c.b16 %v824, %v820
    %v881 = vpack.c.b16 %v829, %v825
    %v882 = vpack.c.b16 %v830, %v826
    %v883 = vpack.c.b16 %v831, %v827
    %v884 = vpack.c.b16 %v832, %v828
    %v885 = vpack.c.b16 %v837, %v833
    %v886 = vpack.c.b16 %v838, %v834
    %v887 = vpack.c.b16 %v839, %v835
    %v888 = vpack.c.b16 %v840, %v836
    %v889 = vpack.c.b16 %v845, %v841
    %v890 = vpack.c.b16 %v846, %v842
    %v891 = vpack.c.b16 %v847, %v843
    %v892 = vpack.c.b16 %v848, %v844
    %v893 = vpack.c.b16 %v853, %v849
    %v894 = vpack.c.b16 %v854, %v850
    %v895 = vpack.c.b16 %v855, %v851
    %v896 = vpack.c.b16 %v856, %v852
    %v897 = vpack.c.b16 %v861, %v857
    %v898 = vpack.c.b16 %v862, %v858
    %v899 = vpack.c.b16 %v863, %v859
    %v900 = vpack.c.b16 %v864, %v860
    %v901 = vpack.c.b16 %v869, %v865
    %v902 = vpack.c.b16 %v870, %v866
    %v903 = vpack.c.b16 %v871, %v867
    %v904 = vpack.c.b16 %v872, %v868
    %937 = vmatprep.subr.bf16.mxu0 %v874
    %938 = vmatpush1.bf16.msra.mxu0 %v873
    %939 = vmatprep.subr.bf16.mxu0 %v878
    %940 = vmatpush1.bf16.msra.mxu0 %v877
    %941 = vmatprep.subr.bf16.mxu0 %v882
    %942 = vmatpush1.bf16.msra.mxu0 %v881
    %943 = vmatprep.subr.bf16.mxu0 %v886
    %944 = vmatpush1.bf16.msra.mxu0 %v885
    %945 = vmatprep.subr.bf16.mxu0 %v890
    %946 = vmatpush1.bf16.msra.mxu0 %v889
    %947 = vmatprep.subr.bf16.mxu0 %v894
    %948 = vmatpush1.bf16.msra.mxu0 %v893
    %949 = vmatprep.subr.bf16.mxu0 %v898
    %950 = vmatpush1.bf16.msra.mxu0 %v897
    %951 = vmatprep.subr.bf16.mxu0 %v902
    %952 = vmatpush1.bf16.msra.mxu0 %v901
    %953 = vmatprep.subr.bf16.mxu0 0
    %954 = vmatpush1.bf16.msra.mxu0 0
    %955 = vmatprep.subr.bf16.mxu0 0
    %956 = vmatpush1.bf16.msra.mxu0 0
    %957 = vmatprep.subr.bf16.mxu0 0
    %958 = vmatpush1.bf16.msra.mxu0 0
    %959 = vmatprep.subr.bf16.mxu0 0
    %960 = vmatpush1.bf16.msra.mxu0 0
    %961 = vmatprep.subr.bf16.mxu0 0
    %962 = vmatpush1.bf16.msra.mxu0 0
    %963 = vmatprep.subr.bf16.mxu0 0
    %964 = vmatpush1.bf16.msra.mxu0 0
    %965 = vmatprep.subr.bf16.mxu0 0
    %966 = vmatpush1.bf16.msra.mxu0 0
    %967 = vmatprep.subr.bf16.mxu0 0
    %968 = vmatpush1.bf16.msra.mxu0 0
    %969 = vmatprep.mubr.bf16.mxu0 0
    %970 = vmatmul.mubr.bf16.gmra.mrb[0].mxu0 %v739
    %v971 = vpop.f32.mrb[0].mxu0
    %v972 = vadd.f32 0.0, %v971
    %v973 = vpop.f32.mrb[0].mxu0
    %v974 = vadd.f32 0.0, %v973
    %v975 = vpop.f32.mrb[0].mxu0
    %v976 = vpop.f32.mrb[0].mxu0
    %977 = vdwg.mxu0
    %978 = vmatprep.subr.bf16.mxu0 %v876
    %979 = vmatpush1.bf16.msra.mxu0 %v875
    %980 = vmatprep.subr.bf16.mxu0 %v880
    %981 = vmatpush1.bf16.msra.mxu0 %v879
    %982 = vmatprep.subr.bf16.mxu0 %v884
    %983 = vmatpush1.bf16.msra.mxu0 %v883
    %984 = vmatprep.subr.bf16.mxu0 %v888
    %985 = vmatpush1.bf16.msra.mxu0 %v887
    %986 = vmatprep.subr.bf16.mxu0 %v892
    %987 = vmatpush1.bf16.msra.mxu0 %v891
    %988 = vmatprep.subr.bf16.mxu0 %v896
    %989 = vmatpush1.bf16.msra.mxu0 %v895
    %990 = vmatprep.subr.bf16.mxu0 %v900
    %991 = vmatpush1.bf16.msra.mxu0 %v899
    %992 = vmatprep.subr.bf16.mxu0 %v904
    %993 = vmatpush1.bf16.msra.mxu0 %v903
    %994 = vmatprep.subr.bf16.mxu0 0
    %995 = vmatpush1.bf16.msra.mxu0 0
    %996 = vmatprep.subr.bf16.mxu0 0
    %997 = vmatpush1.bf16.msra.mxu0 0
    %998 = vmatprep.subr.bf16.mxu0 0
    %999 = vmatpush1.bf16.msra.mxu0 0
    %1000 = vmatprep.subr.bf16.mxu0 0
    %1001 = vmatpush1.bf16.msra.mxu0 0
    %1002 = vmatprep.subr.bf16.mxu0 0
    %1003 = vmatpush1.bf16.msra.mxu0 0
    %1004 = vmatprep.subr.bf16.mxu0 0
    %1005 = vmatpush1.bf16.msra.mxu0 0
    %1006 = vmatprep.subr.bf16.mxu0 0
    %1007 = vmatpush1.bf16.msra.mxu0 0
    %1008 = vmatprep.subr.bf16.mxu0 0
    %1009 = vmatpush1.bf16.msra.mxu0 0
    %1010 = vmatprep.mubr.bf16.mxu0 0
    %1011 = vmatmul.mubr.bf16.gmra.mrb[0].mxu0 %v739
    %v1012 = vpop.f32.mrb[0].mxu0
    %v1013 = vadd.f32 0.0, %v1012
    %v1014 = vpop.f32.mrb[0].mxu0
    %v1015 = vadd.f32 0.0, %v1014
    %v1016 = vpop.f32.mrb[0].mxu0
    %v1017 = vpop.f32.mrb[0].mxu0
    %1018 = vdwg.mxu0
    %v1019 = vadd.f32 %v741, %v972
    %v1020 = vadd.f32 %v742, %v974
    %v1021 = vadd.f32 %v743, %v1013
    %v1022 = vadd.f32 %v744, %v1015
    %v1023 = vxor.u32 %v1019, 2147483648
    %v1024 = vmul.f32 %v1023, 1.442695
    %v1025 = vpow.pop %v1024
    %v1026 = vadd.f32 %v1025, 1.0
    %v1027 = vrcp.pop %v1026
    %v1028 = vmul.f32 1.0, %v1027
    %v1029 = vxor.u32 %v1020, 2147483648
    %v1030 = vmul.f32 %v1029, 1.442695
    %v1031 = vpow.pop %v1030
    %v1032 = vadd.f32 %v1031, 1.0
    %v1033 = vrcp.pop %v1032
    %v1034 = vmul.f32 1.0, %v1033
    %v1035 = vtanh.pop %v1021
    %v1036 = vxor.u32 %v1022, 2147483648
    %v1037 = vmul.f32 %v1036, 1.442695
    %v1038 = vpow.pop %v1037
    %v1039 = vadd.f32 %v1038, 1.0
    %v1040 = vrcp.pop %v1039
    %v1041 = vmul.f32 1.0, %v1040
    %v1042 = vmul.f32 %v1034, %v736
    %v1043 = vmul.f32 %v1028, %v1035
    %v1044 = vadd.f32 %v1042, %v1043
    %v1045 = vtanh.pop %v1044
    %v1046 = vmul.f32 %v1041, %v1045
    %v1047 = vpack.c.bf16 %v1046, %v1046
    %v1049 = vrot.slane %v1047, 4
    %1051 = vst [vmem:[#allocation3] sm:$0xf0] %v1049
    %v1052 = vld [vmem:[#allocation2 + $0x40] sm:$0xff]
    %v1053 = vld [vmem:[#allocation2 + $0x48] sm:$0xff]
    %v1054 = vld [vmem:[#allocation2 + $0x50] sm:$0xff]
    %v1055 = vld [vmem:[#allocation2 + $0x58] sm:$0xff]
    %v1056 = vld [vmem:[#allocation8] sm:$0xff]
    %v1057 = vld [vmem:[#allocation8 + $0x8] sm:$0xff]
    %v1058 = vld [vmem:[#allocation8 + $0x10] sm:$0xff]
    %v1059 = vld [vmem:[#allocation8 + $0x18] sm:$0xff]
    %v1060 = vld [vmem:[#allocation8 + $0x20] sm:$0xff]
    %v1061 = vld [vmem:[#allocation8 + $0x28] sm:$0xff]
    %v1062 = vld [vmem:[#allocation8 + $0x30] sm:$0xff]
    %v1063 = vld [vmem:[#allocation8 + $0x38] sm:$0xff]
    %v1064 = vld [vmem:[#allocation8 + $0x40] sm:$0xff]
    %v1065 = vld [vmem:[#allocation8 + $0x48] sm:$0xff]
    %v1066 = vld [vmem:[#allocation8 + $0x50] sm:$0xff]
    %v1067 = vld [vmem:[#allocation8 + $0x58] sm:$0xff]
    %v1068 = vld [vmem:[#allocation8 + $0x60] sm:$0xff]
    %v1069 = vld [vmem:[#allocation8 + $0x68] sm:$0xff]
    %v1070 = vld [vmem:[#allocation8 + $0x70] sm:$0xff]
    %v1071 = vld [vmem:[#allocation8 + $0x78] sm:$0xff]
    %v1072 = vld [vmem:[#allocation8 + $0x80] sm:$0xff]
    %v1073 = vld [vmem:[#allocation8 + $0x88] sm:$0xff]
    %v1074 = vld [vmem:[#allocation8 + $0x90] sm:$0xff]
    %v1075 = vld [vmem:[#allocation8 + $0x98] sm:$0xff]
    %v1076 = vld [vmem:[#allocation8 + $0xa0] sm:$0xff]
    %v1077 = vld [vmem:[#allocation8 + $0xa8] sm:$0xff]
    %v1078 = vld [vmem:[#allocation8 + $0xb0] sm:$0xff]
    %v1079 = vld [vmem:[#allocation8 + $0xb8] sm:$0xff]
    %v1080 = vld [vmem:[#allocation8 + $0xc0] sm:$0xff]
    %v1081 = vld [vmem:[#allocation8 + $0xc8] sm:$0xff]
    %v1082 = vld [vmem:[#allocation8 + $0xd0] sm:$0xff]
    %v1083 = vld [vmem:[#allocation8 + $0xd8] sm:$0xff]
    %v1084 = vld [vmem:[#allocation8 + $0xe0] sm:$0xff]
    %v1085 = vld [vmem:[#allocation8 + $0xe8] sm:$0xff]
    %v1086 = vld [vmem:[#allocation8 + $0xf0] sm:$0xff]
    %v1087 = vld [vmem:[#allocation8 + $0xf8] sm:$0xff]
    %v1120 = vunpack.c.l.b16 %v1056
    %v1121 = vunpack.c.h.b16 %v1056
    %v1122 = vunpack.c.l.b16 %v1057
    %v1123 = vunpack.c.h.b16 %v1057
    %v1124 = vunpack.c.l.b16 %v1058
    %v1125 = vunpack.c.h.b16 %v1058
    %v1126 = vunpack.c.l.b16 %v1059
    %v1127 = vunpack.c.h.b16 %v1059
    %v1128 = vunpack.c.l.b16 %v1060
    %v1129 = vunpack.c.h.b16 %v1060
    %v1130 = vunpack.c.l.b16 %v1061
    %v1131 = vunpack.c.h.b16 %v1061
    %v1132 = vunpack.c.l.b16 %v1062
    %v1133 = vunpack.c.h.b16 %v1062
    %v1134 = vunpack.c.l.b16 %v1063
    %v1135 = vunpack.c.h.b16 %v1063
    %v1136 = vunpack.c.l.b16 %v1064
    %v1137 = vunpack.c.h.b16 %v1064
    %v1138 = vunpack.c.l.b16 %v1065
    %v1139 = vunpack.c.h.b16 %v1065
    %v1140 = vunpack.c.l.b16 %v1066
    %v1141 = vunpack.c.h.b16 %v1066
    %v1142 = vunpack.c.l.b16 %v1067
    %v1143 = vunpack.c.h.b16 %v1067
    %v1144 = vunpack.c.l.b16 %v1068
    %v1145 = vunpack.c.h.b16 %v1068
    %v1146 = vunpack.c.l.b16 %v1069
    %v1147 = vunpack.c.h.b16 %v1069
    %v1148 = vunpack.c.l.b16 %v1070
    %v1149 = vunpack.c.h.b16 %v1070
    %v1150 = vunpack.c.l.b16 %v1071
    %v1151 = vunpack.c.h.b16 %v1071
    %v1152 = vunpack.c.l.b16 %v1072
    %v1153 = vunpack.c.h.b16 %v1072
    %v1154 = vunpack.c.l.b16 %v1073
    %v1155 = vunpack.c.h.b16 %v1073
    %v1156 = vunpack.c.l.b16 %v1074
    %v1157 = vunpack.c.h.b16 %v1074
    %v1158 = vunpack.c.l.b16 %v1075
    %v1159 = vunpack.c.h.b16 %v1075
    %v1160 = vunpack.c.l.b16 %v1076
    %v1161 = vunpack.c.h.b16 %v1076
    %v1162 = vunpack.c.l.b16 %v1077
    %v1163 = vunpack.c.h.b16 %v1077
    %v1164 = vunpack.c.l.b16 %v1078
    %v1165 = vunpack.c.h.b16 %v1078
    %v1166 = vunpack.c.l.b16 %v1079
    %v1167 = vunpack.c.h.b16 %v1079
    %v1168 = vunpack.c.l.b16 %v1080
    %v1169 = vunpack.c.h.b16 %v1080
    %v1170 = vunpack.c.l.b16 %v1081
    %v1171 = vunpack.c.h.b16 %v1081
    %v1172 = vunpack.c.l.b16 %v1082
    %v1173 = vunpack.c.h.b16 %v1082
    %v1174 = vunpack.c.l.b16 %v1083
    %v1175 = vunpack.c.h.b16 %v1083
    %v1176 = vunpack.c.l.b16 %v1084
    %v1177 = vunpack.c.h.b16 %v1084
    %v1178 = vunpack.c.l.b16 %v1085
    %v1179 = vunpack.c.h.b16 %v1085
    %v1180 = vunpack.c.l.b16 %v1086
    %v1181 = vunpack.c.h.b16 %v1086
    %v1182 = vunpack.c.l.b16 %v1087
    %v1183 = vunpack.c.h.b16 %v1087
    %v1184 = vpack.c.b16 %v1124, %v1120
    %v1185 = vpack.c.b16 %v1125, %v1121
    %v1186 = vpack.c.b16 %v1126, %v1122
    %v1187 = vpack.c.b16 %v1127, %v1123
    %v1188 = vpack.c.b16 %v1132, %v1128
    %v1189 = vpack.c.b16 %v1133, %v1129
    %v1190 = vpack.c.b16 %v1134, %v1130
    %v1191 = vpack.c.b16 %v1135, %v1131
    %v1192 = vpack.c.b16 %v1140, %v1136
    %v1193 = vpack.c.b16 %v1141, %v1137
    %v1194 = vpack.c.b16 %v1142, %v1138
    %v1195 = vpack.c.b16 %v1143, %v1139
    %v1196 = vpack.c.b16 %v1148, %v1144
    %v1197 = vpack.c.b16 %v1149, %v1145
    %v1198 = vpack.c.b16 %v1150, %v1146
    %v1199 = vpack.c.b16 %v1151, %v1147
    %v1200 = vpack.c.b16 %v1156, %v1152
    %v1201 = vpack.c.b16 %v1157, %v1153
    %v1202 = vpack.c.b16 %v1158, %v1154
    %v1203 = vpack.c.b16 %v1159, %v1155
    %v1204 = vpack.c.b16 %v1164, %v1160
    %v1205 = vpack.c.b16 %v1165, %v1161
    %v1206 = vpack.c.b16 %v1166, %v1162
    %v1207 = vpack.c.b16 %v1167, %v1163
    %v1208 = vpack.c.b16 %v1172, %v1168
    %v1209 = vpack.c.b16 %v1173, %v1169
    %v1210 = vpack.c.b16 %v1174, %v1170
    %v1211 = vpack.c.b16 %v1175, %v1171
    %v1212 = vpack.c.b16 %v1180, %v1176
    %v1213 = vpack.c.b16 %v1181, %v1177
    %v1214 = vpack.c.b16 %v1182, %v1178
    %v1215 = vpack.c.b16 %v1183, %v1179
    %1248 = vmatprep.subr.bf16.mxu0 %v1185
    %1249 = vmatpush1.bf16.msra.mxu0 %v1184
    %1250 = vmatprep.subr.bf16.mxu0 %v1189
    %1251 = vmatpush1.bf16.msra.mxu0 %v1188
    %1252 = vmatprep.subr.bf16.mxu0 %v1193
    %1253 = vmatpush1.bf16.msra.mxu0 %v1192
    %1254 = vmatprep.subr.bf16.mxu0 %v1197
    %1255 = vmatpush1.bf16.msra.mxu0 %v1196
    %1256 = vmatprep.subr.bf16.mxu0 %v1201
    %1257 = vmatpush1.bf16.msra.mxu0 %v1200
    %1258 = vmatprep.subr.bf16.mxu0 %v1205
    %1259 = vmatpush1.bf16.msra.mxu0 %v1204
    %1260 = vmatprep.subr.bf16.mxu0 %v1209
    %1261 = vmatpush1.bf16.msra.mxu0 %v1208
    %1262 = vmatprep.subr.bf16.mxu0 %v1213
    %1263 = vmatpush1.bf16.msra.mxu0 %v1212
    %1264 = vmatprep.subr.bf16.mxu0 0
    %1265 = vmatpush1.bf16.msra.mxu0 0
    %1266 = vmatprep.subr.bf16.mxu0 0
    %1267 = vmatpush1.bf16.msra.mxu0 0
    %1268 = vmatprep.subr.bf16.mxu0 0
    %1269 = vmatpush1.bf16.msra.mxu0 0
    %1270 = vmatprep.subr.bf16.mxu0 0
    %1271 = vmatpush1.bf16.msra.mxu0 0
    %1272 = vmatprep.subr.bf16.mxu0 0
    %1273 = vmatpush1.bf16.msra.mxu0 0
    %1274 = vmatprep.subr.bf16.mxu0 0
    %1275 = vmatpush1.bf16.msra.mxu0 0
    %1276 = vmatprep.subr.bf16.mxu0 0
    %1277 = vmatpush1.bf16.msra.mxu0 0
    %1278 = vmatprep.subr.bf16.mxu0 0
    %1279 = vmatpush1.bf16.msra.mxu0 0
    %1280 = vmatprep.mubr.bf16.mxu0 0
    %1281 = vmatmul.mubr.bf16.gmra.mrb[0].mxu0 %v1047
    %v1282 = vpop.f32.mrb[0].mxu0
    %v1283 = vadd.f32 0.0, %v1282
    %v1284 = vpop.f32.mrb[0].mxu0
    %v1285 = vadd.f32 0.0, %v1284
    %v1286 = vpop.f32.mrb[0].mxu0
    %v1287 = vpop.f32.mrb[0].mxu0
    %1288 = vdwg.mxu0
    %1289 = vmatprep.subr.bf16.mxu0 %v1187
    %1290 = vmatpush1.bf16.msra.mxu0 %v1186
    %1291 = vmatprep.subr.bf16.mxu0 %v1191
    %1292 = vmatpush1.bf16.msra.mxu0 %v1190
    %1293 = vmatprep.subr.bf16.mxu0 %v1195
    %1294 = vmatpush1.bf16.msra.mxu0 %v1194
    %1295 = vmatprep.subr.bf16.mxu0 %v1199
    %1296 = vmatpush1.bf16.msra.mxu0 %v1198
    %1297 = vmatprep.subr.bf16.mxu0 %v1203
    %1298 = vmatpush1.bf16.msra.mxu0 %v1202
    %1299 = vmatprep.subr.bf16.mxu0 %v1207
    %1300 = vmatpush1.bf16.msra.mxu0 %v1206
    %1301 = vmatprep.subr.bf16.mxu0 %v1211
    %1302 = vmatpush1.bf16.msra.mxu0 %v1210
    %1303 = vmatprep.subr.bf16.mxu0 %v1215
    %1304 = vmatpush1.bf16.msra.mxu0 %v1214
    %1305 = vmatprep.subr.bf16.mxu0 0
    %1306 = vmatpush1.bf16.msra.mxu0 0
    %1307 = vmatprep.subr.bf16.mxu0 0
    %1308 = vmatpush1.bf16.msra.mxu0 0
    %1309 = vmatprep.subr.bf16.mxu0 0
    %1310 = vmatpush1.bf16.msra.mxu0 0
    %1311 = vmatprep.subr.bf16.mxu0 0
    %1312 = vmatpush1.bf16.msra.mxu0 0
    %1313 = vmatprep.subr.bf16.mxu0 0
    %1314 = vmatpush1.bf16.msra.mxu0 0
    %1315 = vmatprep.subr.bf16.mxu0 0
    %1316 = vmatpush1.bf16.msra.mxu0 0
    %1317 = vmatprep.subr.bf16.mxu0 0
    %1318 = vmatpush1.bf16.msra.mxu0 0
    %1319 = vmatprep.subr.bf16.mxu0 0
    %1320 = vmatpush1.bf16.msra.mxu0 0
    %1321 = vmatprep.mubr.bf16.mxu0 0
    %1322 = vmatmul.mubr.bf16.gmra.mrb[0].mxu0 %v1047
    %v1323 = vpop.f32.mrb[0].mxu0
    %v1324 = vadd.f32 0.0, %v1323
    %v1325 = vpop.f32.mrb[0].mxu0
    %v1326 = vadd.f32 0.0, %v1325
    %v1327 = vpop.f32.mrb[0].mxu0
    %v1328 = vpop.f32.mrb[0].mxu0
    %1329 = vdwg.mxu0
    %v1330 = vadd.f32 %v1052, %v1283
    %v1331 = vadd.f32 %v1053, %v1285
    %v1332 = vadd.f32 %v1054, %v1324
    %v1333 = vadd.f32 %v1055, %v1326
    %v1334 = vxor.u32 %v1330, 2147483648
    %v1335 = vmul.f32 %v1334, 1.442695
    %v1336 = vpow.pop %v1335
    %v1337 = vadd.f32 %v1336, 1.0
    %v1338 = vrcp.pop %v1337
    %v1339 = vmul.f32 1.0, %v1338
    %v1340 = vxor.u32 %v1331, 2147483648
    %v1341 = vmul.f32 %v1340, 1.442695
    %v1342 = vpow.pop %v1341
    %v1343 = vadd.f32 %v1342, 1.0
    %v1344 = vrcp.pop %v1343
    %v1345 = vmul.f32 1.0, %v1344
    %v1346 = vtanh.pop %v1332
    %v1347 = vxor.u32 %v1333, 2147483648
    %v1348 = vmul.f32 %v1347, 1.442695
    %v1349 = vpow.pop %v1348
    %v1350 = vadd.f32 %v1349, 1.0
    %v1351 = vrcp.pop %v1350
    %v1352 = vmul.f32 1.0, %v1351
    %v1353 = vmul.f32 %v1345, %v1044
    %v1354 = vmul.f32 %v1339, %v1346
    %v1355 = vadd.f32 %v1353, %v1354
    %v1356 = vtanh.pop %v1355
    %v1357 = vmul.f32 %v1352, %v1356
    %v1358 = vpack.c.bf16 %v1357, %v1357
    %1359 = vst [vmem:[#allocation3 + $0x8] sm:$0xf] %v1358
    %v1360 = vld [vmem:[#allocation2 + $0x60] sm:$0xff]
    %v1361 = vld [vmem:[#allocation2 + $0x68] sm:$0xff]
    %v1362 = vld [vmem:[#allocation2 + $0x70] sm:$0xff]
    %v1363 = vld [vmem:[#allocation2 + $0x78] sm:$0xff]
    %v1364 = vld [vmem:[#allocation8] sm:$0xff]
    %v1365 = vld [vmem:[#allocation8 + $0x8] sm:$0xff]
    %v1366 = vld [vmem:[#allocation8 + $0x10] sm:$0xff]
    %v1367 = vld [vmem:[#allocation8 + $0x18] sm:$0xff]
    %v1368 = vld [vmem:[#allocation8 + $0x20] sm:$0xff]
    %v1369 = vld [vmem:[#allocation8 + $0x28] sm:$0xff]
    %v1370 = vld [vmem:[#allocation8 + $0x30] sm:$0xff]
    %v1371 = vld [vmem:[#allocation8 + $0x38] sm:$0xff]
    %v1372 = vld [vmem:[#allocation8 + $0x40] sm:$0xff]
    %v1373 = vld [vmem:[#allocation8 + $0x48] sm:$0xff]
    %v1374 = vld [vmem:[#allocation8 + $0x50] sm:$0xff]
    %v1375 = vld [vmem:[#allocation8 + $0x58] sm:$0xff]
    %v1376 = vld [vmem:[#allocation8 + $0x60] sm:$0xff]
    %v1377 = vld [vmem:[#allocation8 + $0x68] sm:$0xff]
    %v1378 = vld [vmem:[#allocation8 + $0x70] sm:$0xff]
    %v1379 = vld [vmem:[#allocation8 + $0x78] sm:$0xff]
    %v1380 = vld [vmem:[#allocation8 + $0x80] sm:$0xff]
    %v1381 = vld [vmem:[#allocation8 + $0x88] sm:$0xff]
    %v1382 = vld [vmem:[#allocation8 + $0x90] sm:$0xff]
    %v1383 = vld [vmem:[#allocation8 + $0x98] sm:$0xff]
    %v1384 = vld [vmem:[#allocation8 + $0xa0] sm:$0xff]
    %v1385 = vld [vmem:[#allocation8 + $0xa8] sm:$0xff]
    %v1386 = vld [vmem:[#allocation8 + $0xb0] sm:$0xff]
    %v1387 = vld [vmem:[#allocation8 + $0xb8] sm:$0xff]
    %v1388 = vld [vmem:[#allocation8 + $0xc0] sm:$0xff]
    %v1389 = vld [vmem:[#allocation8 + $0xc8] sm:$0xff]
    %v1390 = vld [vmem:[#allocation8 + $0xd0] sm:$0xff]
    %v1391 = vld [vmem:[#allocation8 + $0xd8] sm:$0xff]
    %v1392 = vld [vmem:[#allocation8 + $0xe0] sm:$0xff]
    %v1393 = vld [vmem:[#allocation8 + $0xe8] sm:$0xff]
    %v1394 = vld [vmem:[#allocation8 + $0xf0] sm:$0xff]
    %v1395 = vld [vmem:[#allocation8 + $0xf8] sm:$0xff]
    %v1428 = vunpack.c.l.b16 %v1364
    %v1429 = vunpack.c.h.b16 %v1364
    %v1430 = vunpack.c.l.b16 %v1365
    %v1431 = vunpack.c.h.b16 %v1365
    %v1432 = vunpack.c.l.b16 %v1366
    %v1433 = vunpack.c.h.b16 %v1366
    %v1434 = vunpack.c.l.b16 %v1367
    %v1435 = vunpack.c.h.b16 %v1367
    %v1436 = vunpack.c.l.b16 %v1368
    %v1437 = vunpack.c.h.b16 %v1368
    %v1438 = vunpack.c.l.b16 %v1369
    %v1439 = vunpack.c.h.b16 %v1369
    %v1440 = vunpack.c.l.b16 %v1370
    %v1441 = vunpack.c.h.b16 %v1370
    %v1442 = vunpack.c.l.b16 %v1371
    %v1443 = vunpack.c.h.b16 %v1371
    %v1444 = vunpack.c.l.b16 %v1372
    %v1445 = vunpack.c.h.b16 %v1372
    %v1446 = vunpack.c.l.b16 %v1373
    %v1447 = vunpack.c.h.b16 %v1373
    %v1448 = vunpack.c.l.b16 %v1374
    %v1449 = vunpack.c.h.b16 %v1374
    %v1450 = vunpack.c.l.b16 %v1375
    %v1451 = vunpack.c.h.b16 %v1375
    %v1452 = vunpack.c.l.b16 %v1376
    %v1453 = vunpack.c.h.b16 %v1376
    %v1454 = vunpack.c.l.b16 %v1377
    %v1455 = vunpack.c.h.b16 %v1377
    %v1456 = vunpack.c.l.b16 %v1378
    %v1457 = vunpack.c.h.b16 %v1378
    %v1458 = vunpack.c.l.b16 %v1379
    %v1459 = vunpack.c.h.b16 %v1379
    %v1460 = vunpack.c.l.b16 %v1380
    %v1461 = vunpack.c.h.b16 %v1380
    %v1462 = vunpack.c.l.b16 %v1381
    %v1463 = vunpack.c.h.b16 %v1381
    %v1464 = vunpack.c.l.b16 %v1382
    %v1465 = vunpack.c.h.b16 %v1382
    %v1466 = vunpack.c.l.b16 %v1383
    %v1467 = vunpack.c.h.b16 %v1383
    %v1468 = vunpack.c.l.b16 %v1384
    %v1469 = vunpack.c.h.b16 %v1384
    %v1470 = vunpack.c.l.b16 %v1385
    %v1471 = vunpack.c.h.b16 %v1385
    %v1472 = vunpack.c.l.b16 %v1386
    %v1473 = vunpack.c.h.b16 %v1386
    %v1474 = vunpack.c.l.b16 %v1387
    %v1475 = vunpack.c.h.b16 %v1387
    %v1476 = vunpack.c.l.b16 %v1388
    %v1477 = vunpack.c.h.b16 %v1388
    %v1478 = vunpack.c.l.b16 %v1389
    %v1479 = vunpack.c.h.b16 %v1389
    %v1480 = vunpack.c.l.b16 %v1390
    %v1481 = vunpack.c.h.b16 %v1390
    %v1482 = vunpack.c.l.b16 %v1391
    %v1483 = vunpack.c.h.b16 %v1391
    %v1484 = vunpack.c.l.b16 %v1392
    %v1485 = vunpack.c.h.b16 %v1392
    %v1486 = vunpack.c.l.b16 %v1393
    %v1487 = vunpack.c.h.b16 %v1393
    %v1488 = vunpack.c.l.b16 %v1394
    %v1489 = vunpack.c.h.b16 %v1394
    %v1490 = vunpack.c.l.b16 %v1395
    %v1491 = vunpack.c.h.b16 %v1395
    %v1492 = vpack.c.b16 %v1432, %v1428
    %v1493 = vpack.c.b16 %v1433, %v1429
    %v1494 = vpack.c.b16 %v1434, %v1430
    %v1495 = vpack.c.b16 %v1435, %v1431
    %v1496 = vpack.c.b16 %v1440, %v1436
    %v1497 = vpack.c.b16 %v1441, %v1437
    %v1498 = vpack.c.b16 %v1442, %v1438
    %v1499 = vpack.c.b16 %v1443, %v1439
    %v1500 = vpack.c.b16 %v1448, %v1444
    %v1501 = vpack.c.b16 %v1449, %v1445
    %v1502 = vpack.c.b16 %v1450, %v1446
    %v1503 = vpack.c.b16 %v1451, %v1447
    %v1504 = vpack.c.b16 %v1456, %v1452
    %v1505 = vpack.c.b16 %v1457, %v1453
    %v1506 = vpack.c.b16 %v1458, %v1454
    %v1507 = vpack.c.b16 %v1459, %v1455
    %v1508 = vpack.c.b16 %v1464, %v1460
    %v1509 = vpack.c.b16 %v1465, %v1461
    %v1510 = vpack.c.b16 %v1466, %v1462
    %v1511 = vpack.c.b16 %v1467, %v1463
    %v1512 = vpack.c.b16 %v1472, %v1468
    %v1513 = vpack.c.b16 %v1473, %v1469
    %v1514 = vpack.c.b16 %v1474, %v1470
    %v1515 = vpack.c.b16 %v1475, %v1471
    %v1516 = vpack.c.b16 %v1480, %v1476
    %v1517 = vpack.c.b16 %v1481, %v1477
    %v1518 = vpack.c.b16 %v1482, %v1478
    %v1519 = vpack.c.b16 %v1483, %v1479
    %v1520 = vpack.c.b16 %v1488, %v1484
    %v1521 = vpack.c.b16 %v1489, %v1485
    %v1522 = vpack.c.b16 %v1490, %v1486
    %v1523 = vpack.c.b16 %v1491, %v1487
    %1556 = vmatprep.subr.bf16.mxu0 %v1493
    %1557 = vmatpush1.bf16.msra.mxu0 %v1492
    %1558 = vmatprep.subr.bf16.mxu0 %v1497
    %1559 = vmatpush1.bf16.msra.mxu0 %v1496
    %1560 = vmatprep.subr.bf16.mxu0 %v1501
    %1561 = vmatpush1.bf16.msra.mxu0 %v1500
    %1562 = vmatprep.subr.bf16.mxu0 %v1505
    %1563 = vmatpush1.bf16.msra.mxu0 %v1504
    %1564 = vmatprep.subr.bf16.mxu0 %v1509
    %1565 = vmatpush1.bf16.msra.mxu0 %v1508
    %1566 = vmatprep.subr.bf16.mxu0 %v1513
    %1567 = vmatpush1.bf16.msra.mxu0 %v1512
    %1568 = vmatprep.subr.bf16.mxu0 %v1517
    %1569 = vmatpush1.bf16.msra.mxu0 %v1516
    %1570 = vmatprep.subr.bf16.mxu0 %v1521
    %1571 = vmatpush1.bf16.msra.mxu0 %v1520
    %1572 = vmatprep.subr.bf16.mxu0 0
    %1573 = vmatpush1.bf16.msra.mxu0 0
    %1574 = vmatprep.subr.bf16.mxu0 0
    %1575 = vmatpush1.bf16.msra.mxu0 0
    %1576 = vmatprep.subr.bf16.mxu0 0
    %1577 = vmatpush1.bf16.msra.mxu0 0
    %1578 = vmatprep.subr.bf16.mxu0 0
    %1579 = vmatpush1.bf16.msra.mxu0 0
    %1580 = vmatprep.subr.bf16.mxu0 0
    %1581 = vmatpush1.bf16.msra.mxu0 0
    %1582 = vmatprep.subr.bf16.mxu0 0
    %1583 = vmatpush1.bf16.msra.mxu0 0
    %1584 = vmatprep.subr.bf16.mxu0 0
    %1585 = vmatpush1.bf16.msra.mxu0 0
    %1586 = vmatprep.subr.bf16.mxu0 0
    %1587 = vmatpush1.bf16.msra.mxu0 0
    %1588 = vmatprep.mubr.bf16.mxu0 0
    %1589 = vmatmul.mubr.bf16.gmra.mrb[0].mxu0 %v1358
    %v1590 = vpop.f32.mrb[0].mxu0
    %v1591 = vadd.f32 0.0, %v1590
    %v1592 = vpop.f32.mrb[0].mxu0
    %v1593 = vadd.f32 0.0, %v1592
    %v1594 = vpop.f32.mrb[0].mxu0
    %v1595 = vpop.f32.mrb[0].mxu0
    %1596 = vdwg.mxu0
    %1597 = vmatprep.subr.bf16.mxu0 %v1495
    %1598 = vmatpush1.bf16.msra.mxu0 %v1494
    %1599 = vmatprep.subr.bf16.mxu0 %v1499
    %1600 = vmatpush1.bf16.msra.mxu0 %v1498
    %1601 = vmatprep.subr.bf16.mxu0 %v1503
    %1602 = vmatpush1.bf16.msra.mxu0 %v1502
    %1603 = vmatprep.subr.bf16.mxu0 %v1507
    %1604 = vmatpush1.bf16.msra.mxu0 %v1506
    %1605 = vmatprep.subr.bf16.mxu0 %v1511
    %1606 = vmatpush1.bf16.msra.mxu0 %v1510
    %1607 = vmatprep.subr.bf16.mxu0 %v1515
    %1608 = vmatpush1.bf16.msra.mxu0 %v1514
    %1609 = vmatprep.subr.bf16.mxu0 %v1519
    %1610 = vmatpush1.bf16.msra.mxu0 %v1518
    %1611 = vmatprep.subr.bf16.mxu0 %v1523
    %1612 = vmatpush1.bf16.msra.mxu0 %v1522
    %1613 = vmatprep.subr.bf16.mxu0 0
    %1614 = vmatpush1.bf16.msra.mxu0 0
    %1615 = vmatprep.subr.bf16.mxu0 0
    %1616 = vmatpush1.bf16.msra.mxu0 0
    %1617 = vmatprep.subr.bf16.mxu0 0
    %1618 = vmatpush1.bf16.msra.mxu0 0
    %1619 = vmatprep.subr.bf16.mxu0 0
    %1620 = vmatpush1.bf16.msra.mxu0 0
    %1621 = vmatprep.subr.bf16.mxu0 0
    %1622 = vmatpush1.bf16.msra.mxu0 0
    %1623 = vmatprep.subr.bf16.mxu0 0
    %1624 = vmatpush1.bf16.msra.mxu0 0
    %1625 = vmatprep.subr.bf16.mxu0 0
    %1626 = vmatpush1.bf16.msra.mxu0 0
    %1627 = vmatprep.subr.bf16.mxu0 0
    %1628 = vmatpush1.bf16.msra.mxu0 0
    %1629 = vmatprep.mubr.bf16.mxu0 0
    %1630 = vmatmul.mubr.bf16.gmra.mrb[0].mxu0 %v1358
    %v1631 = vpop.f32.mrb[0].mxu0
    %v1632 = vadd.f32 0.0, %v1631
    %v1633 = vpop.f32.mrb[0].mxu0
    %v1634 = vadd.f32 0.0, %v1633
    %v1635 = vpop.f32.mrb[0].mxu0
    %v1636 = vpop.f32.mrb[0].mxu0
    %1637 = vdwg.mxu0
    %v1638 = vadd.f32 %v1360, %v1591
    %v1639 = vadd.f32 %v1361, %v1593
    %v1640 = vadd.f32 %v1362, %v1632
    %v1641 = vadd.f32 %v1363, %v1634
    %v1642 = vxor.u32 %v1638, 2147483648
    %v1643 = vmul.f32 %v1642, 1.442695
    %v1644 = vpow.pop %v1643
    %v1645 = vadd.f32 %v1644, 1.0
    %v1646 = vrcp.pop %v1645
    %v1647 = vmul.f32 1.0, %v1646
    %v1648 = vxor.u32 %v1639, 2147483648
    %v1649 = vmul.f32 %v1648, 1.442695
    %v1650 = vpow.pop %v1649
    %v1651 = vadd.f32 %v1650, 1.0
    %v1652 = vrcp.pop %v1651
    %v1653 = vmul.f32 1.0, %v1652
    %v1654 = vtanh.pop %v1640
    %v1655 = vxor.u32 %v1641, 2147483648
    %v1656 = vmul.f32 %v1655, 1.442695
    %v1657 = vpow.pop %v1656
    %v1658 = vadd.f32 %v1657, 1.0
    %v1659 = vrcp.pop %v1658
    %v1660 = vmul.f32 1.0, %v1659
    %v1661 = vmul.f32 %v1653, %v1355
    %v1662 = vmul.f32 %v1647, %v1654
    %v1663 = vadd.f32 %v1661, %v1662
    %v1664 = vtanh.pop %v1663
    %v1665 = vmul.f32 %v1660, %v1664
    %v1666 = vpack.c.bf16 %v1665, %v1665
    %v1668 = vrot.slane %v1666, 4
    %1670 = vst [vmem:[#allocation3 + $0x8] sm:$0xf0] %v1668
    %v1671 = vld [vmem:[#allocation2 + $0x80] sm:$0xff]
    %v1672 = vld [vmem:[#allocation2 + $0x88] sm:$0xff]
    %v1673 = vld [vmem:[#allocation2 + $0x90] sm:$0xff]
    %v1674 = vld [vmem:[#allocation2 + $0x98] sm:$0xff]
    %v1675 = vld [vmem:[#allocation8] sm:$0xff]
    %v1676 = vld [vmem:[#allocation8 + $0x8] sm:$0xff]
    %v1677 = vld [vmem:[#allocation8 + $0x10] sm:$0xff]
    %v1678 = vld [vmem:[#allocation8 + $0x18] sm:$0xff]
    %v1679 = vld [vmem:[#allocation8 + $0x20] sm:$0xff]
    %v1680 = vld [vmem:[#allocation8 + $0x28] sm:$0xff]
    %v1681 = vld [vmem:[#allocation8 + $0x30] sm:$0xff]
    %v1682 = vld [vmem:[#allocation8 + $0x38] sm:$0xff]
    %v1683 = vld [vmem:[#allocation8 + $0x40] sm:$0xff]
    %v1684 = vld [vmem:[#allocation8 + $0x48] sm:$0xff]
    %v1685 = vld [vmem:[#allocation8 + $0x50] sm:$0xff]
    %v1686 = vld [vmem:[#allocation8 + $0x58] sm:$0xff]
    %v1687 = vld [vmem:[#allocation8 + $0x60] sm:$0xff]
    %v1688 = vld [vmem:[#allocation8 + $0x68] sm:$0xff]
    %v1689 = vld [vmem:[#allocation8 + $0x70] sm:$0xff]
    %v1690 = vld [vmem:[#allocation8 + $0x78] sm:$0xff]
    %v1691 = vld [vmem:[#allocation8 + $0x80] sm:$0xff]
    %v1692 = vld [vmem:[#allocation8 + $0x88] sm:$0xff]
    %v1693 = vld [vmem:[#allocation8 + $0x90] sm:$0xff]
    %v1694 = vld [vmem:[#allocation8 + $0x98] sm:$0xff]
    %v1695 = vld [vmem:[#allocation8 + $0xa0] sm:$0xff]
    %v1696 = vld [vmem:[#allocation8 + $0xa8] sm:$0xff]
    %v1697 = vld [vmem:[#allocation8 + $0xb0] sm:$0xff]
    %v1698 = vld [vmem:[#allocation8 + $0xb8] sm:$0xff]
    %v1699 = vld [vmem:[#allocation8 + $0xc0] sm:$0xff]
    %v1700 = vld [vmem:[#allocation8 + $0xc8] sm:$0xff]
    %v1701 = vld [vmem:[#allocation8 + $0xd0] sm:$0xff]
    %v1702 = vld [vmem:[#allocation8 + $0xd8] sm:$0xff]
    %v1703 = vld [vmem:[#allocation8 + $0xe0] sm:$0xff]
    %v1704 = vld [vmem:[#allocation8 + $0xe8] sm:$0xff]
    %v1705 = vld [vmem:[#allocation8 + $0xf0] sm:$0xff]
    %v1706 = vld [vmem:[#allocation8 + $0xf8] sm:$0xff]
    %v1739 = vunpack.c.l.b16 %v1675
    %v1740 = vunpack.c.h.b16 %v1675
    %v1741 = vunpack.c.l.b16 %v1676
    %v1742 = vunpack.c.h.b16 %v1676
    %v1743 = vunpack.c.l.b16 %v1677
    %v1744 = vunpack.c.h.b16 %v1677
    %v1745 = vunpack.c.l.b16 %v1678
    %v1746 = vunpack.c.h.b16 %v1678
    %v1747 = vunpack.c.l.b16 %v1679
    %v1748 = vunpack.c.h.b16 %v1679
    %v1749 = vunpack.c.l.b16 %v1680
    %v1750 = vunpack.c.h.b16 %v1680
    %v1751 = vunpack.c.l.b16 %v1681
    %v1752 = vunpack.c.h.b16 %v1681
    %v1753 = vunpack.c.l.b16 %v1682
    %v1754 = vunpack.c.h.b16 %v1682
    %v1755 = vunpack.c.l.b16 %v1683
    %v1756 = vunpack.c.h.b16 %v1683
    %v1757 = vunpack.c.l.b16 %v1684
    %v1758 = vunpack.c.h.b16 %v1684
    %v1759 = vunpack.c.l.b16 %v1685
    %v1760 = vunpack.c.h.b16 %v1685
    %v1761 = vunpack.c.l.b16 %v1686
    %v1762 = vunpack.c.h.b16 %v1686
    %v1763 = vunpack.c.l.b16 %v1687
    %v1764 = vunpack.c.h.b16 %v1687
    %v1765 = vunpack.c.l.b16 %v1688
    %v1766 = vunpack.c.h.b16 %v1688
    %v1767 = vunpack.c.l.b16 %v1689
    %v1768 = vunpack.c.h.b16 %v1689
    %v1769 = vunpack.c.l.b16 %v1690
    %v1770 = vunpack.c.h.b16 %v1690
    %v1771 = vunpack.c.l.b16 %v1691
    %v1772 = vunpack.c.h.b16 %v1691
    %v1773 = vunpack.c.l.b16 %v1692
    %v1774 = vunpack.c.h.b16 %v1692
    %v1775 = vunpack.c.l.b16 %v1693
    %v1776 = vunpack.c.h.b16 %v1693
    %v1777 = vunpack.c.l.b16 %v1694
    %v1778 = vunpack.c.h.b16 %v1694
    %v1779 = vunpack.c.l.b16 %v1695
    %v1780 = vunpack.c.h.b16 %v1695
    %v1781 = vunpack.c.l.b16 %v1696
    %v1782 = vunpack.c.h.b16 %v1696
    %v1783 = vunpack.c.l.b16 %v1697
    %v1784 = vunpack.c.h.b16 %v1697
    %v1785 = vunpack.c.l.b16 %v1698
    %v1786 = vunpack.c.h.b16 %v1698
    %v1787 = vunpack.c.l.b16 %v1699
    %v1788 = vunpack.c.h.b16 %v1699
    %v1789 = vunpack.c.l.b16 %v1700
    %v1790 = vunpack.c.h.b16 %v1700
    %v1791 = vunpack.c.l.b16 %v1701
    %v1792 = vunpack.c.h.b16 %v1701
    %v1793 = vunpack.c.l.b16 %v1702
    %v1794 = vunpack.c.h.b16 %v1702
    %v1795 = vunpack.c.l.b16 %v1703
    %v1796 = vunpack.c.h.b16 %v1703
    %v1797 = vunpack.c.l.b16 %v1704
    %v1798 = vunpack.c.h.b16 %v1704
    %v1799 = vunpack.c.l.b16 %v1705
    %v1800 = vunpack.c.h.b16 %v1705
    %v1801 = vunpack.c.l.b16 %v1706
    %v1802 = vunpack.c.h.b16 %v1706
    %v1803 = vpack.c.b16 %v1743, %v1739
    %v1804 = vpack.c.b16 %v1744, %v1740
    %v1805 = vpack.c.b16 %v1745, %v1741
    %v1806 = vpack.c.b16 %v1746, %v1742
    %v1807 = vpack.c.b16 %v1751, %v1747
    %v1808 = vpack.c.b16 %v1752, %v1748
    %v1809 = vpack.c.b16 %v1753, %v1749
    %v1810 = vpack.c.b16 %v1754, %v1750
    %v1811 = vpack.c.b16 %v1759, %v1755
    %v1812 = vpack.c.b16 %v1760, %v1756
    %v1813 = vpack.c.b16 %v1761, %v1757
    %v1814 = vpack.c.b16 %v1762, %v1758
    %v1815 = vpack.c.b16 %v1767, %v1763
    %v1816 = vpack.c.b16 %v1768, %v1764
    %v1817 = vpack.c.b16 %v1769, %v1765
    %v1818 = vpack.c.b16 %v1770, %v1766
    %v1819 = vpack.c.b16 %v1775, %v1771
    %v1820 = vpack.c.b16 %v1776, %v1772
    %v1821 = vpack.c.b16 %v1777, %v1773
    %v1822 = vpack.c.b16 %v1778, %v1774
    %v1823 = vpack.c.b16 %v1783, %v1779
    %v1824 = vpack.c.b16 %v1784, %v1780
    %v1825 = vpack.c.b16 %v1785, %v1781
    %v1826 = vpack.c.b16 %v1786, %v1782
    %v1827 = vpack.c.b16 %v1791, %v1787
    %v1828 = vpack.c.b16 %v1792, %v1788
    %v1829 = vpack.c.b16 %v1793, %v1789
    %v1830 = vpack.c.b16 %v1794, %v1790
    %v1831 = vpack.c.b16 %v1799, %v1795
    %v1832 = vpack.c.b16 %v1800, %v1796
    %v1833 = vpack.c.b16 %v1801, %v1797
    %v1834 = vpack.c.b16 %v1802, %v1798
    %1867 = vmatprep.subr.bf16.mxu0 %v1804
    %1868 = vmatpush1.bf16.msra.mxu0 %v1803
    %1869 = vmatprep.subr.bf16.mxu0 %v1808
    %1870 = vmatpush1.bf16.msra.mxu0 %v1807
    %1871 = vmatprep.subr.bf16.mxu0 %v1812
    %1872 = vmatpush1.bf16.msra.mxu0 %v1811
    %1873 = vmatprep.subr.bf16.mxu0 %v1816
    %1874 = vmatpush1.bf16.msra.mxu0 %v1815
    %1875 = vmatprep.subr.bf16.mxu0 %v1820
    %1876 = vmatpush1.bf16.msra.mxu0 %v1819
    %1877 = vmatprep.subr.bf16.mxu0 %v1824
    %1878 = vmatpush1.bf16.msra.mxu0 %v1823
    %1879 = vmatprep.subr.bf16.mxu0 %v1828
    %1880 = vmatpush1.bf16.msra.mxu0 %v1827
    %1881 = vmatprep.subr.bf16.mxu0 %v1832
    %1882 = vmatpush1.bf16.msra.mxu0 %v1831
    %1883 = vmatprep.subr.bf16.mxu0 0
    %1884 = vmatpush1.bf16.msra.mxu0 0
    %1885 = vmatprep.subr.bf16.mxu0 0
    %1886 = vmatpush1.bf16.msra.mxu0 0
    %1887 = vmatprep.subr.bf16.mxu0 0
    %1888 = vmatpush1.bf16.msra.mxu0 0
    %1889 = vmatprep.subr.bf16.mxu0 0
    %1890 = vmatpush1.bf16.msra.mxu0 0
    %1891 = vmatprep.subr.bf16.mxu0 0
    %1892 = vmatpush1.bf16.msra.mxu0 0
    %1893 = vmatprep.subr.bf16.mxu0 0
    %1894 = vmatpush1.bf16.msra.mxu0 0
    %1895 = vmatprep.subr.bf16.mxu0 0
    %1896 = vmatpush1.bf16.msra.mxu0 0
    %1897 = vmatprep.subr.bf16.mxu0 0
    %1898 = vmatpush1.bf16.msra.mxu0 0
    %1899 = vmatprep.mubr.bf16.mxu0 0
    %1900 = vmatmul.mubr.bf16.gmra.mrb[0].mxu0 %v1666
    %v1901 = vpop.f32.mrb[0].mxu0
    %v1902 = vadd.f32 0.0, %v1901
    %v1903 = vpop.f32.mrb[0].mxu0
    %v1904 = vadd.f32 0.0, %v1903
    %v1905 = vpop.f32.mrb[0].mxu0
    %v1906 = vpop.f32.mrb[0].mxu0
    %1907 = vdwg.mxu0
    %1908 = vmatprep.subr.bf16.mxu0 %v1806
    %1909 = vmatpush1.bf16.msra.mxu0 %v1805
    %1910 = vmatprep.subr.bf16.mxu0 %v1810
    %1911 = vmatpush1.bf16.msra.mxu0 %v1809
    %1912 = vmatprep.subr.bf16.mxu0 %v1814
    %1913 = vmatpush1.bf16.msra.mxu0 %v1813
    %1914 = vmatprep.subr.bf16.mxu0 %v1818
    %1915 = vmatpush1.bf16.msra.mxu0 %v1817
    %1916 = vmatprep.subr.bf16.mxu0 %v1822
    %1917 = vmatpush1.bf16.msra.mxu0 %v1821
    %1918 = vmatprep.subr.bf16.mxu0 %v1826
    %1919 = vmatpush1.bf16.msra.mxu0 %v1825
    %1920 = vmatprep.subr.bf16.mxu0 %v1830
    %1921 = vmatpush1.bf16.msra.mxu0 %v1829
    %1922 = vmatprep.subr.bf16.mxu0 %v1834
    %1923 = vmatpush1.bf16.msra.mxu0 %v1833
    %1924 = vmatprep.subr.bf16.mxu0 0
    %1925 = vmatpush1.bf16.msra.mxu0 0
    %1926 = vmatprep.subr.bf16.mxu0 0
    %1927 = vmatpush1.bf16.msra.mxu0 0
    %1928 = vmatprep.subr.bf16.mxu0 0
    %1929 = vmatpush1.bf16.msra.mxu0 0
    %1930 = vmatprep.subr.bf16.mxu0 0
    %1931 = vmatpush1.bf16.msra.mxu0 0
    %1932 = vmatprep.subr.bf16.mxu0 0
    %1933 = vmatpush1.bf16.msra.mxu0 0
    %1934 = vmatprep.subr.bf16.mxu0 0
    %1935 = vmatpush1.bf16.msra.mxu0 0
    %1936 = vmatprep.subr.bf16.mxu0 0
    %1937 = vmatpush1.bf16.msra.mxu0 0
    %1938 = vmatprep.subr.bf16.mxu0 0
    %1939 = vmatpush1.bf16.msra.mxu0 0
    %1940 = vmatprep.mubr.bf16.mxu0 0
    %1941 = vmatmul.mubr.bf16.gmra.mrb[0].mxu0 %v1666
    %v1942 = vpop.f32.mrb[0].mxu0
    %v1943 = vadd.f32 0.0, %v1942
    %v1944 = vpop.f32.mrb[0].mxu0
    %v1945 = vadd.f32 0.0, %v1944
    %v1946 = vpop.f32.mrb[0].mxu0
    %v1947 = vpop.f32.mrb[0].mxu0
    %1948 = vdwg.mxu0
    %v1949 = vadd.f32 %v1671, %v1902
    %v1950 = vadd.f32 %v1672, %v1904
    %v1951 = vadd.f32 %v1673, %v1943
    %v1952 = vadd.f32 %v1674, %v1945
    %v1953 = vxor.u32 %v1949, 2147483648
    %v1954 = vmul.f32 %v1953, 1.442695
    %v1955 = vpow.pop %v1954
    %v1956 = vadd.f32 %v1955, 1.0
    %v1957 = vrcp.pop %v1956
    %v1958 = vmul.f32 1.0, %v1957
    %v1959 = vxor.u32 %v1950, 2147483648
    %v1960 = vmul.f32 %v1959, 1.442695
    %v1961 = vpow.pop %v1960
    %v1962 = vadd.f32 %v1961, 1.0
    %v1963 = vrcp.pop %v1962
    %v1964 = vmul.f32 1.0, %v1963
    %v1965 = vtanh.pop %v1951
    %v1966 = vxor.u32 %v1952, 2147483648
    %v1967 = vmul.f32 %v1966, 1.442695
    %v1968 = vpow.pop %v1967
    %v1969 = vadd.f32 %v1968, 1.0
    %v1970 = vrcp.pop %v1969
    %v1971 = vmul.f32 1.0, %v1970
    %v1972 = vmul.f32 %v1964, %v1663
    %v1973 = vmul.f32 %v1958, %v1965
    %v1974 = vadd.f32 %v1972, %v1973
    %v1975 = vtanh.pop %v1974
    %v1976 = vmul.f32 %v1971, %v1975
    %v1977 = vpack.c.bf16 %v1976, %v1976
    %1978 = vst [vmem:[#allocation3 + $0x10] sm:$0xf] %v1977
    %v1979 = vld [vmem:[#allocation2 + $0xa0] sm:$0xff]
    %v1980 = vld [vmem:[#allocation2 + $0xa8] sm:$0xff]
    %v1981 = vld [vmem:[#allocation2 + $0xb0] sm:$0xff]
    %v1982 = vld [vmem:[#allocation2 + $0xb8] sm:$0xff]
    %v1983 = vld [vmem:[#allocation8] sm:$0xff]
    %v1984 = vld [vmem:[#allocation8 + $0x8] sm:$0xff]
    %v1985 = vld [vmem:[#allocation8 + $0x10] sm:$0xff]
    %v1986 = vld [vmem:[#allocation8 + $0x18] sm:$0xff]
    %v1987 = vld [vmem:[#allocation8 + $0x20] sm:$0xff]
    %v1988 = vld [vmem:[#allocation8 + $0x28] sm:$0xff]
    %v1989 = vld [vmem:[#allocation8 + $0x30] sm:$0xff]
    %v1990 = vld [vmem:[#allocation8 + $0x38] sm:$0xff]
    %v1991 = vld [vmem:[#allocation8 + $0x40] sm:$0xff]
    %v1992 = vld [vmem:[#allocation8 + $0x48] sm:$0xff]
    %v1993 = vld [vmem:[#allocation8 + $0x50] sm:$0xff]
    %v1994 = vld [vmem:[#allocation8 + $0x58] sm:$0xff]
    %v1995 = vld [vmem:[#allocation8 + $0x60] sm:$0xff]
    %v1996 = vld [vmem:[#allocation8 + $0x68] sm:$0xff]
    %v1997 = vld [vmem:[#allocation8 + $0x70] sm:$0xff]
    %v1998 = vld [vmem:[#allocation8 + $0x78] sm:$0xff]
    %v1999 = vld [vmem:[#allocation8 + $0x80] sm:$0xff]
    %v2000 = vld [vmem:[#allocation8 + $0x88] sm:$0xff]
    %v2001 = vld [vmem:[#allocation8 + $0x90] sm:$0xff]
    %v2002 = vld [vmem:[#allocation8 + $0x98] sm:$0xff]
    %v2003 = vld [vmem:[#allocation8 + $0xa0] sm:$0xff]
    %v2004 = vld [vmem:[#allocation8 + $0xa8] sm:$0xff]
    %v2005 = vld [vmem:[#allocation8 + $0xb0] sm:$0xff]
    %v2006 = vld [vmem:[#allocation8 + $0xb8] sm:$0xff]
    %v2007 = vld [vmem:[#allocation8 + $0xc0] sm:$0xff]
    %v2008 = vld [vmem:[#allocation8 + $0xc8] sm:$0xff]
    %v2009 = vld [vmem:[#allocation8 + $0xd0] sm:$0xff]
    %v2010 = vld [vmem:[#allocation8 + $0xd8] sm:$0xff]
    %v2011 = vld [vmem:[#allocation8 + $0xe0] sm:$0xff]
    %v2012 = vld [vmem:[#allocation8 + $0xe8] sm:$0xff]
    %v2013 = vld [vmem:[#allocation8 + $0xf0] sm:$0xff]
    %v2014 = vld [vmem:[#allocation8 + $0xf8] sm:$0xff]
    %v2047 = vunpack.c.l.b16 %v1983
    %v2048 = vunpack.c.h.b16 %v1983
    %v2049 = vunpack.c.l.b16 %v1984
    %v2050 = vunpack.c.h.b16 %v1984
    %v2051 = vunpack.c.l.b16 %v1985
    %v2052 = vunpack.c.h.b16 %v1985
    %v2053 = vunpack.c.l.b16 %v1986
    %v2054 = vunpack.c.h.b16 %v1986
    %v2055 = vunpack.c.l.b16 %v1987
    %v2056 = vunpack.c.h.b16 %v1987
    %v2057 = vunpack.c.l.b16 %v1988
    %v2058 = vunpack.c.h.b16 %v1988
    %v2059 = vunpack.c.l.b16 %v1989
    %v2060 = vunpack.c.h.b16 %v1989
    %v2061 = vunpack.c.l.b16 %v1990
    %v2062 = vunpack.c.h.b16 %v1990
    %v2063 = vunpack.c.l.b16 %v1991
    %v2064 = vunpack.c.h.b16 %v1991
    %v2065 = vunpack.c.l.b16 %v1992
    %v2066 = vunpack.c.h.b16 %v1992
    %v2067 = vunpack.c.l.b16 %v1993
    %v2068 = vunpack.c.h.b16 %v1993
    %v2069 = vunpack.c.l.b16 %v1994
    %v2070 = vunpack.c.h.b16 %v1994
    %v2071 = vunpack.c.l.b16 %v1995
    %v2072 = vunpack.c.h.b16 %v1995
    %v2073 = vunpack.c.l.b16 %v1996
    %v2074 = vunpack.c.h.b16 %v1996
    %v2075 = vunpack.c.l.b16 %v1997
    %v2076 = vunpack.c.h.b16 %v1997
    %v2077 = vunpack.c.l.b16 %v1998
    %v2078 = vunpack.c.h.b16 %v1998
    %v2079 = vunpack.c.l.b16 %v1999
    %v2080 = vunpack.c.h.b16 %v1999
    %v2081 = vunpack.c.l.b16 %v2000
    %v2082 = vunpack.c.h.b16 %v2000
    %v2083 = vunpack.c.l.b16 %v2001
    %v2084 = vunpack.c.h.b16 %v2001
    %v2085 = vunpack.c.l.b16 %v2002
    %v2086 = vunpack.c.h.b16 %v2002
    %v2087 = vunpack.c.l.b16 %v2003
    %v2088 = vunpack.c.h.b16 %v2003
    %v2089 = vunpack.c.l.b16 %v2004
    %v2090 = vunpack.c.h.b16 %v2004
    %v2091 = vunpack.c.l.b16 %v2005
    %v2092 = vunpack.c.h.b16 %v2005
    %v2093 = vunpack.c.l.b16 %v2006
    %v2094 = vunpack.c.h.b16 %v2006
    %v2095 = vunpack.c.l.b16 %v2007
    %v2096 = vunpack.c.h.b16 %v2007
    %v2097 = vunpack.c.l.b16 %v2008
    %v2098 = vunpack.c.h.b16 %v2008
    %v2099 = vunpack.c.l.b16 %v2009
    %v2100 = vunpack.c.h.b16 %v2009
    %v2101 = vunpack.c.l.b16 %v2010
    %v2102 = vunpack.c.h.b16 %v2010
    %v2103 = vunpack.c.l.b16 %v2011
    %v2104 = vunpack.c.h.b16 %v2011
    %v2105 = vunpack.c.l.b16 %v2012
    %v2106 = vunpack.c.h.b16 %v2012
    %v2107 = vunpack.c.l.b16 %v2013
    %v2108 = vunpack.c.h.b16 %v2013
    %v2109 = vunpack.c.l.b16 %v2014
    %v2110 = vunpack.c.h.b16 %v2014
    %v2111 = vpack.c.b16 %v2051, %v2047
    %v2112 = vpack.c.b16 %v2052, %v2048
    %v2113 = vpack.c.b16 %v2053, %v2049
    %v2114 = vpack.c.b16 %v2054, %v2050
    %v2115 = vpack.c.b16 %v2059, %v2055
    %v2116 = vpack.c.b16 %v2060, %v2056
    %v2117 = vpack.c.b16 %v2061, %v2057
    %v2118 = vpack.c.b16 %v2062, %v2058
    %v2119 = vpack.c.b16 %v2067, %v2063
    %v2120 = vpack.c.b16 %v2068, %v2064
    %v2121 = vpack.c.b16 %v2069, %v2065
    %v2122 = vpack.c.b16 %v2070, %v2066
    %v2123 = vpack.c.b16 %v2075, %v2071
    %v2124 = vpack.c.b16 %v2076, %v2072
    %v2125 = vpack.c.b16 %v2077, %v2073
    %v2126 = vpack.c.b16 %v2078, %v2074
    %v2127 = vpack.c.b16 %v2083, %v2079
    %v2128 = vpack.c.b16 %v2084, %v2080
    %v2129 = vpack.c.b16 %v2085, %v2081
    %v2130 = vpack.c.b16 %v2086, %v2082
    %v2131 = vpack.c.b16 %v2091, %v2087
    %v2132 = vpack.c.b16 %v2092, %v2088
    %v2133 = vpack.c.b16 %v2093, %v2089
    %v2134 = vpack.c.b16 %v2094, %v2090
    %v2135 = vpack.c.b16 %v2099, %v2095
    %v2136 = vpack.c.b16 %v2100, %v2096
    %v2137 = vpack.c.b16 %v2101, %v2097
    %v2138 = vpack.c.b16 %v2102, %v2098
    %v2139 = vpack.c.b16 %v2107, %v2103
    %v2140 = vpack.c.b16 %v2108, %v2104
    %v2141 = vpack.c.b16 %v2109, %v2105
    %v2142 = vpack.c.b16 %v2110, %v2106
    %2175 = vmatprep.subr.bf16.mxu0 %v2112
    %2176 = vmatpush1.bf16.msra.mxu0 %v2111
    %2177 = vmatprep.subr.bf16.mxu0 %v2116
    %2178 = vmatpush1.bf16.msra.mxu0 %v2115
    %2179 = vmatprep.subr.bf16.mxu0 %v2120
    %2180 = vmatpush1.bf16.msra.mxu0 %v2119
    %2181 = vmatprep.subr.bf16.mxu0 %v2124
    %2182 = vmatpush1.bf16.msra.mxu0 %v2123
    %2183 = vmatprep.subr.bf16.mxu0 %v2128
    %2184 = vmatpush1.bf16.msra.mxu0 %v2127
    %2185 = vmatprep.subr.bf16.mxu0 %v2132
    %2186 = vmatpush1.bf16.msra.mxu0 %v2131
    %2187 = vmatprep.subr.bf16.mxu0 %v2136
    %2188 = vmatpush1.bf16.msra.mxu0 %v2135
    %2189 = vmatprep.subr.bf16.mxu0 %v2140
    %2190 = vmatpush1.bf16.msra.mxu0 %v2139
    %2191 = vmatprep.subr.bf16.mxu0 0
    %2192 = vmatpush1.bf16.msra.mxu0 0
    %2193 = vmatprep.subr.bf16.mxu0 0
    %2194 = vmatpush1.bf16.msra.mxu0 0
    %2195 = vmatprep.subr.bf16.mxu0 0
    %2196 = vmatpush1.bf16.msra.mxu0 0
    %2197 = vmatprep.subr.bf16.mxu0 0
    %2198 = vmatpush1.bf16.msra.mxu0 0
    %2199 = vmatprep.subr.bf16.mxu0 0
    %2200 = vmatpush1.bf16.msra.mxu0 0
    %2201 = vmatprep.subr.bf16.mxu0 0
    %2202 = vmatpush1.bf16.msra.mxu0 0
    %2203 = vmatprep.subr.bf16.mxu0 0
    %2204 = vmatpush1.bf16.msra.mxu0 0
    %2205 = vmatprep.subr.bf16.mxu0 0
    %2206 = vmatpush1.bf16.msra.mxu0 0
    %2207 = vmatprep.mubr.bf16.mxu0 0
    %2208 = vmatmul.mubr.bf16.gmra.mrb[0].mxu0 %v1977
    %v2209 = vpop.f32.mrb[0].mxu0
    %v2210 = vadd.f32 0.0, %v2209
    %v2211 = vpop.f32.mrb[0].mxu0
    %v2212 = vadd.f32 0.0, %v2211
    %v2213 = vpop.f32.mrb[0].mxu0
    %v2214 = vpop.f32.mrb[0].mxu0
    %2215 = vdwg.mxu0
    %2216 = vmatprep.subr.bf16.mxu0 %v2114
    %2217 = vmatpush1.bf16.msra.mxu0 %v2113
    %2218 = vmatprep.subr.bf16.mxu0 %v2118
    %2219 = vmatpush1.bf16.msra.mxu0 %v2117
    %2220 = vmatprep.subr.bf16.mxu0 %v2122
    %2221 = vmatpush1.bf16.msra.mxu0 %v2121
    %2222 = vmatprep.subr.bf16.mxu0 %v2126
    %2223 = vmatpush1.bf16.msra.mxu0 %v2125
    %2224 = vmatprep.subr.bf16.mxu0 %v2130
    %2225 = vmatpush1.bf16.msra.mxu0 %v2129
    %2226 = vmatprep.subr.bf16.mxu0 %v2134
    %2227 = vmatpush1.bf16.msra.mxu0 %v2133
    %2228 = vmatprep.subr.bf16.mxu0 %v2138
    %2229 = vmatpush1.bf16.msra.mxu0 %v2137
    %2230 = vmatprep.subr.bf16.mxu0 %v2142
    %2231 = vmatpush1.bf16.msra.mxu0 %v2141
    %2232 = vmatprep.subr.bf16.mxu0 0
    %2233 = vmatpush1.bf16.msra.mxu0 0
    %2234 = vmatprep.subr.bf16.mxu0 0
    %2235 = vmatpush1.bf16.msra.mxu0 0
    %2236 = vmatprep.subr.bf16.mxu0 0
    %2237 = vmatpush1.bf16.msra.mxu0 0
    %2238 = vmatprep.subr.bf16.mxu0 0
    %2239 = vmatpush1.bf16.msra.mxu0 0
    %2240 = vmatprep.subr.bf16.mxu0 0
    %2241 = vmatpush1.bf16.msra.mxu0 0
    %2242 = vmatprep.subr.bf16.mxu0 0
    %2243 = vmatpush1.bf16.msra.mxu0 0
    %2244 = vmatprep.subr.bf16.mxu0 0
    %2245 = vmatpush1.bf16.msra.mxu0 0
    %2246 = vmatprep.subr.bf16.mxu0 0
    %2247 = vmatpush1.bf16.msra.mxu0 0
    %2248 = vmatprep.mubr.bf16.mxu0 0
    %2249 = vmatmul.mubr.bf16.gmra.mrb[0].mxu0 %v1977
    %v2250 = vpop.f32.mrb[0].mxu0
    %v2251 = vadd.f32 0.0, %v2250
    %v2252 = vpop.f32.mrb[0].mxu0
    %v2253 = vadd.f32 0.0, %v2252
    %v2254 = vpop.f32.mrb[0].mxu0
    %v2255 = vpop.f32.mrb[0].mxu0
    %2256 = vdwg.mxu0
    %v2257 = vadd.f32 %v1979, %v2210
    %v2258 = vadd.f32 %v1980, %v2212
    %v2259 = vadd.f32 %v1981, %v2251
    %v2260 = vadd.f32 %v1982, %v2253
    %v2261 = vxor.u32 %v2257, 2147483648
    %v2262 = vmul.f32 %v2261, 1.442695
    %v2263 = vpow.pop %v2262
    %v2264 = vadd.f32 %v2263, 1.0
    %v2265 = vrcp.pop %v2264
    %v2266 = vmul.f32 1.0, %v2265
    %v2267 = vxor.u32 %v2258, 2147483648
    %v2268 = vmul.f32 %v2267, 1.442695
    %v2269 = vpow.pop %v2268
    %v2270 = vadd.f32 %v2269, 1.0
    %v2271 = vrcp.pop %v2270
    %v2272 = vmul.f32 1.0, %v2271
    %v2273 = vtanh.pop %v2259
    %v2274 = vxor.u32 %v2260, 2147483648
    %v2275 = vmul.f32 %v2274, 1.442695
    %v2276 = vpow.pop %v2275
    %v2277 = vadd.f32 %v2276, 1.0
    %v2278 = vrcp.pop %v2277
    %v2279 = vmul.f32 1.0, %v2278
    %v2280 = vmul.f32 %v2272, %v1974
    %v2281 = vmul.f32 %v2266, %v2273
    %v2282 = vadd.f32 %v2280, %v2281
    %v2283 = vtanh.pop %v2282
    %v2284 = vmul.f32 %v2279, %v2283
    %v2285 = vpack.c.bf16 %v2284, %v2284
    %v2287 = vrot.slane %v2285, 4
    %2289 = vst [vmem:[#allocation3 + $0x10] sm:$0xf0] %v2287
    %v2290 = vld [vmem:[#allocation2 + $0xc0] sm:$0xff]
    %v2291 = vld [vmem:[#allocation2 + $0xc8] sm:$0xff]
    %v2292 = vld [vmem:[#allocation2 + $0xd0] sm:$0xff]
    %v2293 = vld [vmem:[#allocation2 + $0xd8] sm:$0xff]
    %v2294 = vld [vmem:[#allocation8] sm:$0xff]
    %v2295 = vld [vmem:[#allocation8 + $0x8] sm:$0xff]
    %v2296 = vld [vmem:[#allocation8 + $0x10] sm:$0xff]
    %v2297 = vld [vmem:[#allocation8 + $0x18] sm:$0xff]
    %v2298 = vld [vmem:[#allocation8 + $0x20] sm:$0xff]
    %v2299 = vld [vmem:[#allocation8 + $0x28] sm:$0xff]
    %v2300 = vld [vmem:[#allocation8 + $0x30] sm:$0xff]
    %v2301 = vld [vmem:[#allocation8 + $0x38] sm:$0xff]
    %v2302 = vld [vmem:[#allocation8 + $0x40] sm:$0xff]
    %v2303 = vld [vmem:[#allocation8 + $0x48] sm:$0xff]
    %v2304 = vld [vmem:[#allocation8 + $0x50] sm:$0xff]
    %v2305 = vld [vmem:[#allocation8 + $0x58] sm:$0xff]
    %v2306 = vld [vmem:[#allocation8 + $0x60] sm:$0xff]
    %v2307 = vld [vmem:[#allocation8 + $0x68] sm:$0xff]
    %v2308 = vld [vmem:[#allocation8 + $0x70] sm:$0xff]
    %v2309 = vld [vmem:[#allocation8 + $0x78] sm:$0xff]
    %v2310 = vld [vmem:[#allocation8 + $0x80] sm:$0xff]
    %v2311 = vld [vmem:[#allocation8 + $0x88] sm:$0xff]
    %v2312 = vld [vmem:[#allocation8 + $0x90] sm:$0xff]
    %v2313 = vld [vmem:[#allocation8 + $0x98] sm:$0xff]
    %v2314 = vld [vmem:[#allocation8 + $0xa0] sm:$0xff]
    %v2315 = vld [vmem:[#allocation8 + $0xa8] sm:$0xff]
    %v2316 = vld [vmem:[#allocation8 + $0xb0] sm:$0xff]
    %v2317 = vld [vmem:[#allocation8 + $0xb8] sm:$0xff]
    %v2318 = vld [vmem:[#allocation8 + $0xc0] sm:$0xff]
    %v2319 = vld [vmem:[#allocation8 + $0xc8] sm:$0xff]
    %v2320 = vld [vmem:[#allocation8 + $0xd0] sm:$0xff]
    %v2321 = vld [vmem:[#allocation8 + $0xd8] sm:$0xff]
    %v2322 = vld [vmem:[#allocation8 + $0xe0] sm:$0xff]
    %v2323 = vld [vmem:[#allocation8 + $0xe8] sm:$0xff]
    %v2324 = vld [vmem:[#allocation8 + $0xf0] sm:$0xff]
    %v2325 = vld [vmem:[#allocation8 + $0xf8] sm:$0xff]
    %v2358 = vunpack.c.l.b16 %v2294
    %v2359 = vunpack.c.h.b16 %v2294
    %v2360 = vunpack.c.l.b16 %v2295
    %v2361 = vunpack.c.h.b16 %v2295
    %v2362 = vunpack.c.l.b16 %v2296
    %v2363 = vunpack.c.h.b16 %v2296
    %v2364 = vunpack.c.l.b16 %v2297
    %v2365 = vunpack.c.h.b16 %v2297
    %v2366 = vunpack.c.l.b16 %v2298
    %v2367 = vunpack.c.h.b16 %v2298
    %v2368 = vunpack.c.l.b16 %v2299
    %v2369 = vunpack.c.h.b16 %v2299
    %v2370 = vunpack.c.l.b16 %v2300
    %v2371 = vunpack.c.h.b16 %v2300
    %v2372 = vunpack.c.l.b16 %v2301
    %v2373 = vunpack.c.h.b16 %v2301
    %v2374 = vunpack.c.l.b16 %v2302
    %v2375 = vunpack.c.h.b16 %v2302
    %v2376 = vunpack.c.l.b16 %v2303
    %v2377 = vunpack.c.h.b16 %v2303
    %v2378 = vunpack.c.l.b16 %v2304
    %v2379 = vunpack.c.h.b16 %v2304
    %v2380 = vunpack.c.l.b16 %v2305
    %v2381 = vunpack.c.h.b16 %v2305
    %v2382 = vunpack.c.l.b16 %v2306
    %v2383 = vunpack.c.h.b16 %v2306
    %v2384 = vunpack.c.l.b16 %v2307
    %v2385 = vunpack.c.h.b16 %v2307
    %v2386 = vunpack.c.l.b16 %v2308
    %v2387 = vunpack.c.h.b16 %v2308
    %v2388 = vunpack.c.l.b16 %v2309
    %v2389 = vunpack.c.h.b16 %v2309
    %v2390 = vunpack.c.l.b16 %v2310
    %v2391 = vunpack.c.h.b16 %v2310
    %v2392 = vunpack.c.l.b16 %v2311
    %v2393 = vunpack.c.h.b16 %v2311
    %v2394 = vunpack.c.l.b16 %v2312
    %v2395 = vunpack.c.h.b16 %v2312
    %v2396 = vunpack.c.l.b16 %v2313
    %v2397 = vunpack.c.h.b16 %v2313
    %v2398 = vunpack.c.l.b16 %v2314
    %v2399 = vunpack.c.h.b16 %v2314
    %v2400 = vunpack.c.l.b16 %v2315
    %v2401 = vunpack.c.h.b16 %v2315
    %v2402 = vunpack.c.l.b16 %v2316
    %v2403 = vunpack.c.h.b16 %v2316
    %v2404 = vunpack.c.l.b16 %v2317
    %v2405 = vunpack.c.h.b16 %v2317
    %v2406 = vunpack.c.l.b16 %v2318
    %v2407 = vunpack.c.h.b16 %v2318
    %v2408 = vunpack.c.l.b16 %v2319
    %v2409 = vunpack.c.h.b16 %v2319
    %v2410 = vunpack.c.l.b16 %v2320
    %v2411 = vunpack.c.h.b16 %v2320
    %v2412 = vunpack.c.l.b16 %v2321
    %v2413 = vunpack.c.h.b16 %v2321
    %v2414 = vunpack.c.l.b16 %v2322
    %v2415 = vunpack.c.h.b16 %v2322
    %v2416 = vunpack.c.l.b16 %v2323
    %v2417 = vunpack.c.h.b16 %v2323
    %v2418 = vunpack.c.l.b16 %v2324
    %v2419 = vunpack.c.h.b16 %v2324
    %v2420 = vunpack.c.l.b16 %v2325
    %v2421 = vunpack.c.h.b16 %v2325
    %v2422 = vpack.c.b16 %v2362, %v2358
    %v2423 = vpack.c.b16 %v2363, %v2359
    %v2424 = vpack.c.b16 %v2364, %v2360
    %v2425 = vpack.c.b16 %v2365, %v2361
    %v2426 = vpack.c.b16 %v2370, %v2366
    %v2427 = vpack.c.b16 %v2371, %v2367
    %v2428 = vpack.c.b16 %v2372, %v2368
    %v2429 = vpack.c.b16 %v2373, %v2369
    %v2430 = vpack.c.b16 %v2378, %v2374
    %v2431 = vpack.c.b16 %v2379, %v2375
    %v2432 = vpack.c.b16 %v2380, %v2376
    %v2433 = vpack.c.b16 %v2381, %v2377
    %v2434 = vpack.c.b16 %v2386, %v2382
    %v2435 = vpack.c.b16 %v2387, %v2383
    %v2436 = vpack.c.b16 %v2388, %v2384
    %v2437 = vpack.c.b16 %v2389, %v2385
    %v2438 = vpack.c.b16 %v2394, %v2390
    %v2439 = vpack.c.b16 %v2395, %v2391
    %v2440 = vpack.c.b16 %v2396, %v2392
    %v2441 = vpack.c.b16 %v2397, %v2393
    %v2442 = vpack.c.b16 %v2402, %v2398
    %v2443 = vpack.c.b16 %v2403, %v2399
    %v2444 = vpack.c.b16 %v2404, %v2400
    %v2445 = vpack.c.b16 %v2405, %v2401
    %v2446 = vpack.c.b16 %v2410, %v2406
    %v2447 = vpack.c.b16 %v2411, %v2407
    %v2448 = vpack.c.b16 %v2412, %v2408
    %v2449 = vpack.c.b16 %v2413, %v2409
    %v2450 = vpack.c.b16 %v2418, %v2414
    %v2451 = vpack.c.b16 %v2419, %v2415
    %v2452 = vpack.c.b16 %v2420, %v2416
    %v2453 = vpack.c.b16 %v2421, %v2417
    %2486 = vmatprep.subr.bf16.mxu0 %v2423
    %2487 = vmatpush1.bf16.msra.mxu0 %v2422
    %2488 = vmatprep.subr.bf16.mxu0 %v2427
    %2489 = vmatpush1.bf16.msra.mxu0 %v2426
    %2490 = vmatprep.subr.bf16.mxu0 %v2431
    %2491 = vmatpush1.bf16.msra.mxu0 %v2430
    %2492 = vmatprep.subr.bf16.mxu0 %v2435
    %2493 = vmatpush1.bf16.msra.mxu0 %v2434
    %2494 = vmatprep.subr.bf16.mxu0 %v2439
    %2495 = vmatpush1.bf16.msra.mxu0 %v2438
    %2496 = vmatprep.subr.bf16.mxu0 %v2443
    %2497 = vmatpush1.bf16.msra.mxu0 %v2442
    %2498 = vmatprep.subr.bf16.mxu0 %v2447
    %2499 = vmatpush1.bf16.msra.mxu0 %v2446
    %2500 = vmatprep.subr.bf16.mxu0 %v2451
    %2501 = vmatpush1.bf16.msra.mxu0 %v2450
    %2502 = vmatprep.subr.bf16.mxu0 0
    %2503 = vmatpush1.bf16.msra.mxu0 0
    %2504 = vmatprep.subr.bf16.mxu0 0
    %2505 = vmatpush1.bf16.msra.mxu0 0
    %2506 = vmatprep.subr.bf16.mxu0 0
    %2507 = vmatpush1.bf16.msra.mxu0 0
    %2508 = vmatprep.subr.bf16.mxu0 0
    %2509 = vmatpush1.bf16.msra.mxu0 0
    %2510 = vmatprep.subr.bf16.mxu0 0
    %2511 = vmatpush1.bf16.msra.mxu0 0
    %2512 = vmatprep.subr.bf16.mxu0 0
    %2513 = vmatpush1.bf16.msra.mxu0 0
    %2514 = vmatprep.subr.bf16.mxu0 0
    %2515 = vmatpush1.bf16.msra.mxu0 0
    %2516 = vmatprep.subr.bf16.mxu0 0
    %2517 = vmatpush1.bf16.msra.mxu0 0
    %2518 = vmatprep.mubr.bf16.mxu0 0
    %2519 = vmatmul.mubr.bf16.gmra.mrb[0].mxu0 %v2285
    %v2520 = vpop.f32.mrb[0].mxu0
    %v2521 = vadd.f32 0.0, %v2520
    %v2522 = vpop.f32.mrb[0].mxu0
    %v2523 = vadd.f32 0.0, %v2522
    %v2524 = vpop.f32.mrb[0].mxu0
    %v2525 = vpop.f32.mrb[0].mxu0
    %2526 = vdwg.mxu0
    %2527 = vmatprep.subr.bf16.mxu0 %v2425
    %2528 = vmatpush1.bf16.msra.mxu0 %v2424
    %2529 = vmatprep.subr.bf16.mxu0 %v2429
    %2530 = vmatpush1.bf16.msra.mxu0 %v2428
    %2531 = vmatprep.subr.bf16.mxu0 %v2433
    %2532 = vmatpush1.bf16.msra.mxu0 %v2432
    %2533 = vmatprep.subr.bf16.mxu0 %v2437
    %2534 = vmatpush1.bf16.msra.mxu0 %v2436
    %2535 = vmatprep.subr.bf16.mxu0 %v2441
    %2536 = vmatpush1.bf16.msra.mxu0 %v2440
    %2537 = vmatprep.subr.bf16.mxu0 %v2445
    %2538 = vmatpush1.bf16.msra.mxu0 %v2444
    %2539 = vmatprep.subr.bf16.mxu0 %v2449
    %2540 = vmatpush1.bf16.msra.mxu0 %v2448
    %2541 = vmatprep.subr.bf16.mxu0 %v2453
    %2542 = vmatpush1.bf16.msra.mxu0 %v2452
    %2543 = vmatprep.subr.bf16.mxu0 0
    %2544 = vmatpush1.bf16.msra.mxu0 0
    %2545 = vmatprep.subr.bf16.mxu0 0
    %2546 = vmatpush1.bf16.msra.mxu0 0
    %2547 = vmatprep.subr.bf16.mxu0 0
    %2548 = vmatpush1.bf16.msra.mxu0 0
    %2549 = vmatprep.subr.bf16.mxu0 0
    %2550 = vmatpush1.bf16.msra.mxu0 0
    %2551 = vmatprep.subr.bf16.mxu0 0
    %2552 = vmatpush1.bf16.msra.mxu0 0
    %2553 = vmatprep.subr.bf16.mxu0 0
    %2554 = vmatpush1.bf16.msra.mxu0 0
    %2555 = vmatprep.subr.bf16.mxu0 0
    %2556 = vmatpush1.bf16.msra.mxu0 0
    %2557 = vmatprep.subr.bf16.mxu0 0
    %2558 = vmatpush1.bf16.msra.mxu0 0
    %2559 = vmatprep.mubr.bf16.mxu0 0
    %2560 = vmatmul.mubr.bf16.gmra.mrb[0].mxu0 %v2285
    %v2561 = vpop.f32.mrb[0].mxu0
    %v2562 = vadd.f32 0.0, %v2561
    %v2563 = vpop.f32.mrb[0].mxu0
    %v2564 = vadd.f32 0.0, %v2563
    %v2565 = vpop.f32.mrb[0].mxu0
    %v2566 = vpop.f32.mrb[0].mxu0
    %2567 = vdwg.mxu0
    %v2568 = vadd.f32 %v2290, %v2521
    %v2569 = vadd.f32 %v2291, %v2523
    %v2570 = vadd.f32 %v2292, %v2562
    %v2571 = vadd.f32 %v2293, %v2564
    %v2572 = vxor.u32 %v2568, 2147483648
    %v2573 = vmul.f32 %v2572, 1.442695
    %v2574 = vpow.pop %v2573
    %v2575 = vadd.f32 %v2574, 1.0
    %v2576 = vrcp.pop %v2575
    %v2577 = vmul.f32 1.0, %v2576
    %v2578 = vxor.u32 %v2569, 2147483648
    %v2579 = vmul.f32 %v2578, 1.442695
    %v2580 = vpow.pop %v2579
    %v2581 = vadd.f32 %v2580, 1.0
    %v2582 = vrcp.pop %v2581
    %v2583 = vmul.f32 1.0, %v2582
    %v2584 = vtanh.pop %v2570
    %v2585 = vxor.u32 %v2571, 2147483648
    %v2586 = vmul.f32 %v2585, 1.442695
    %v2587 = vpow.pop %v2586
    %v2588 = vadd.f32 %v2587, 1.0
    %v2589 = vrcp.pop %v2588
    %v2590 = vmul.f32 1.0, %v2589
    %v2591 = vmul.f32 %v2583, %v2282
    %v2592 = vmul.f32 %v2577, %v2584
    %v2593 = vadd.f32 %v2591, %v2592
    %v2594 = vtanh.pop %v2593
    %v2595 = vmul.f32 %v2590, %v2594
    %v2596 = vpack.c.bf16 %v2595, %v2595
    %2597 = vst [vmem:[#allocation3 + $0x18] sm:$0xf] %v2596
    %v2598 = vld [vmem:[#allocation2 + $0xe0] sm:$0xff]
    %v2599 = vld [vmem:[#allocation2 + $0xe8] sm:$0xff]
    %v2600 = vld [vmem:[#allocation2 + $0xf0] sm:$0xff]
    %v2601 = vld [vmem:[#allocation2 + $0xf8] sm:$0xff]
    %v2602 = vld [vmem:[#allocation8] sm:$0xff]
    %v2603 = vld [vmem:[#allocation8 + $0x8] sm:$0xff]
    %v2604 = vld [vmem:[#allocation8 + $0x10] sm:$0xff]
    %v2605 = vld [vmem:[#allocation8 + $0x18] sm:$0xff]
    %v2606 = vld [vmem:[#allocation8 + $0x20] sm:$0xff]
    %v2607 = vld [vmem:[#allocation8 + $0x28] sm:$0xff]
    %v2608 = vld [vmem:[#allocation8 + $0x30] sm:$0xff]
    %v2609 = vld [vmem:[#allocation8 + $0x38] sm:$0xff]
    %v2610 = vld [vmem:[#allocation8 + $0x40] sm:$0xff]
    %v2611 = vld [vmem:[#allocation8 + $0x48] sm:$0xff]
    %v2612 = vld [vmem:[#allocation8 + $0x50] sm:$0xff]
    %v2613 = vld [vmem:[#allocation8 + $0x58] sm:$0xff]
    %v2614 = vld [vmem:[#allocation8 + $0x60] sm:$0xff]
    %v2615 = vld [vmem:[#allocation8 + $0x68] sm:$0xff]
    %v2616 = vld [vmem:[#allocation8 + $0x70] sm:$0xff]
    %v2617 = vld [vmem:[#allocation8 + $0x78] sm:$0xff]
    %v2618 = vld [vmem:[#allocation8 + $0x80] sm:$0xff]
    %v2619 = vld [vmem:[#allocation8 + $0x88] sm:$0xff]
    %v2620 = vld [vmem:[#allocation8 + $0x90] sm:$0xff]
    %v2621 = vld [vmem:[#allocation8 + $0x98] sm:$0xff]
    %v2622 = vld [vmem:[#allocation8 + $0xa0] sm:$0xff]
    %v2623 = vld [vmem:[#allocation8 + $0xa8] sm:$0xff]
    %v2624 = vld [vmem:[#allocation8 + $0xb0] sm:$0xff]
    %v2625 = vld [vmem:[#allocation8 + $0xb8] sm:$0xff]
    %v2626 = vld [vmem:[#allocation8 + $0xc0] sm:$0xff]
    %v2627 = vld [vmem:[#allocation8 + $0xc8] sm:$0xff]
    %v2628 = vld [vmem:[#allocation8 + $0xd0] sm:$0xff]
    %v2629 = vld [vmem:[#allocation8 + $0xd8] sm:$0xff]
    %v2630 = vld [vmem:[#allocation8 + $0xe0] sm:$0xff]
    %v2631 = vld [vmem:[#allocation8 + $0xe8] sm:$0xff]
    %v2632 = vld [vmem:[#allocation8 + $0xf0] sm:$0xff]
    %v2633 = vld [vmem:[#allocation8 + $0xf8] sm:$0xff]
    %v2666 = vunpack.c.l.b16 %v2602
    %v2667 = vunpack.c.h.b16 %v2602
    %v2668 = vunpack.c.l.b16 %v2603
    %v2669 = vunpack.c.h.b16 %v2603
    %v2670 = vunpack.c.l.b16 %v2604
    %v2671 = vunpack.c.h.b16 %v2604
    %v2672 = vunpack.c.l.b16 %v2605
    %v2673 = vunpack.c.h.b16 %v2605
    %v2674 = vunpack.c.l.b16 %v2606
    %v2675 = vunpack.c.h.b16 %v2606
    %v2676 = vunpack.c.l.b16 %v2607
    %v2677 = vunpack.c.h.b16 %v2607
    %v2678 = vunpack.c.l.b16 %v2608
    %v2679 = vunpack.c.h.b16 %v2608
    %v2680 = vunpack.c.l.b16 %v2609
    %v2681 = vunpack.c.h.b16 %v2609
    %v2682 = vunpack.c.l.b16 %v2610
    %v2683 = vunpack.c.h.b16 %v2610
    %v2684 = vunpack.c.l.b16 %v2611
    %v2685 = vunpack.c.h.b16 %v2611
    %v2686 = vunpack.c.l.b16 %v2612
    %v2687 = vunpack.c.h.b16 %v2612
    %v2688 = vunpack.c.l.b16 %v2613
    %v2689 = vunpack.c.h.b16 %v2613
    %v2690 = vunpack.c.l.b16 %v2614
    %v2691 = vunpack.c.h.b16 %v2614
    %v2692 = vunpack.c.l.b16 %v2615
    %v2693 = vunpack.c.h.b16 %v2615
    %v2694 = vunpack.c.l.b16 %v2616
    %v2695 = vunpack.c.h.b16 %v2616
    %v2696 = vunpack.c.l.b16 %v2617
    %v2697 = vunpack.c.h.b16 %v2617
    %v2698 = vunpack.c.l.b16 %v2618
    %v2699 = vunpack.c.h.b16 %v2618
    %v2700 = vunpack.c.l.b16 %v2619
    %v2701 = vunpack.c.h.b16 %v2619
    %v2702 = vunpack.c.l.b16 %v2620
    %v2703 = vunpack.c.h.b16 %v2620
    %v2704 = vunpack.c.l.b16 %v2621
    %v2705 = vunpack.c.h.b16 %v2621
    %v2706 = vunpack.c.l.b16 %v2622
    %v2707 = vunpack.c.h.b16 %v2622
    %v2708 = vunpack.c.l.b16 %v2623
    %v2709 = vunpack.c.h.b16 %v2623
    %v2710 = vunpack.c.l.b16 %v2624
    %v2711 = vunpack.c.h.b16 %v2624
    %v2712 = vunpack.c.l.b16 %v2625
    %v2713 = vunpack.c.h.b16 %v2625
    %v2714 = vunpack.c.l.b16 %v2626
    %v2715 = vunpack.c.h.b16 %v2626
    %v2716 = vunpack.c.l.b16 %v2627
    %v2717 = vunpack.c.h.b16 %v2627
    %v2718 = vunpack.c.l.b16 %v2628
    %v2719 = vunpack.c.h.b16 %v2628
    %v2720 = vunpack.c.l.b16 %v2629
    %v2721 = vunpack.c.h.b16 %v2629
    %v2722 = vunpack.c.l.b16 %v2630
    %v2723 = vunpack.c.h.b16 %v2630
    %v2724 = vunpack.c.l.b16 %v2631
    %v2725 = vunpack.c.h.b16 %v2631
    %v2726 = vunpack.c.l.b16 %v2632
    %v2727 = vunpack.c.h.b16 %v2632
    %v2728 = vunpack.c.l.b16 %v2633
    %v2729 = vunpack.c.h.b16 %v2633
    %v2730 = vpack.c.b16 %v2670, %v2666
    %v2731 = vpack.c.b16 %v2671, %v2667
    %v2732 = vpack.c.b16 %v2672, %v2668
    %v2733 = vpack.c.b16 %v2673, %v2669
    %v2734 = vpack.c.b16 %v2678, %v2674
    %v2735 = vpack.c.b16 %v2679, %v2675
    %v2736 = vpack.c.b16 %v2680, %v2676
    %v2737 = vpack.c.b16 %v2681, %v2677
    %v2738 = vpack.c.b16 %v2686, %v2682
    %v2739 = vpack.c.b16 %v2687, %v2683
    %v2740 = vpack.c.b16 %v2688, %v2684
    %v2741 = vpack.c.b16 %v2689, %v2685
    %v2742 = vpack.c.b16 %v2694, %v2690
    %v2743 = vpack.c.b16 %v2695, %v2691
    %v2744 = vpack.c.b16 %v2696, %v2692
    %v2745 = vpack.c.b16 %v2697, %v2693
    %v2746 = vpack.c.b16 %v2702, %v2698
    %v2747 = vpack.c.b16 %v2703, %v2699
    %v2748 = vpack.c.b16 %v2704, %v2700
    %v2749 = vpack.c.b16 %v2705, %v2701
    %v2750 = vpack.c.b16 %v2710, %v2706
    %v2751 = vpack.c.b16 %v2711, %v2707
    %v2752 = vpack.c.b16 %v2712, %v2708
    %v2753 = vpack.c.b16 %v2713, %v2709
    %v2754 = vpack.c.b16 %v2718, %v2714
    %v2755 = vpack.c.b16 %v2719, %v2715
    %v2756 = vpack.c.b16 %v2720, %v2716
    %v2757 = vpack.c.b16 %v2721, %v2717
    %v2758 = vpack.c.b16 %v2726, %v2722
    %v2759 = vpack.c.b16 %v2727, %v2723
    %v2760 = vpack.c.b16 %v2728, %v2724
    %v2761 = vpack.c.b16 %v2729, %v2725
    %2794 = vmatprep.subr.bf16.mxu0 %v2731
    %2795 = vmatpush1.bf16.msra.mxu0 %v2730
    %2796 = vmatprep.subr.bf16.mxu0 %v2735
    %2797 = vmatpush1.bf16.msra.mxu0 %v2734
    %2798 = vmatprep.subr.bf16.mxu0 %v2739
    %2799 = vmatpush1.bf16.msra.mxu0 %v2738
    %2800 = vmatprep.subr.bf16.mxu0 %v2743
    %2801 = vmatpush1.bf16.msra.mxu0 %v2742
    %2802 = vmatprep.subr.bf16.mxu0 %v2747
    %2803 = vmatpush1.bf16.msra.mxu0 %v2746
    %2804 = vmatprep.subr.bf16.mxu0 %v2751
    %2805 = vmatpush1.bf16.msra.mxu0 %v2750
    %2806 = vmatprep.subr.bf16.mxu0 %v2755
    %2807 = vmatpush1.bf16.msra.mxu0 %v2754
    %2808 = vmatprep.subr.bf16.mxu0 %v2759
    %2809 = vmatpush1.bf16.msra.mxu0 %v2758
    %2810 = vmatprep.subr.bf16.mxu0 0
    %2811 = vmatpush1.bf16.msra.mxu0 0
    %2812 = vmatprep.subr.bf16.mxu0 0
    %2813 = vmatpush1.bf16.msra.mxu0 0
    %2814 = vmatprep.subr.bf16.mxu0 0
    %2815 = vmatpush1.bf16.msra.mxu0 0
    %2816 = vmatprep.subr.bf16.mxu0 0
    %2817 = vmatpush1.bf16.msra.mxu0 0
    %2818 = vmatprep.subr.bf16.mxu0 0
    %2819 = vmatpush1.bf16.msra.mxu0 0
    %2820 = vmatprep.subr.bf16.mxu0 0
    %2821 = vmatpush1.bf16.msra.mxu0 0
    %2822 = vmatprep.subr.bf16.mxu0 0
    %2823 = vmatpush1.bf16.msra.mxu0 0
    %2824 = vmatprep.subr.bf16.mxu0 0
    %2825 = vmatpush1.bf16.msra.mxu0 0
    %2826 = vmatprep.mubr.bf16.mxu0 0
    %2827 = vmatmul.mubr.bf16.gmra.mrb[0].mxu0 %v2596
    %v2828 = vpop.f32.mrb[0].mxu0
    %v2829 = vadd.f32 0.0, %v2828
    %v2830 = vpop.f32.mrb[0].mxu0
    %v2831 = vadd.f32 0.0, %v2830
    %v2832 = vpop.f32.mrb[0].mxu0
    %v2833 = vpop.f32.mrb[0].mxu0
    %2834 = vdwg.mxu0
    %2835 = vmatprep.subr.bf16.mxu0 %v2733
    %2836 = vmatpush1.bf16.msra.mxu0 %v2732
    %2837 = vmatprep.subr.bf16.mxu0 %v2737
    %2838 = vmatpush1.bf16.msra.mxu0 %v2736
    %2839 = vmatprep.subr.bf16.mxu0 %v2741
    %2840 = vmatpush1.bf16.msra.mxu0 %v2740
    %2841 = vmatprep.subr.bf16.mxu0 %v2745
    %2842 = vmatpush1.bf16.msra.mxu0 %v2744
    %2843 = vmatprep.subr.bf16.mxu0 %v2749
    %2844 = vmatpush1.bf16.msra.mxu0 %v2748
    %2845 = vmatprep.subr.bf16.mxu0 %v2753
    %2846 = vmatpush1.bf16.msra.mxu0 %v2752
    %2847 = vmatprep.subr.bf16.mxu0 %v2757
    %2848 = vmatpush1.bf16.msra.mxu0 %v2756
    %2849 = vmatprep.subr.bf16.mxu0 %v2761
    %2850 = vmatpush1.bf16.msra.mxu0 %v2760
    %2851 = vmatprep.subr.bf16.mxu0 0
    %2852 = vmatpush1.bf16.msra.mxu0 0
    %2853 = vmatprep.subr.bf16.mxu0 0
    %2854 = vmatpush1.bf16.msra.mxu0 0
    %2855 = vmatprep.subr.bf16.mxu0 0
    %2856 = vmatpush1.bf16.msra.mxu0 0
    %2857 = vmatprep.subr.bf16.mxu0 0
    %2858 = vmatpush1.bf16.msra.mxu0 0
    %2859 = vmatprep.subr.bf16.mxu0 0
    %2860 = vmatpush1.bf16.msra.mxu0 0
    %2861 = vmatprep.subr.bf16.mxu0 0
    %2862 = vmatpush1.bf16.msra.mxu0 0
    %2863 = vmatprep.subr.bf16.mxu0 0
    %2864 = vmatpush1.bf16.msra.mxu0 0
    %2865 = vmatprep.subr.bf16.mxu0 0
    %2866 = vmatpush1.bf16.msra.mxu0 0
    %2867 = vmatprep.mubr.bf16.mxu0 0
    %2868 = vmatmul.mubr.bf16.gmra.mrb[0].mxu0 %v2596
    %v2869 = vpop.f32.mrb[0].mxu0
    %v2870 = vadd.f32 0.0, %v2869
    %v2871 = vpop.f32.mrb[0].mxu0
    %v2872 = vadd.f32 0.0, %v2871
    %v2873 = vpop.f32.mrb[0].mxu0
    %v2874 = vpop.f32.mrb[0].mxu0
    %2875 = vdwg.mxu0
    %v2876 = vadd.f32 %v2598, %v2829
    %v2877 = vadd.f32 %v2599, %v2831
    %v2878 = vadd.f32 %v2600, %v2870
    %v2879 = vadd.f32 %v2601, %v2872
    %v2880 = vxor.u32 %v2876, 2147483648
    %v2881 = vmul.f32 %v2880, 1.442695
    %v2882 = vpow.pop %v2881
    %v2883 = vadd.f32 %v2882, 1.0
    %v2884 = vrcp.pop %v2883
    %v2885 = vmul.f32 1.0, %v2884
    %v2886 = vxor.u32 %v2877, 2147483648
    %v2887 = vmul.f32 %v2886, 1.442695
    %v2888 = vpow.pop %v2887
    %v2889 = vadd.f32 %v2888, 1.0
    %v2890 = vrcp.pop %v2889
    %v2891 = vmul.f32 1.0, %v2890
    %v2892 = vtanh.pop %v2878
    %v2893 = vxor.u32 %v2879, 2147483648
    %v2894 = vmul.f32 %v2893, 1.442695
    %v2895 = vpow.pop %v2894
    %v2896 = vadd.f32 %v2895, 1.0
    %v2897 = vrcp.pop %v2896
    %v2898 = vmul.f32 1.0, %v2897
    %v2899 = vmul.f32 %v2891, %v2593
    %v2900 = vmul.f32 %v2885, %v2892
    %v2901 = vadd.f32 %v2899, %v2900
    %v2902 = vtanh.pop %v2901
    %v2903 = vmul.f32 %v2898, %v2902
    %v2904 = vpack.c.bf16 %v2903, %v2903
    %v2906 = vrot.slane %v2904, 4
    %2908 = vst [vmem:[#allocation3 + $0x18] sm:$0xf0] %v2906
    %s2909 = smul.u32 4, 16
    %s2910 = smul.u32 %s2909, 4
    %s2911 = sshll.u32 %s2910, 4
    %2912 = dma.done [#allocation7], %s2911
    %s2913 = sshll.u32 %s2910, 4
    %2914 = dma.done %s76, %s2913
    %v2915 = vld [vmem:[#allocation3] sm:$0xff]
    %v2916 = vld [vmem:[#allocation3 + $0x8] sm:$0xff]
    %v2917 = vld [vmem:[#allocation3 + $0x10] sm:$0xff]
    %v2918 = vld [vmem:[#allocation3 + $0x18] sm:$0xff]
    %v2919 = vld [vmem:[#allocation4] sm:$0xff]
    %v2920 = vld [vmem:[#allocation4 + $0x8] sm:$0xff]
    %v2921 = vld [vmem:[#allocation4 + $0x10] sm:$0xff]
    %v2922 = vld [vmem:[#allocation4 + $0x18] sm:$0xff]
    %v2923 = vld [vmem:[#allocation4 + $0x20] sm:$0xff]
    %v2924 = vld [vmem:[#allocation4 + $0x28] sm:$0xff]
    %v2925 = vld [vmem:[#allocation4 + $0x30] sm:$0xff]
    %v2926 = vld [vmem:[#allocation4 + $0x38] sm:$0xff]
    %v2927 = vld [vmem:[#allocation4 + $0x40] sm:$0xff]
    %v2928 = vld [vmem:[#allocation4 + $0x48] sm:$0xff]
    %v2929 = vld [vmem:[#allocation4 + $0x50] sm:$0xff]
    %v2930 = vld [vmem:[#allocation4 + $0x58] sm:$0xff]
    %v2931 = vld [vmem:[#allocation4 + $0x60] sm:$0xff]
    %v2932 = vld [vmem:[#allocation4 + $0x68] sm:$0xff]
    %v2933 = vld [vmem:[#allocation4 + $0x70] sm:$0xff]
    %v2934 = vld [vmem:[#allocation4 + $0x78] sm:$0xff]
    %v2935 = vld [vmem:[#allocation4 + $0x80] sm:$0xff]
    %v2936 = vld [vmem:[#allocation4 + $0x88] sm:$0xff]
    %v2937 = vld [vmem:[#allocation4 + $0x90] sm:$0xff]
    %v2938 = vld [vmem:[#allocation4 + $0x98] sm:$0xff]
    %v2939 = vld [vmem:[#allocation4 + $0xa0] sm:$0xff]
    %v2940 = vld [vmem:[#allocation4 + $0xa8] sm:$0xff]
    %v2941 = vld [vmem:[#allocation4 + $0xb0] sm:$0xff]
    %v2942 = vld [vmem:[#allocation4 + $0xb8] sm:$0xff]
    %v2943 = vld [vmem:[#allocation4 + $0xc0] sm:$0xff]
    %v2944 = vld [vmem:[#allocation4 + $0xc8] sm:$0xff]
    %v2945 = vld [vmem:[#allocation4 + $0xd0] sm:$0xff]
    %v2946 = vld [vmem:[#allocation4 + $0xd8] sm:$0xff]
    %v2947 = vld [vmem:[#allocation4 + $0xe0] sm:$0xff]
    %v2948 = vld [vmem:[#allocation4 + $0xe8] sm:$0xff]
    %v2949 = vld [vmem:[#allocation4 + $0xf0] sm:$0xff]
    %v2950 = vld [vmem:[#allocation4 + $0xf8] sm:$0xff]
    %v2951 = vld [vmem:[%s6] sm:$0xf]
    %v2953 = vlaneseq
    %v2954 = vshrl.u32 %v2953, 7
    %v2955 = vsub.s32 0, %v2954
    %v2956 = vrot.slane %v2951, %v2955
    %v2957 = vlaneseq
    %v2958 = vshrl.u32 %v2957, 7
    %v2959 = vsub.s32 1, %v2958
    %v2960 = vrot.slane %v2951, %v2959
    %v2961 = vlaneseq
    %v2962 = vshrl.u32 %v2961, 7
    %v2963 = vsub.s32 2, %v2962
    %v2964 = vrot.slane %v2951, %v2963
    %v2965 = vlaneseq
    %v2966 = vshrl.u32 %v2965, 7
    %v2967 = vsub.s32 3, %v2966
    %v2968 = vrot.slane %v2951, %v2967
    %2973 = vmatprep.subr.bf16.mxu0 %v2920
    %2974 = vmatpush1.bf16.msra.mxu0 %v2919
    %2975 = vmatprep.subr.bf16.mxu0 %v2924
    %2976 = vmatpush1.bf16.msra.mxu0 %v2923
    %2977 = vmatprep.subr.bf16.mxu0 %v2928
    %2978 = vmatpush1.bf16.msra.mxu0 %v2927
    %2979 = vmatprep.subr.bf16.mxu0 %v2932
    %2980 = vmatpush1.bf16.msra.mxu0 %v2931
    %2981 = vmatprep.subr.bf16.mxu0 %v2936
    %2982 = vmatpush1.bf16.msra.mxu0 %v2935
    %2983 = vmatprep.subr.bf16.mxu0 %v2940
    %2984 = vmatpush1.bf16.msra.mxu0 %v2939
    %2985 = vmatprep.subr.bf16.mxu0 %v2944
    %2986 = vmatpush1.bf16.msra.mxu0 %v2943
    %2987 = vmatprep.subr.bf16.mxu0 %v2948
    %2988 = vmatpush1.bf16.msra.mxu0 %v2947
    %2989 = vmatprep.subr.bf16.mxu0 0
    %2990 = vmatpush1.bf16.msra.mxu0 0
    %2991 = vmatprep.subr.bf16.mxu0 0
    %2992 = vmatpush1.bf16.msra.mxu0 0
    %2993 = vmatprep.subr.bf16.mxu0 0
    %2994 = vmatpush1.bf16.msra.mxu0 0
    %2995 = vmatprep.subr.bf16.mxu0 0
    %2996 = vmatpush1.bf16.msra.mxu0 0
    %2997 = vmatprep.subr.bf16.mxu0 0
    %2998 = vmatpush1.bf16.msra.mxu0 0
    %2999 = vmatprep.subr.bf16.mxu0 0
    %3000 = vmatpush1.bf16.msra.mxu0 0
    %3001 = vmatprep.subr.bf16.mxu0 0
    %3002 = vmatpush1.bf16.msra.mxu0 0
    %3003 = vmatprep.subr.bf16.mxu0 0
    %3004 = vmatpush1.bf16.msra.mxu0 0
    %3005 = vmatprep.mubr.bf16.mxu0 0
    %3006 = vmatmul.mubr.bf16.gmra.mrb[0].mxu0 %v2915
    %v3007 = vpop.f32.mrb[0].mxu0
    %v3008 = vadd.f32 %v2956, %v3007
    %v3009 = vpop.f32.mrb[0].mxu0
    %v3010 = vadd.f32 %v2960, %v3009
    %v3011 = vpop.f32.mrb[0].mxu0
    %v3012 = vadd.f32 %v2956, %v3011
    %v3013 = vpop.f32.mrb[0].mxu0
    %v3014 = vadd.f32 %v2960, %v3013
    %3015 = vmatprep.mubr.bf16.mxu0 0
    %3016 = vmatmul.mubr.bf16.gmra.mrb[0].mxu0 %v2916
    %v3017 = vpop.f32.mrb[0].mxu0
    %v3018 = vadd.f32 %v2956, %v3017
    %v3019 = vpop.f32.mrb[0].mxu0
    %v3020 = vadd.f32 %v2960, %v3019
    %v3021 = vpop.f32.mrb[0].mxu0
    %v3022 = vadd.f32 %v2956, %v3021
    %v3023 = vpop.f32.mrb[0].mxu0
    %v3024 = vadd.f32 %v2960, %v3023
    %3025 = vmatprep.mubr.bf16.mxu0 0
    %3026 = vmatmul.mubr.bf16.gmra.mrb[0].mxu0 %v2917
    %v3027 = vpop.f32.mrb[0].mxu0
    %v3028 = vadd.f32 %v2956, %v3027
    %v3029 = vpop.f32.mrb[0].mxu0
    %v3030 = vadd.f32 %v2960, %v3029
    %v3031 = vpop.f32.mrb[0].mxu0
    %v3032 = vadd.f32 %v2956, %v3031
    %v3033 = vpop.f32.mrb[0].mxu0
    %v3034 = vadd.f32 %v2960, %v3033
    %3035 = vmatprep.mubr.bf16.mxu0 0
    %3036 = vmatmul.mubr.bf16.gmra.mrb[0].mxu0 %v2918
    %v3037 = vpop.f32.mrb[0].mxu0
    %v3038 = vadd.f32 %v2956, %v3037
    %v3039 = vpop.f32.mrb[0].mxu0
    %v3040 = vadd.f32 %v2960, %v3039
    %v3041 = vpop.f32.mrb[0].mxu0
    %v3042 = vadd.f32 %v2956, %v3041
    %v3043 = vpop.f32.mrb[0].mxu0
    %v3044 = vadd.f32 %v2960, %v3043
    %3045 = vdwg.mxu0
    %3046 = vmatprep.subr.bf16.mxu0 %v2922
    %3047 = vmatpush1.bf16.msra.mxu0 %v2921
    %3048 = vmatprep.subr.bf16.mxu0 %v2926
    %3049 = vmatpush1.bf16.msra.mxu0 %v2925
    %3050 = vmatprep.subr.bf16.mxu0 %v2930
    %3051 = vmatpush1.bf16.msra.mxu0 %v2929
    %3052 = vmatprep.subr.bf16.mxu0 %v2934
    %3053 = vmatpush1.bf16.msra.mxu0 %v2933
    %3054 = vmatprep.subr.bf16.mxu0 %v2938
    %3055 = vmatpush1.bf16.msra.mxu0 %v2937
    %3056 = vmatprep.subr.bf16.mxu0 %v2942
    %3057 = vmatpush1.bf16.msra.mxu0 %v2941
    %3058 = vmatprep.subr.bf16.mxu0 %v2946
    %3059 = vmatpush1.bf16.msra.mxu0 %v2945
    %3060 = vmatprep.subr.bf16.mxu0 %v2950
    %3061 = vmatpush1.bf16.msra.mxu0 %v2949
    %3062 = vmatprep.subr.bf16.mxu0 0
    %3063 = vmatpush1.bf16.msra.mxu0 0
    %3064 = vmatprep.subr.bf16.mxu0 0
    %3065 = vmatpush1.bf16.msra.mxu0 0
    %3066 = vmatprep.subr.bf16.mxu0 0
    %3067 = vmatpush1.bf16.msra.mxu0 0
    %3068 = vmatprep.subr.bf16.mxu0 0
    %3069 = vmatpush1.bf16.msra.mxu0 0
    %3070 = vmatprep.subr.bf16.mxu0 0
    %3071 = vmatpush1.bf16.msra.mxu0 0
    %3072 = vmatprep.subr.bf16.mxu0 0
    %3073 = vmatpush1.bf16.msra.mxu0 0
    %3074 = vmatprep.subr.bf16.mxu0 0
    %3075 = vmatpush1.bf16.msra.mxu0 0
    %3076 = vmatprep.subr.bf16.mxu0 0
    %3077 = vmatpush1.bf16.msra.mxu0 0
    %3078 = vmatprep.mubr.bf16.mxu0 0
    %3079 = vmatmul.mubr.bf16.gmra.mrb[0].mxu0 %v2915
    %v3080 = vpop.f32.mrb[0].mxu0
    %v3081 = vadd.f32 %v2964, %v3080
    %v3082 = vpop.f32.mrb[0].mxu0
    %v3083 = vadd.f32 %v2968, %v3082
    %v3084 = vpop.f32.mrb[0].mxu0
    %v3085 = vadd.f32 %v2964, %v3084
    %v3086 = vpop.f32.mrb[0].mxu0
    %v3087 = vadd.f32 %v2968, %v3086
    %3088 = vmatprep.mubr.bf16.mxu0 0
    %3089 = vmatmul.mubr.bf16.gmra.mrb[0].mxu0 %v2916
    %v3090 = vpop.f32.mrb[0].mxu0
    %v3091 = vadd.f32 %v2964, %v3090
    %v3092 = vpop.f32.mrb[0].mxu0
    %v3093 = vadd.f32 %v2968, %v3092
    %v3094 = vpop.f32.mrb[0].mxu0
    %v3095 = vadd.f32 %v2964, %v3094
    %v3096 = vpop.f32.mrb[0].mxu0
    %v3097 = vadd.f32 %v2968, %v3096
    %3098 = vmatprep.mubr.bf16.mxu0 0
    %3099 = vmatmul.mubr.bf16.gmra.mrb[0].mxu0 %v2917
    %v3100 = vpop.f32.mrb[0].mxu0
    %v3101 = vadd.f32 %v2964, %v3100
    %v3102 = vpop.f32.mrb[0].mxu0
    %v3103 = vadd.f32 %v2968, %v3102
    %v3104 = vpop.f32.mrb[0].mxu0
    %v3105 = vadd.f32 %v2964, %v3104
    %v3106 = vpop.f32.mrb[0].mxu0
    %v3107 = vadd.f32 %v2968, %v3106
    %3108 = vmatprep.mubr.bf16.mxu0 0
    %3109 = vmatmul.mubr.bf16.gmra.mrb[0].mxu0 %v2918
    %v3110 = vpop.f32.mrb[0].mxu0
    %v3111 = vadd.f32 %v2964, %v3110
    %v3112 = vpop.f32.mrb[0].mxu0
    %v3113 = vadd.f32 %v2968, %v3112
    %v3114 = vpop.f32.mrb[0].mxu0
    %v3115 = vadd.f32 %v2964, %v3114
    %v3116 = vpop.f32.mrb[0].mxu0
    %v3117 = vadd.f32 %v2968, %v3116
    %3118 = vdwg.mxu0
    %3119 = vst [vmem:[#allocation2] sm:$0xff] %v3008
    %3120 = vst [vmem:[#allocation2 + $0x8] sm:$0xff] %v3010
    %3121 = vst [vmem:[#allocation2 + $0x10] sm:$0xff] %v3081
    %3122 = vst [vmem:[#allocation2 + $0x18] sm:$0xff] %v3083
    %3123 = vst [vmem:[#allocation2 + $0x20] sm:$0xff] %v3012
    %3124 = vst [vmem:[#allocation2 + $0x28] sm:$0xff] %v3014
    %3125 = vst [vmem:[#allocation2 + $0x30] sm:$0xff] %v3085
    %3126 = vst [vmem:[#allocation2 + $0x38] sm:$0xff] %v3087
    %3127 = vst [vmem:[#allocation2 + $0x40] sm:$0xff] %v3018
    %3128 = vst [vmem:[#allocation2 + $0x48] sm:$0xff] %v3020
    %3129 = vst [vmem:[#allocation2 + $0x50] sm:$0xff] %v3091
    %3130 = vst [vmem:[#allocation2 + $0x58] sm:$0xff] %v3093
    %3131 = vst [vmem:[#allocation2 + $0x60] sm:$0xff] %v3022
    %3132 = vst [vmem:[#allocation2 + $0x68] sm:$0xff] %v3024
    %3133 = vst [vmem:[#allocation2 + $0x70] sm:$0xff] %v3095
    %3134 = vst [vmem:[#allocation2 + $0x78] sm:$0xff] %v3097
    %3135 = vst [vmem:[#allocation2 + $0x80] sm:$0xff] %v3028
    %3136 = vst [vmem:[#allocation2 + $0x88] sm:$0xff] %v3030
    %3137 = vst [vmem:[#allocation2 + $0x90] sm:$0xff] %v3101
    %3138 = vst [vmem:[#allocation2 + $0x98] sm:$0xff] %v3103
    %3139 = vst [vmem:[#allocation2 + $0xa0] sm:$0xff] %v3032
    %3140 = vst [vmem:[#allocation2 + $0xa8] sm:$0xff] %v3034
    %3141 = vst [vmem:[#allocation2 + $0xb0] sm:$0xff] %v3105
    %3142 = vst [vmem:[#allocation2 + $0xb8] sm:$0xff] %v3107
    %3143 = vst [vmem:[#allocation2 + $0xc0] sm:$0xff] %v3038
    %3144 = vst [vmem:[#allocation2 + $0xc8] sm:$0xff] %v3040
    %3145 = vst [vmem:[#allocation2 + $0xd0] sm:$0xff] %v3111
    %3146 = vst [vmem:[#allocation2 + $0xd8] sm:$0xff] %v3113
    %3147 = vst [vmem:[#allocation2 + $0xe0] sm:$0xff] %v3042
    %3148 = vst [vmem:[#allocation2 + $0xe8] sm:$0xff] %v3044
    %3149 = vst [vmem:[#allocation2 + $0xf0] sm:$0xff] %v3115
    %3150 = vst [vmem:[#allocation2 + $0xf8] sm:$0xff] %v3117
    %v3151 = vld [vmem:[#allocation2] sm:$0xff]
    %v3152 = vld [vmem:[#allocation2 + $0x8] sm:$0xff]
    %v3153 = vld [vmem:[#allocation2 + $0x10] sm:$0xff]
    %v3154 = vld [vmem:[#allocation2 + $0x18] sm:$0xff]
    %v3155 = vld [vmem:[#allocation5] sm:$0xff]
    %v3156 = vld [vmem:[#allocation5 + $0x8] sm:$0xff]
    %v3157 = vld [vmem:[#allocation5 + $0x10] sm:$0xff]
    %v3158 = vld [vmem:[#allocation5 + $0x18] sm:$0xff]
    %v3159 = vld [vmem:[#allocation5 + $0x20] sm:$0xff]
    %v3160 = vld [vmem:[#allocation5 + $0x28] sm:$0xff]
    %v3161 = vld [vmem:[#allocation5 + $0x30] sm:$0xff]
    %v3162 = vld [vmem:[#allocation5 + $0x38] sm:$0xff]
    %v3163 = vld [vmem:[#allocation5 + $0x40] sm:$0xff]
    %v3164 = vld [vmem:[#allocation5 + $0x48] sm:$0xff]
    %v3165 = vld [vmem:[#allocation5 + $0x50] sm:$0xff]
    %v3166 = vld [vmem:[#allocation5 + $0x58] sm:$0xff]
    %v3167 = vld [vmem:[#allocation5 + $0x60] sm:$0xff]
    %v3168 = vld [vmem:[#allocation5 + $0x68] sm:$0xff]
    %v3169 = vld [vmem:[#allocation5 + $0x70] sm:$0xff]
    %v3170 = vld [vmem:[#allocation5 + $0x78] sm:$0xff]
    %v3171 = vld [vmem:[#allocation5 + $0x80] sm:$0xff]
    %v3172 = vld [vmem:[#allocation5 + $0x88] sm:$0xff]
    %v3173 = vld [vmem:[#allocation5 + $0x90] sm:$0xff]
    %v3174 = vld [vmem:[#allocation5 + $0x98] sm:$0xff]
    %v3175 = vld [vmem:[#allocation5 + $0xa0] sm:$0xff]
    %v3176 = vld [vmem:[#allocation5 + $0xa8] sm:$0xff]
    %v3177 = vld [vmem:[#allocation5 + $0xb0] sm:$0xff]
    %v3178 = vld [vmem:[#allocation5 + $0xb8] sm:$0xff]
    %v3179 = vld [vmem:[#allocation5 + $0xc0] sm:$0xff]
    %v3180 = vld [vmem:[#allocation5 + $0xc8] sm:$0xff]
    %v3181 = vld [vmem:[#allocation5 + $0xd0] sm:$0xff]
    %v3182 = vld [vmem:[#allocation5 + $0xd8] sm:$0xff]
    %v3183 = vld [vmem:[#allocation5 + $0xe0] sm:$0xff]
    %v3184 = vld [vmem:[#allocation5 + $0xe8] sm:$0xff]
    %v3185 = vld [vmem:[#allocation5 + $0xf0] sm:$0xff]
    %v3186 = vld [vmem:[#allocation5 + $0xf8] sm:$0xff]
    %3187 = vmatprep.subr.bf16.mxu0 %v3156
    %3188 = vmatpush1.bf16.msra.mxu0 %v3155
    %3189 = vmatprep.subr.bf16.mxu0 %v3160
    %3190 = vmatpush1.bf16.msra.mxu0 %v3159
    %3191 = vmatprep.subr.bf16.mxu0 %v3164
    %3192 = vmatpush1.bf16.msra.mxu0 %v3163
    %3193 = vmatprep.subr.bf16.mxu0 %v3168
    %3194 = vmatpush1.bf16.msra.mxu0 %v3167
    %3195 = vmatprep.subr.bf16.mxu0 %v3172
    %3196 = vmatpush1.bf16.msra.mxu0 %v3171
    %3197 = vmatprep.subr.bf16.mxu0 %v3176
    %3198 = vmatpush1.bf16.msra.mxu0 %v3175
    %3199 = vmatprep.subr.bf16.mxu0 %v3180
    %3200 = vmatpush1.bf16.msra.mxu0 %v3179
    %3201 = vmatprep.subr.bf16.mxu0 %v3184
    %3202 = vmatpush1.bf16.msra.mxu0 %v3183
    %3203 = vmatprep.subr.bf16.mxu0 0
    %3204 = vmatpush1.bf16.msra.mxu0 0
    %3205 = vmatprep.subr.bf16.mxu0 0
    %3206 = vmatpush1.bf16.msra.mxu0 0
    %3207 = vmatprep.subr.bf16.mxu0 0
    %3208 = vmatpush1.bf16.msra.mxu0 0
    %3209 = vmatprep.subr.bf16.mxu0 0
    %3210 = vmatpush1.bf16.msra.mxu0 0
    %3211 = vmatprep.subr.bf16.mxu0 0
    %3212 = vmatpush1.bf16.msra.mxu0 0
    %3213 = vmatprep.subr.bf16.mxu0 0
    %3214 = vmatpush1.bf16.msra.mxu0 0
    %3215 = vmatprep.subr.bf16.mxu0 0
    %3216 = vmatpush1.bf16.msra.mxu0 0
    %3217 = vmatprep.subr.bf16.mxu0 0
    %3218 = vmatpush1.bf16.msra.mxu0 0
    %3219 = vmatprep.mubr.bf16.mxu0 0
    %3220 = vmatmul.mubr.bf16.gmra.mrb[0].mxu0 0
    %v3221 = vpop.f32.mrb[0].mxu0
    %v3222 = vadd.f32 0.0, %v3221
    %v3223 = vpop.f32.mrb[0].mxu0
    %v3224 = vadd.f32 0.0, %v3223
    %v3225 = vpop.f32.mrb[0].mxu0
    %v3226 = vpop.f32.mrb[0].mxu0
    %3227 = vdwg.mxu0
    %3228 = vmatprep.subr.bf16.mxu0 %v3158
    %3229 = vmatpush1.bf16.msra.mxu0 %v3157
    %3230 = vmatprep.subr.bf16.mxu0 %v3162
    %3231 = vmatpush1.bf16.msra.mxu0 %v3161
    %3232 = vmatprep.subr.bf16.mxu0 %v3166
    %3233 = vmatpush1.bf16.msra.mxu0 %v3165
    %3234 = vmatprep.subr.bf16.mxu0 %v3170
    %3235 = vmatpush1.bf16.msra.mxu0 %v3169
    %3236 = vmatprep.subr.bf16.mxu0 %v3174
    %3237 = vmatpush1.bf16.msra.mxu0 %v3173
    %3238 = vmatprep.subr.bf16.mxu0 %v3178
    %3239 = vmatpush1.bf16.msra.mxu0 %v3177
    %3240 = vmatprep.subr.bf16.mxu0 %v3182
    %3241 = vmatpush1.bf16.msra.mxu0 %v3181
    %3242 = vmatprep.subr.bf16.mxu0 %v3186
    %3243 = vmatpush1.bf16.msra.mxu0 %v3185
    %3244 = vmatprep.subr.bf16.mxu0 0
    %3245 = vmatpush1.bf16.msra.mxu0 0
    %3246 = vmatprep.subr.bf16.mxu0 0
    %3247 = vmatpush1.bf16.msra.mxu0 0
    %3248 = vmatprep.subr.bf16.mxu0 0
    %3249 = vmatpush1.bf16.msra.mxu0 0
    %3250 = vmatprep.subr.bf16.mxu0 0
    %3251 = vmatpush1.bf16.msra.mxu0 0
    %3252 = vmatprep.subr.bf16.mxu0 0
    %3253 = vmatpush1.bf16.msra.mxu0 0
    %3254 = vmatprep.subr.bf16.mxu0 0
    %3255 = vmatpush1.bf16.msra.mxu0 0
    %3256 = vmatprep.subr.bf16.mxu0 0
    %3257 = vmatpush1.bf16.msra.mxu0 0
    %3258 = vmatprep.subr.bf16.mxu0 0
    %3259 = vmatpush1.bf16.msra.mxu0 0
    %3260 = vmatprep.mubr.bf16.mxu0 0
    %3261 = vmatmul.mubr.bf16.gmra.mrb[0].mxu0 0
    %v3262 = vpop.f32.mrb[0].mxu0
    %v3263 = vadd.f32 0.0, %v3262
    %v3264 = vpop.f32.mrb[0].mxu0
    %v3265 = vadd.f32 0.0, %v3264
    %v3266 = vpop.f32.mrb[0].mxu0
    %v3267 = vpop.f32.mrb[0].mxu0
    %3268 = vdwg.mxu0
    %v3269 = vadd.f32 %v3151, %v3222
    %v3270 = vadd.f32 %v3152, %v3224
    %v3271 = vadd.f32 %v3153, %v3263
    %v3272 = vadd.f32 %v3154, %v3265
    %v3273 = vxor.u32 %v3269, 2147483648
    %v3274 = vmul.f32 %v3273, 1.442695
    %v3275 = vpow.pop %v3274
    %v3276 = vadd.f32 %v3275, 1.0
    %v3277 = vrcp.pop %v3276
    %v3278 = vmul.f32 1.0, %v3277
    %v3279 = vxor.u32 %v3270, 2147483648
    %v3280 = vmul.f32 %v3279, 1.442695
    %v3281 = vpow.pop %v3280
    %v3282 = vadd.f32 %v3281, 1.0
    %v3283 = vrcp.pop %v3282
    %v3284 = vmul.f32 1.0, %v3283
    %v3285 = vtanh.pop %v3271
    %v3286 = vxor.u32 %v3272, 2147483648
    %v3287 = vmul.f32 %v3286, 1.442695
    %v3288 = vpow.pop %v3287
    %v3289 = vadd.f32 %v3288, 1.0
    %v3290 = vrcp.pop %v3289
    %v3291 = vmul.f32 1.0, %v3290
    %v3292 = vmul.f32 %v3284, 0.0
    %v3293 = vmul.f32 %v3278, %v3285
    %v3294 = vadd.f32 %v3292, %v3293
    %v3295 = vtanh.pop %v3294
    %v3296 = vmul.f32 %v3291, %v3295
    %v3297 = vld [vmem:[#allocation2 + $0x20] sm:$0xff]
    %v3298 = vld [vmem:[#allocation2 + $0x28] sm:$0xff]
    %v3299 = vld [vmem:[#allocation2 + $0x30] sm:$0xff]
    %v3300 = vld [vmem:[#allocation2 + $0x38] sm:$0xff]
    %v3301 = vpack.c.bf16 %v3296, %v3296
    %3302 = vmatprep.subr.bf16.mxu0 %v3156
    %3303 = vmatpush1.bf16.msra.mxu0 %v3155
    %3304 = vmatprep.subr.bf16.mxu0 %v3160
    %3305 = vmatpush1.bf16.msra.mxu0 %v3159
    %3306 = vmatprep.subr.bf16.mxu0 %v3164
    %3307 = vmatpush1.bf16.msra.mxu0 %v3163
    %3308 = vmatprep.subr.bf16.mxu0 %v3168
    %3309 = vmatpush1.bf16.msra.mxu0 %v3167
    %3310 = vmatprep.subr.bf16.mxu0 %v3172
    %3311 = vmatpush1.bf16.msra.mxu0 %v3171
    %3312 = vmatprep.subr.bf16.mxu0 %v3176
    %3313 = vmatpush1.bf16.msra.mxu0 %v3175
    %3314 = vmatprep.subr.bf16.mxu0 %v3180
    %3315 = vmatpush1.bf16.msra.mxu0 %v3179
    %3316 = vmatprep.subr.bf16.mxu0 %v3184
    %3317 = vmatpush1.bf16.msra.mxu0 %v3183
    %3318 = vmatprep.subr.bf16.mxu0 0
    %3319 = vmatpush1.bf16.msra.mxu0 0
    %3320 = vmatprep.subr.bf16.mxu0 0
    %3321 = vmatpush1.bf16.msra.mxu0 0
    %3322 = vmatprep.subr.bf16.mxu0 0
    %3323 = vmatpush1.bf16.msra.mxu0 0
    %3324 = vmatprep.subr.bf16.mxu0 0
    %3325 = vmatpush1.bf16.msra.mxu0 0
    %3326 = vmatprep.subr.bf16.mxu0 0
    %3327 = vmatpush1.bf16.msra.mxu0 0
    %3328 = vmatprep.subr.bf16.mxu0 0
    %3329 = vmatpush1.bf16.msra.mxu0 0
    %3330 = vmatprep.subr.bf16.mxu0 0
    %3331 = vmatpush1.bf16.msra.mxu0 0
    %3332 = vmatprep.subr.bf16.mxu0 0
    %3333 = vmatpush1.bf16.msra.mxu0 0
    %3334 = vmatprep.mubr.bf16.mxu0 0
    %3335 = vmatmul.mubr.bf16.gmra.mrb[0].mxu0 %v3301
    %v3336 = vpop.f32.mrb[0].mxu0
    %v3337 = vadd.f32 0.0, %v3336
    %v3338 = vpop.f32.mrb[0].mxu0
    %v3339 = vadd.f32 0.0, %v3338
    %v3340 = vpop.f32.mrb[0].mxu0
    %v3341 = vpop.f32.mrb[0].mxu0
    %3342 = vdwg.mxu0
    %3343 = vmatprep.subr.bf16.mxu0 %v3158
    %3344 = vmatpush1.bf16.msra.mxu0 %v3157
    %3345 = vmatprep.subr.bf16.mxu0 %v3162
    %3346 = vmatpush1.bf16.msra.mxu0 %v3161
    %3347 = vmatprep.subr.bf16.mxu0 %v3166
    %3348 = vmatpush1.bf16.msra.mxu0 %v3165
    %3349 = vmatprep.subr.bf16.mxu0 %v3170
    %3350 = vmatpush1.bf16.msra.mxu0 %v3169
    %3351 = vmatprep.subr.bf16.mxu0 %v3174
    %3352 = vmatpush1.bf16.msra.mxu0 %v3173
    %3353 = vmatprep.subr.bf16.mxu0 %v3178
    %3354 = vmatpush1.bf16.msra.mxu0 %v3177
    %3355 = vmatprep.subr.bf16.mxu0 %v3182
    %3356 = vmatpush1.bf16.msra.mxu0 %v3181
    %3357 = vmatprep.subr.bf16.mxu0 %v3186
    %3358 = vmatpush1.bf16.msra.mxu0 %v3185
    %3359 = vmatprep.subr.bf16.mxu0 0
    %3360 = vmatpush1.bf16.msra.mxu0 0
    %3361 = vmatprep.subr.bf16.mxu0 0
    %3362 = vmatpush1.bf16.msra.mxu0 0
    %3363 = vmatprep.subr.bf16.mxu0 0
    %3364 = vmatpush1.bf16.msra.mxu0 0
    %3365 = vmatprep.subr.bf16.mxu0 0
    %3366 = vmatpush1.bf16.msra.mxu0 0
    %3367 = vmatprep.subr.bf16.mxu0 0
    %3368 = vmatpush1.bf16.msra.mxu0 0
    %3369 = vmatprep.subr.bf16.mxu0 0
    %3370 = vmatpush1.bf16.msra.mxu0 0
    %3371 = vmatprep.subr.bf16.mxu0 0
    %3372 = vmatpush1.bf16.msra.mxu0 0
    %3373 = vmatprep.subr.bf16.mxu0 0
    %3374 = vmatpush1.bf16.msra.mxu0 0
    %3375 = vmatprep.mubr.bf16.mxu0 0
    %3376 = vmatmul.mubr.bf16.gmra.mrb[0].mxu0 %v3301
    %v3377 = vpop.f32.mrb[0].mxu0
    %v3378 = vadd.f32 0.0, %v3377
    %v3379 = vpop.f32.mrb[0].mxu0
    %v3380 = vadd.f32 0.0, %v3379
    %v3381 = vpop.f32.mrb[0].mxu0
    %v3382 = vpop.f32.mrb[0].mxu0
    %3383 = vdwg.mxu0
    %v3384 = vadd.f32 %v3297, %v3337
    %v3385 = vadd.f32 %v3298, %v3339
    %v3386 = vadd.f32 %v3299, %v3378
    %v3387 = vadd.f32 %v3300, %v3380
    %v3388 = vxor.u32 %v3384, 2147483648
    %v3389 = vmul.f32 %v3388, 1.442695
    %v3390 = vpow.pop %v3389
    %v3391 = vadd.f32 %v3390, 1.0
    %v3392 = vrcp.pop %v3391
    %v3393 = vmul.f32 1.0, %v3392
    %v3394 = vxor.u32 %v3385, 2147483648
    %v3395 = vmul.f32 %v3394, 1.442695
    %v3396 = vpow.pop %v3395
    %v3397 = vadd.f32 %v3396, 1.0
    %v3398 = vrcp.pop %v3397
    %v3399 = vmul.f32 1.0, %v3398
    %v3400 = vtanh.pop %v3386
    %v3401 = vxor.u32 %v3387, 2147483648
    %v3402 = vmul.f32 %v3401, 1.442695
    %v3403 = vpow.pop %v3402
    %v3404 = vadd.f32 %v3403, 1.0
    %v3405 = vrcp.pop %v3404
    %v3406 = vmul.f32 1.0, %v3405
    %v3407 = vmul.f32 %v3399, %v3294
    %v3408 = vmul.f32 %v3393, %v3400
    %v3409 = vadd.f32 %v3407, %v3408
    %v3410 = vtanh.pop %v3409
    %v3411 = vmul.f32 %v3406, %v3410
    %v3412 = vld [vmem:[#allocation2 + $0x40] sm:$0xff]
    %v3413 = vld [vmem:[#allocation2 + $0x48] sm:$0xff]
    %v3414 = vld [vmem:[#allocation2 + $0x50] sm:$0xff]
    %v3415 = vld [vmem:[#allocation2 + $0x58] sm:$0xff]
    %v3416 = vpack.c.bf16 %v3411, %v3411
    %3417 = vmatprep.subr.bf16.mxu0 %v3156
    %3418 = vmatpush1.bf16.msra.mxu0 %v3155
    %3419 = vmatprep.subr.bf16.mxu0 %v3160
    %3420 = vmatpush1.bf16.msra.mxu0 %v3159
    %3421 = vmatprep.subr.bf16.mxu0 %v3164
    %3422 = vmatpush1.bf16.msra.mxu0 %v3163
    %3423 = vmatprep.subr.bf16.mxu0 %v3168
    %3424 = vmatpush1.bf16.msra.mxu0 %v3167
    %3425 = vmatprep.subr.bf16.mxu0 %v3172
    %3426 = vmatpush1.bf16.msra.mxu0 %v3171
    %3427 = vmatprep.subr.bf16.mxu0 %v3176
    %3428 = vmatpush1.bf16.msra.mxu0 %v3175
    %3429 = vmatprep.subr.bf16.mxu0 %v3180
    %3430 = vmatpush1.bf16.msra.mxu0 %v3179
    %3431 = vmatprep.subr.bf16.mxu0 %v3184
    %3432 = vmatpush1.bf16.msra.mxu0 %v3183
    %3433 = vmatprep.subr.bf16.mxu0 0
    %3434 = vmatpush1.bf16.msra.mxu0 0
    %3435 = vmatprep.subr.bf16.mxu0 0
    %3436 = vmatpush1.bf16.msra.mxu0 0
    %3437 = vmatprep.subr.bf16.mxu0 0
    %3438 = vmatpush1.bf16.msra.mxu0 0
    %3439 = vmatprep.subr.bf16.mxu0 0
    %3440 = vmatpush1.bf16.msra.mxu0 0
    %3441 = vmatprep.subr.bf16.mxu0 0
    %3442 = vmatpush1.bf16.msra.mxu0 0
    %3443 = vmatprep.subr.bf16.mxu0 0
    %3444 = vmatpush1.bf16.msra.mxu0 0
    %3445 = vmatprep.subr.bf16.mxu0 0
    %3446 = vmatpush1.bf16.msra.mxu0 0
    %3447 = vmatprep.subr.bf16.mxu0 0
    %3448 = vmatpush1.bf16.msra.mxu0 0
    %3449 = vmatprep.mubr.bf16.mxu0 0
    %3450 = vmatmul.mubr.bf16.gmra.mrb[0].mxu0 %v3416
    %v3451 = vpop.f32.mrb[0].mxu0
    %v3452 = vadd.f32 0.0, %v3451
    %v3453 = vpop.f32.mrb[0].mxu0
    %v3454 = vadd.f32 0.0, %v3453
    %v3455 = vpop.f32.mrb[0].mxu0
    %v3456 = vpop.f32.mrb[0].mxu0
    %3457 = vdwg.mxu0
    %3458 = vmatprep.subr.bf16.mxu0 %v3158
    %3459 = vmatpush1.bf16.msra.mxu0 %v3157
    %3460 = vmatprep.subr.bf16.mxu0 %v3162
    %3461 = vmatpush1.bf16.msra.mxu0 %v3161
    %3462 = vmatprep.subr.bf16.mxu0 %v3166
    %3463 = vmatpush1.bf16.msra.mxu0 %v3165
    %3464 = vmatprep.subr.bf16.mxu0 %v3170
    %3465 = vmatpush1.bf16.msra.mxu0 %v3169
    %3466 = vmatprep.subr.bf16.mxu0 %v3174
    %3467 = vmatpush1.bf16.msra.mxu0 %v3173
    %3468 = vmatprep.subr.bf16.mxu0 %v3178
    %3469 = vmatpush1.bf16.msra.mxu0 %v3177
    %3470 = vmatprep.subr.bf16.mxu0 %v3182
    %3471 = vmatpush1.bf16.msra.mxu0 %v3181
    %3472 = vmatprep.subr.bf16.mxu0 %v3186
    %3473 = vmatpush1.bf16.msra.mxu0 %v3185
    %3474 = vmatprep.subr.bf16.mxu0 0
    %3475 = vmatpush1.bf16.msra.mxu0 0
    %3476 = vmatprep.subr.bf16.mxu0 0
    %3477 = vmatpush1.bf16.msra.mxu0 0
    %3478 = vmatprep.subr.bf16.mxu0 0
    %3479 = vmatpush1.bf16.msra.mxu0 0
    %3480 = vmatprep.subr.bf16.mxu0 0
    %3481 = vmatpush1.bf16.msra.mxu0 0
    %3482 = vmatprep.subr.bf16.mxu0 0
    %3483 = vmatpush1.bf16.msra.mxu0 0
    %3484 = vmatprep.subr.bf16.mxu0 0
    %3485 = vmatpush1.bf16.msra.mxu0 0
    %3486 = vmatprep.subr.bf16.mxu0 0
    %3487 = vmatpush1.bf16.msra.mxu0 0
    %3488 = vmatprep.subr.bf16.mxu0 0
    %3489 = vmatpush1.bf16.msra.mxu0 0
    %3490 = vmatprep.mubr.bf16.mxu0 0
    %3491 = vmatmul.mubr.bf16.gmra.mrb[0].mxu0 %v3416
    %v3492 = vpop.f32.mrb[0].mxu0
    %v3493 = vadd.f32 0.0, %v3492
    %v3494 = vpop.f32.mrb[0].mxu0
    %v3495 = vadd.f32 0.0, %v3494
    %v3496 = vpop.f32.mrb[0].mxu0
    %v3497 = vpop.f32.mrb[0].mxu0
    %3498 = vdwg.mxu0
    %v3499 = vadd.f32 %v3412, %v3452
    %v3500 = vadd.f32 %v3413, %v3454
    %v3501 = vadd.f32 %v3414, %v3493
    %v3502 = vadd.f32 %v3415, %v3495
    %v3503 = vxor.u32 %v3499, 2147483648
    %v3504 = vmul.f32 %v3503, 1.442695
    %v3505 = vpow.pop %v3504
    %v3506 = vadd.f32 %v3505, 1.0
    %v3507 = vrcp.pop %v3506
    %v3508 = vmul.f32 1.0, %v3507
    %v3509 = vxor.u32 %v3500, 2147483648
    %v3510 = vmul.f32 %v3509, 1.442695
    %v3511 = vpow.pop %v3510
    %v3512 = vadd.f32 %v3511, 1.0
    %v3513 = vrcp.pop %v3512
    %v3514 = vmul.f32 1.0, %v3513
    %v3515 = vtanh.pop %v3501
    %v3516 = vxor.u32 %v3502, 2147483648
    %v3517 = vmul.f32 %v3516, 1.442695
    %v3518 = vpow.pop %v3517
    %v3519 = vadd.f32 %v3518, 1.0
    %v3520 = vrcp.pop %v3519
    %v3521 = vmul.f32 1.0, %v3520
    %v3522 = vmul.f32 %v3514, %v3409
    %v3523 = vmul.f32 %v3508, %v3515
    %v3524 = vadd.f32 %v3522, %v3523
    %v3525 = vtanh.pop %v3524
    %v3526 = vmul.f32 %v3521, %v3525
    %v3527 = vld [vmem:[#allocation2 + $0x60] sm:$0xff]
    %v3528 = vld [vmem:[#allocation2 + $0x68] sm:$0xff]
    %v3529 = vld [vmem:[#allocation2 + $0x70] sm:$0xff]
    %v3530 = vld [vmem:[#allocation2 + $0x78] sm:$0xff]
    %v3531 = vpack.c.bf16 %v3526, %v3526
    %3532 = vmatprep.subr.bf16.mxu0 %v3156
    %3533 = vmatpush1.bf16.msra.mxu0 %v3155
    %3534 = vmatprep.subr.bf16.mxu0 %v3160
    %3535 = vmatpush1.bf16.msra.mxu0 %v3159
    %3536 = vmatprep.subr.bf16.mxu0 %v3164
    %3537 = vmatpush1.bf16.msra.mxu0 %v3163
    %3538 = vmatprep.subr.bf16.mxu0 %v3168
    %3539 = vmatpush1.bf16.msra.mxu0 %v3167
    %3540 = vmatprep.subr.bf16.mxu0 %v3172
    %3541 = vmatpush1.bf16.msra.mxu0 %v3171
    %3542 = vmatprep.subr.bf16.mxu0 %v3176
    %3543 = vmatpush1.bf16.msra.mxu0 %v3175
    %3544 = vmatprep.subr.bf16.mxu0 %v3180
    %3545 = vmatpush1.bf16.msra.mxu0 %v3179
    %3546 = vmatprep.subr.bf16.mxu0 %v3184
    %3547 = vmatpush1.bf16.msra.mxu0 %v3183
    %3548 = vmatprep.subr.bf16.mxu0 0
    %3549 = vmatpush1.bf16.msra.mxu0 0
    %3550 = vmatprep.subr.bf16.mxu0 0
    %3551 = vmatpush1.bf16.msra.mxu0 0
    %3552 = vmatprep.subr.bf16.mxu0 0
    %3553 = vmatpush1.bf16.msra.mxu0 0
    %3554 = vmatprep.subr.bf16.mxu0 0
    %3555 = vmatpush1.bf16.msra.mxu0 0
    %3556 = vmatprep.subr.bf16.mxu0 0
    %3557 = vmatpush1.bf16.msra.mxu0 0
    %3558 = vmatprep.subr.bf16.mxu0 0
    %3559 = vmatpush1.bf16.msra.mxu0 0
    %3560 = vmatprep.subr.bf16.mxu0 0
    %3561 = vmatpush1.bf16.msra.mxu0 0
    %3562 = vmatprep.subr.bf16.mxu0 0
    %3563 = vmatpush1.bf16.msra.mxu0 0
    %3564 = vmatprep.mubr.bf16.mxu0 0
    %3565 = vmatmul.mubr.bf16.gmra.mrb[0].mxu0 %v3531
    %v3566 = vpop.f32.mrb[0].mxu0
    %v3567 = vadd.f32 0.0, %v3566
    %v3568 = vpop.f32.mrb[0].mxu0
    %v3569 = vadd.f32 0.0, %v3568
    %v3570 = vpop.f32.mrb[0].mxu0
    %v3571 = vpop.f32.mrb[0].mxu0
    %3572 = vdwg.mxu0
    %3573 = vmatprep.subr.bf16.mxu0 %v3158
    %3574 = vmatpush1.bf16.msra.mxu0 %v3157
    %3575 = vmatprep.subr.bf16.mxu0 %v3162
    %3576 = vmatpush1.bf16.msra.mxu0 %v3161
    %3577 = vmatprep.subr.bf16.mxu0 %v3166
    %3578 = vmatpush1.bf16.msra.mxu0 %v3165
    %3579 = vmatprep.subr.bf16.mxu0 %v3170
    %3580 = vmatpush1.bf16.msra.mxu0 %v3169
    %3581 = vmatprep.subr.bf16.mxu0 %v3174
    %3582 = vmatpush1.bf16.msra.mxu0 %v3173
    %3583 = vmatprep.subr.bf16.mxu0 %v3178
    %3584 = vmatpush1.bf16.msra.mxu0 %v3177
    %3585 = vmatprep.subr.bf16.mxu0 %v3182
    %3586 = vmatpush1.bf16.msra.mxu0 %v3181
    %3587 = vmatprep.subr.bf16.mxu0 %v3186
    %3588 = vmatpush1.bf16.msra.mxu0 %v3185
    %3589 = vmatprep.subr.bf16.mxu0 0
    %3590 = vmatpush1.bf16.msra.mxu0 0
    %3591 = vmatprep.subr.bf16.mxu0 0
    %3592 = vmatpush1.bf16.msra.mxu0 0
    %3593 = vmatprep.subr.bf16.mxu0 0
    %3594 = vmatpush1.bf16.msra.mxu0 0
    %3595 = vmatprep.subr.bf16.mxu0 0
    %3596 = vmatpush1.bf16.msra.mxu0 0
    %3597 = vmatprep.subr.bf16.mxu0 0
    %3598 = vmatpush1.bf16.msra.mxu0 0
    %3599 = vmatprep.subr.bf16.mxu0 0
    %3600 = vmatpush1.bf16.msra.mxu0 0
    %3601 = vmatprep.subr.bf16.mxu0 0
    %3602 = vmatpush1.bf16.msra.mxu0 0
    %3603 = vmatprep.subr.bf16.mxu0 0
    %3604 = vmatpush1.bf16.msra.mxu0 0
    %3605 = vmatprep.mubr.bf16.mxu0 0
    %3606 = vmatmul.mubr.bf16.gmra.mrb[0].mxu0 %v3531
    %v3607 = vpop.f32.mrb[0].mxu0
    %v3608 = vadd.f32 0.0, %v3607
    %v3609 = vpop.f32.mrb[0].mxu0
    %v3610 = vadd.f32 0.0, %v3609
    %v3611 = vpop.f32.mrb[0].mxu0
    %v3612 = vpop.f32.mrb[0].mxu0
    %3613 = vdwg.mxu0
    %v3614 = vadd.f32 %v3527, %v3567
    %v3615 = vadd.f32 %v3528, %v3569
    %v3616 = vadd.f32 %v3529, %v3608
    %v3617 = vadd.f32 %v3530, %v3610
    %v3618 = vxor.u32 %v3614, 2147483648
    %v3619 = vmul.f32 %v3618, 1.442695
    %v3620 = vpow.pop %v3619
    %v3621 = vadd.f32 %v3620, 1.0
    %v3622 = vrcp.pop %v3621
    %v3623 = vmul.f32 1.0, %v3622
    %v3624 = vxor.u32 %v3615, 2147483648
    %v3625 = vmul.f32 %v3624, 1.442695
    %v3626 = vpow.pop %v3625
    %v3627 = vadd.f32 %v3626, 1.0
    %v3628 = vrcp.pop %v3627
    %v3629 = vmul.f32 1.0, %v3628
    %v3630 = vtanh.pop %v3616
    %v3631 = vxor.u32 %v3617, 2147483648
    %v3632 = vmul.f32 %v3631, 1.442695
    %v3633 = vpow.pop %v3632
    %v3634 = vadd.f32 %v3633, 1.0
    %v3635 = vrcp.pop %v3634
    %v3636 = vmul.f32 1.0, %v3635
    %v3637 = vmul.f32 %v3629, %v3524
    %v3638 = vmul.f32 %v3623, %v3630
    %v3639 = vadd.f32 %v3637, %v3638
    %v3640 = vtanh.pop %v3639
    %v3641 = vmul.f32 %v3636, %v3640
    %v3642 = vld [vmem:[#allocation2 + $0x80] sm:$0xff]
    %v3643 = vld [vmem:[#allocation2 + $0x88] sm:$0xff]
    %v3644 = vld [vmem:[#allocation2 + $0x90] sm:$0xff]
    %v3645 = vld [vmem:[#allocation2 + $0x98] sm:$0xff]
    %v3646 = vpack.c.bf16 %v3641, %v3641
    %3647 = vmatprep.subr.bf16.mxu0 %v3156
    %3648 = vmatpush1.bf16.msra.mxu0 %v3155
    %3649 = vmatprep.subr.bf16.mxu0 %v3160
    %3650 = vmatpush1.bf16.msra.mxu0 %v3159
    %3651 = vmatprep.subr.bf16.mxu0 %v3164
    %3652 = vmatpush1.bf16.msra.mxu0 %v3163
    %3653 = vmatprep.subr.bf16.mxu0 %v3168
    %3654 = vmatpush1.bf16.msra.mxu0 %v3167
    %3655 = vmatprep.subr.bf16.mxu0 %v3172
    %3656 = vmatpush1.bf16.msra.mxu0 %v3171
    %3657 = vmatprep.subr.bf16.mxu0 %v3176
    %3658 = vmatpush1.bf16.msra.mxu0 %v3175
    %3659 = vmatprep.subr.bf16.mxu0 %v3180
    %3660 = vmatpush1.bf16.msra.mxu0 %v3179
    %3661 = vmatprep.subr.bf16.mxu0 %v3184
    %3662 = vmatpush1.bf16.msra.mxu0 %v3183
    %3663 = vmatprep.subr.bf16.mxu0 0
    %3664 = vmatpush1.bf16.msra.mxu0 0
    %3665 = vmatprep.subr.bf16.mxu0 0
    %3666 = vmatpush1.bf16.msra.mxu0 0
    %3667 = vmatprep.subr.bf16.mxu0 0
    %3668 = vmatpush1.bf16.msra.mxu0 0
    %3669 = vmatprep.subr.bf16.mxu0 0
    %3670 = vmatpush1.bf16.msra.mxu0 0
    %3671 = vmatprep.subr.bf16.mxu0 0
    %3672 = vmatpush1.bf16.msra.mxu0 0
    %3673 = vmatprep.subr.bf16.mxu0 0
    %3674 = vmatpush1.bf16.msra.mxu0 0
    %3675 = vmatprep.subr.bf16.mxu0 0
    %3676 = vmatpush1.bf16.msra.mxu0 0
    %3677 = vmatprep.subr.bf16.mxu0 0
    %3678 = vmatpush1.bf16.msra.mxu0 0
    %3679 = vmatprep.mubr.bf16.mxu0 0
    %3680 = vmatmul.mubr.bf16.gmra.mrb[0].mxu0 %v3646
    %v3681 = vpop.f32.mrb[0].mxu0
    %v3682 = vadd.f32 0.0, %v3681
    %v3683 = vpop.f32.mrb[0].mxu0
    %v3684 = vadd.f32 0.0, %v3683
    %v3685 = vpop.f32.mrb[0].mxu0
    %v3686 = vpop.f32.mrb[0].mxu0
    %3687 = vdwg.mxu0
    %3688 = vmatprep.subr.bf16.mxu0 %v3158
    %3689 = vmatpush1.bf16.msra.mxu0 %v3157
    %3690 = vmatprep.subr.bf16.mxu0 %v3162
    %3691 = vmatpush1.bf16.msra.mxu0 %v3161
    %3692 = vmatprep.subr.bf16.mxu0 %v3166
    %3693 = vmatpush1.bf16.msra.mxu0 %v3165
    %3694 = vmatprep.subr.bf16.mxu0 %v3170
    %3695 = vmatpush1.bf16.msra.mxu0 %v3169
    %3696 = vmatprep.subr.bf16.mxu0 %v3174
    %3697 = vmatpush1.bf16.msra.mxu0 %v3173
    %3698 = vmatprep.subr.bf16.mxu0 %v3178
    %3699 = vmatpush1.bf16.msra.mxu0 %v3177
    %3700 = vmatprep.subr.bf16.mxu0 %v3182
    %3701 = vmatpush1.bf16.msra.mxu0 %v3181
    %3702 = vmatprep.subr.bf16.mxu0 %v3186
    %3703 = vmatpush1.bf16.msra.mxu0 %v3185
    %3704 = vmatprep.subr.bf16.mxu0 0
    %3705 = vmatpush1.bf16.msra.mxu0 0
    %3706 = vmatprep.subr.bf16.mxu0 0
    %3707 = vmatpush1.bf16.msra.mxu0 0
    %3708 = vmatprep.subr.bf16.mxu0 0
    %3709 = vmatpush1.bf16.msra.mxu0 0
    %3710 = vmatprep.subr.bf16.mxu0 0
    %3711 = vmatpush1.bf16.msra.mxu0 0
    %3712 = vmatprep.subr.bf16.mxu0 0
    %3713 = vmatpush1.bf16.msra.mxu0 0
    %3714 = vmatprep.subr.bf16.mxu0 0
    %3715 = vmatpush1.bf16.msra.mxu0 0
    %3716 = vmatprep.subr.bf16.mxu0 0
    %3717 = vmatpush1.bf16.msra.mxu0 0
    %3718 = vmatprep.subr.bf16.mxu0 0
    %3719 = vmatpush1.bf16.msra.mxu0 0
    %3720 = vmatprep.mubr.bf16.mxu0 0
    %3721 = vmatmul.mubr.bf16.gmra.mrb[0].mxu0 %v3646
    %v3722 = vpop.f32.mrb[0].mxu0
    %v3723 = vadd.f32 0.0, %v3722
    %v3724 = vpop.f32.mrb[0].mxu0
    %v3725 = vadd.f32 0.0, %v3724
    %v3726 = vpop.f32.mrb[0].mxu0
    %v3727 = vpop.f32.mrb[0].mxu0
    %3728 = vdwg.mxu0
    %v3729 = vadd.f32 %v3642, %v3682
    %v3730 = vadd.f32 %v3643, %v3684
    %v3731 = vadd.f32 %v3644, %v3723
    %v3732 = vadd.f32 %v3645, %v3725
    %v3733 = vxor.u32 %v3729, 2147483648
    %v3734 = vmul.f32 %v3733, 1.442695
    %v3735 = vpow.pop %v3734
    %v3736 = vadd.f32 %v3735, 1.0
    %v3737 = vrcp.pop %v3736
    %v3738 = vmul.f32 1.0, %v3737
    %v3739 = vxor.u32 %v3730, 2147483648
    %v3740 = vmul.f32 %v3739, 1.442695
    %v3741 = vpow.pop %v3740
    %v3742 = vadd.f32 %v3741, 1.0
    %v3743 = vrcp.pop %v3742
    %v3744 = vmul.f32 1.0, %v3743
    %v3745 = vtanh.pop %v3731
    %v3746 = vxor.u32 %v3732, 2147483648
    %v3747 = vmul.f32 %v3746, 1.442695
    %v3748 = vpow.pop %v3747
    %v3749 = vadd.f32 %v3748, 1.0
    %v3750 = vrcp.pop %v3749
    %v3751 = vmul.f32 1.0, %v3750
    %v3752 = vmul.f32 %v3744, %v3639
    %v3753 = vmul.f32 %v3738, %v3745
    %v3754 = vadd.f32 %v3752, %v3753
    %v3755 = vtanh.pop %v3754
    %v3756 = vmul.f32 %v3751, %v3755
    %v3757 = vld [vmem:[#allocation2 + $0xa0] sm:$0xff]
    %v3758 = vld [vmem:[#allocation2 + $0xa8] sm:$0xff]
    %v3759 = vld [vmem:[#allocation2 + $0xb0] sm:$0xff]
    %v3760 = vld [vmem:[#allocation2 + $0xb8] sm:$0xff]
    %v3761 = vpack.c.bf16 %v3756, %v3756
    %3762 = vmatprep.subr.bf16.mxu0 %v3156
    %3763 = vmatpush1.bf16.msra.mxu0 %v3155
    %3764 = vmatprep.subr.bf16.mxu0 %v3160
    %3765 = vmatpush1.bf16.msra.mxu0 %v3159
    %3766 = vmatprep.subr.bf16.mxu0 %v3164
    %3767 = vmatpush1.bf16.msra.mxu0 %v3163
    %3768 = vmatprep.subr.bf16.mxu0 %v3168
    %3769 = vmatpush1.bf16.msra.mxu0 %v3167
    %3770 = vmatprep.subr.bf16.mxu0 %v3172
    %3771 = vmatpush1.bf16.msra.mxu0 %v3171
    %3772 = vmatprep.subr.bf16.mxu0 %v3176
    %3773 = vmatpush1.bf16.msra.mxu0 %v3175
    %3774 = vmatprep.subr.bf16.mxu0 %v3180
    %3775 = vmatpush1.bf16.msra.mxu0 %v3179
    %3776 = vmatprep.subr.bf16.mxu0 %v3184
    %3777 = vmatpush1.bf16.msra.mxu0 %v3183
    %3778 = vmatprep.subr.bf16.mxu0 0
    %3779 = vmatpush1.bf16.msra.mxu0 0
    %3780 = vmatprep.subr.bf16.mxu0 0
    %3781 = vmatpush1.bf16.msra.mxu0 0
    %3782 = vmatprep.subr.bf16.mxu0 0
    %3783 = vmatpush1.bf16.msra.mxu0 0
    %3784 = vmatprep.subr.bf16.mxu0 0
    %3785 = vmatpush1.bf16.msra.mxu0 0
    %3786 = vmatprep.subr.bf16.mxu0 0
    %3787 = vmatpush1.bf16.msra.mxu0 0
    %3788 = vmatprep.subr.bf16.mxu0 0
    %3789 = vmatpush1.bf16.msra.mxu0 0
    %3790 = vmatprep.subr.bf16.mxu0 0
    %3791 = vmatpush1.bf16.msra.mxu0 0
    %3792 = vmatprep.subr.bf16.mxu0 0
    %3793 = vmatpush1.bf16.msra.mxu0 0
    %3794 = vmatprep.mubr.bf16.mxu0 0
    %3795 = vmatmul.mubr.bf16.gmra.mrb[0].mxu0 %v3761
    %v3796 = vpop.f32.mrb[0].mxu0
    %v3797 = vadd.f32 0.0, %v3796
    %v3798 = vpop.f32.mrb[0].mxu0
    %v3799 = vadd.f32 0.0, %v3798
    %v3800 = vpop.f32.mrb[0].mxu0
    %v3801 = vpop.f32.mrb[0].mxu0
    %3802 = vdwg.mxu0
    %3803 = vmatprep.subr.bf16.mxu0 %v3158
    %3804 = vmatpush1.bf16.msra.mxu0 %v3157
    %3805 = vmatprep.subr.bf16.mxu0 %v3162
    %3806 = vmatpush1.bf16.msra.mxu0 %v3161
    %3807 = vmatprep.subr.bf16.mxu0 %v3166
    %3808 = vmatpush1.bf16.msra.mxu0 %v3165
    %3809 = vmatprep.subr.bf16.mxu0 %v3170
    %3810 = vmatpush1.bf16.msra.mxu0 %v3169
    %3811 = vmatprep.subr.bf16.mxu0 %v3174
    %3812 = vmatpush1.bf16.msra.mxu0 %v3173
    %3813 = vmatprep.subr.bf16.mxu0 %v3178
    %3814 = vmatpush1.bf16.msra.mxu0 %v3177
    %3815 = vmatprep.subr.bf16.mxu0 %v3182
    %3816 = vmatpush1.bf16.msra.mxu0 %v3181
    %3817 = vmatprep.subr.bf16.mxu0 %v3186
    %3818 = vmatpush1.bf16.msra.mxu0 %v3185
    %3819 = vmatprep.subr.bf16.mxu0 0
    %3820 = vmatpush1.bf16.msra.mxu0 0
    %3821 = vmatprep.subr.bf16.mxu0 0
    %3822 = vmatpush1.bf16.msra.mxu0 0
    %3823 = vmatprep.subr.bf16.mxu0 0
    %3824 = vmatpush1.bf16.msra.mxu0 0
    %3825 = vmatprep.subr.bf16.mxu0 0
    %3826 = vmatpush1.bf16.msra.mxu0 0
    %3827 = vmatprep.subr.bf16.mxu0 0
    %3828 = vmatpush1.bf16.msra.mxu0 0
    %3829 = vmatprep.subr.bf16.mxu0 0
    %3830 = vmatpush1.bf16.msra.mxu0 0
    %3831 = vmatprep.subr.bf16.mxu0 0
    %3832 = vmatpush1.bf16.msra.mxu0 0
    %3833 = vmatprep.subr.bf16.mxu0 0
    %3834 = vmatpush1.bf16.msra.mxu0 0
    %3835 = vmatprep.mubr.bf16.mxu0 0
    %3836 = vmatmul.mubr.bf16.gmra.mrb[0].mxu0 %v3761
    %v3837 = vpop.f32.mrb[0].mxu0
    %v3838 = vadd.f32 0.0, %v3837
    %v3839 = vpop.f32.mrb[0].mxu0
    %v3840 = vadd.f32 0.0, %v3839
    %v3841 = vpop.f32.mrb[0].mxu0
    %v3842 = vpop.f32.mrb[0].mxu0
    %3843 = vdwg.mxu0
    %v3844 = vadd.f32 %v3757, %v3797
    %v3845 = vadd.f32 %v3758, %v3799
    %v3846 = vadd.f32 %v3759, %v3838
    %v3847 = vadd.f32 %v3760, %v3840
    %v3848 = vxor.u32 %v3844, 2147483648
    %v3849 = vmul.f32 %v3848, 1.442695
    %v3850 = vpow.pop %v3849
    %v3851 = vadd.f32 %v3850, 1.0
    %v3852 = vrcp.pop %v3851
    %v3853 = vmul.f32 1.0, %v3852
    %v3854 = vxor.u32 %v3845, 2147483648
    %v3855 = vmul.f32 %v3854, 1.442695
    %v3856 = vpow.pop %v3855
    %v3857 = vadd.f32 %v3856, 1.0
    %v3858 = vrcp.pop %v3857
    %v3859 = vmul.f32 1.0, %v3858
    %v3860 = vtanh.pop %v3846
    %v3861 = vxor.u32 %v3847, 2147483648
    %v3862 = vmul.f32 %v3861, 1.442695
    %v3863 = vpow.pop %v3862
    %v3864 = vadd.f32 %v3863, 1.0
    %v3865 = vrcp.pop %v3864
    %v3866 = vmul.f32 1.0, %v3865
    %v3867 = vmul.f32 %v3859, %v3754
    %v3868 = vmul.f32 %v3853, %v3860
    %v3869 = vadd.f32 %v3867, %v3868
    %v3870 = vtanh.pop %v3869
    %v3871 = vmul.f32 %v3866, %v3870
    %v3872 = vld [vmem:[#allocation2 + $0xc0] sm:$0xff]
    %v3873 = vld [vmem:[#allocation2 + $0xc8] sm:$0xff]
    %v3874 = vld [vmem:[#allocation2 + $0xd0] sm:$0xff]
    %v3875 = vld [vmem:[#allocation2 + $0xd8] sm:$0xff]
    %v3876 = vpack.c.bf16 %v3871, %v3871
    %3877 = vmatprep.subr.bf16.mxu0 %v3156
    %3878 = vmatpush1.bf16.msra.mxu0 %v3155
    %3879 = vmatprep.subr.bf16.mxu0 %v3160
    %3880 = vmatpush1.bf16.msra.mxu0 %v3159
    %3881 = vmatprep.subr.bf16.mxu0 %v3164
    %3882 = vmatpush1.bf16.msra.mxu0 %v3163
    %3883 = vmatprep.subr.bf16.mxu0 %v3168
    %3884 = vmatpush1.bf16.msra.mxu0 %v3167
    %3885 = vmatprep.subr.bf16.mxu0 %v3172
    %3886 = vmatpush1.bf16.msra.mxu0 %v3171
    %3887 = vmatprep.subr.bf16.mxu0 %v3176
    %3888 = vmatpush1.bf16.msra.mxu0 %v3175
    %3889 = vmatprep.subr.bf16.mxu0 %v3180
    %3890 = vmatpush1.bf16.msra.mxu0 %v3179
    %3891 = vmatprep.subr.bf16.mxu0 %v3184
    %3892 = vmatpush1.bf16.msra.mxu0 %v3183
    %3893 = vmatprep.subr.bf16.mxu0 0
    %3894 = vmatpush1.bf16.msra.mxu0 0
    %3895 = vmatprep.subr.bf16.mxu0 0
    %3896 = vmatpush1.bf16.msra.mxu0 0
    %3897 = vmatprep.subr.bf16.mxu0 0
    %3898 = vmatpush1.bf16.msra.mxu0 0
    %3899 = vmatprep.subr.bf16.mxu0 0
    %3900 = vmatpush1.bf16.msra.mxu0 0
    %3901 = vmatprep.subr.bf16.mxu0 0
    %3902 = vmatpush1.bf16.msra.mxu0 0
    %3903 = vmatprep.subr.bf16.mxu0 0
    %3904 = vmatpush1.bf16.msra.mxu0 0
    %3905 = vmatprep.subr.bf16.mxu0 0
    %3906 = vmatpush1.bf16.msra.mxu0 0
    %3907 = vmatprep.subr.bf16.mxu0 0
    %3908 = vmatpush1.bf16.msra.mxu0 0
    %3909 = vmatprep.mubr.bf16.mxu0 0
    %3910 = vmatmul.mubr.bf16.gmra.mrb[0].mxu0 %v3876
    %v3911 = vpop.f32.mrb[0].mxu0
    %v3912 = vadd.f32 0.0, %v3911
    %v3913 = vpop.f32.mrb[0].mxu0
    %v3914 = vadd.f32 0.0, %v3913
    %v3915 = vpop.f32.mrb[0].mxu0
    %v3916 = vpop.f32.mrb[0].mxu0
    %3917 = vdwg.mxu0
    %3918 = vmatprep.subr.bf16.mxu0 %v3158
    %3919 = vmatpush1.bf16.msra.mxu0 %v3157
    %3920 = vmatprep.subr.bf16.mxu0 %v3162
    %3921 = vmatpush1.bf16.msra.mxu0 %v3161
    %3922 = vmatprep.subr.bf16.mxu0 %v3166
    %3923 = vmatpush1.bf16.msra.mxu0 %v3165
    %3924 = vmatprep.subr.bf16.mxu0 %v3170
    %3925 = vmatpush1.bf16.msra.mxu0 %v3169
    %3926 = vmatprep.subr.bf16.mxu0 %v3174
    %3927 = vmatpush1.bf16.msra.mxu0 %v3173
    %3928 = vmatprep.subr.bf16.mxu0 %v3178
    %3929 = vmatpush1.bf16.msra.mxu0 %v3177
    %3930 = vmatprep.subr.bf16.mxu0 %v3182
    %3931 = vmatpush1.bf16.msra.mxu0 %v3181
    %3932 = vmatprep.subr.bf16.mxu0 %v3186
    %3933 = vmatpush1.bf16.msra.mxu0 %v3185
    %3934 = vmatprep.subr.bf16.mxu0 0
    %3935 = vmatpush1.bf16.msra.mxu0 0
    %3936 = vmatprep.subr.bf16.mxu0 0
    %3937 = vmatpush1.bf16.msra.mxu0 0
    %3938 = vmatprep.subr.bf16.mxu0 0
    %3939 = vmatpush1.bf16.msra.mxu0 0
    %3940 = vmatprep.subr.bf16.mxu0 0
    %3941 = vmatpush1.bf16.msra.mxu0 0
    %3942 = vmatprep.subr.bf16.mxu0 0
    %3943 = vmatpush1.bf16.msra.mxu0 0
    %3944 = vmatprep.subr.bf16.mxu0 0
    %3945 = vmatpush1.bf16.msra.mxu0 0
    %3946 = vmatprep.subr.bf16.mxu0 0
    %3947 = vmatpush1.bf16.msra.mxu0 0
    %3948 = vmatprep.subr.bf16.mxu0 0
    %3949 = vmatpush1.bf16.msra.mxu0 0
    %3950 = vmatprep.mubr.bf16.mxu0 0
    %3951 = vmatmul.mubr.bf16.gmra.mrb[0].mxu0 %v3876
    %v3952 = vpop.f32.mrb[0].mxu0
    %v3953 = vadd.f32 0.0, %v3952
    %v3954 = vpop.f32.mrb[0].mxu0
    %v3955 = vadd.f32 0.0, %v3954
    %v3956 = vpop.f32.mrb[0].mxu0
    %v3957 = vpop.f32.mrb[0].mxu0
    %3958 = vdwg.mxu0
    %v3959 = vadd.f32 %v3872, %v3912
    %v3960 = vadd.f32 %v3873, %v3914
    %v3961 = vadd.f32 %v3874, %v3953
    %v3962 = vadd.f32 %v3875, %v3955
    %v3963 = vxor.u32 %v3959, 2147483648
    %v3964 = vmul.f32 %v3963, 1.442695
    %v3965 = vpow.pop %v3964
    %v3966 = vadd.f32 %v3965, 1.0
    %v3967 = vrcp.pop %v3966
    %v3968 = vmul.f32 1.0, %v3967
    %v3969 = vxor.u32 %v3960, 2147483648
    %v3970 = vmul.f32 %v3969, 1.442695
    %v3971 = vpow.pop %v3970
    %v3972 = vadd.f32 %v3971, 1.0
    %v3973 = vrcp.pop %v3972
    %v3974 = vmul.f32 1.0, %v3973
    %v3975 = vtanh.pop %v3961
    %v3976 = vxor.u32 %v3962, 2147483648
    %v3977 = vmul.f32 %v3976, 1.442695
    %v3978 = vpow.pop %v3977
    %v3979 = vadd.f32 %v3978, 1.0
    %v3980 = vrcp.pop %v3979
    %v3981 = vmul.f32 1.0, %v3980
    %v3982 = vmul.f32 %v3974, %v3869
    %v3983 = vmul.f32 %v3968, %v3975
    %v3984 = vadd.f32 %v3982, %v3983
    %v3985 = vtanh.pop %v3984
    %v3986 = vmul.f32 %v3981, %v3985
    %v3987 = vld [vmem:[#allocation2 + $0xe0] sm:$0xff]
    %v3988 = vld [vmem:[#allocation2 + $0xe8] sm:$0xff]
    %v3989 = vld [vmem:[#allocation2 + $0xf0] sm:$0xff]
    %v3990 = vld [vmem:[#allocation2 + $0xf8] sm:$0xff]
    %v3991 = vpack.c.bf16 %v3986, %v3986
    %3992 = vmatprep.subr.bf16.mxu0 %v3156
    %3993 = vmatpush1.bf16.msra.mxu0 %v3155
    %3994 = vmatprep.subr.bf16.mxu0 %v3160
    %3995 = vmatpush1.bf16.msra.mxu0 %v3159
    %3996 = vmatprep.subr.bf16.mxu0 %v3164
    %3997 = vmatpush1.bf16.msra.mxu0 %v3163
    %3998 = vmatprep.subr.bf16.mxu0 %v3168
    %3999 = vmatpush1.bf16.msra.mxu0 %v3167
    %4000 = vmatprep.subr.bf16.mxu0 %v3172
    %4001 = vmatpush1.bf16.msra.mxu0 %v3171
    %4002 = vmatprep.subr.bf16.mxu0 %v3176
    %4003 = vmatpush1.bf16.msra.mxu0 %v3175
    %4004 = vmatprep.subr.bf16.mxu0 %v3180
    %4005 = vmatpush1.bf16.msra.mxu0 %v3179
    %4006 = vmatprep.subr.bf16.mxu0 %v3184
    %4007 = vmatpush1.bf16.msra.mxu0 %v3183
    %4008 = vmatprep.subr.bf16.mxu0 0
    %4009 = vmatpush1.bf16.msra.mxu0 0
    %4010 = vmatprep.subr.bf16.mxu0 0
    %4011 = vmatpush1.bf16.msra.mxu0 0
    %4012 = vmatprep.subr.bf16.mxu0 0
    %4013 = vmatpush1.bf16.msra.mxu0 0
    %4014 = vmatprep.subr.bf16.mxu0 0
    %4015 = vmatpush1.bf16.msra.mxu0 0
    %4016 = vmatprep.subr.bf16.mxu0 0
    %4017 = vmatpush1.bf16.msra.mxu0 0
    %4018 = vmatprep.subr.bf16.mxu0 0
    %4019 = vmatpush1.bf16.msra.mxu0 0
    %4020 = vmatprep.subr.bf16.mxu0 0
    %4021 = vmatpush1.bf16.msra.mxu0 0
    %4022 = vmatprep.subr.bf16.mxu0 0
    %4023 = vmatpush1.bf16.msra.mxu0 0
    %4024 = vmatprep.mubr.bf16.mxu0 0
    %4025 = vmatmul.mubr.bf16.gmra.mrb[0].mxu0 %v3991
    %v4026 = vpop.f32.mrb[0].mxu0
    %v4027 = vadd.f32 0.0, %v4026
    %v4028 = vpop.f32.mrb[0].mxu0
    %v4029 = vadd.f32 0.0, %v4028
    %v4030 = vpop.f32.mrb[0].mxu0
    %v4031 = vpop.f32.mrb[0].mxu0
    %4032 = vdwg.mxu0
    %4033 = vmatprep.subr.bf16.mxu0 %v3158
    %4034 = vmatpush1.bf16.msra.mxu0 %v3157
    %4035 = vmatprep.subr.bf16.mxu0 %v3162
    %4036 = vmatpush1.bf16.msra.mxu0 %v3161
    %4037 = vmatprep.subr.bf16.mxu0 %v3166
    %4038 = vmatpush1.bf16.msra.mxu0 %v3165
    %4039 = vmatprep.subr.bf16.mxu0 %v3170
    %4040 = vmatpush1.bf16.msra.mxu0 %v3169
    %4041 = vmatprep.subr.bf16.mxu0 %v3174
    %4042 = vmatpush1.bf16.msra.mxu0 %v3173
    %4043 = vmatprep.subr.bf16.mxu0 %v3178
    %4044 = vmatpush1.bf16.msra.mxu0 %v3177
    %4045 = vmatprep.subr.bf16.mxu0 %v3182
    %4046 = vmatpush1.bf16.msra.mxu0 %v3181
    %4047 = vmatprep.subr.bf16.mxu0 %v3186
    %4048 = vmatpush1.bf16.msra.mxu0 %v3185
    %4049 = vmatprep.subr.bf16.mxu0 0
    %4050 = vmatpush1.bf16.msra.mxu0 0
    %4051 = vmatprep.subr.bf16.mxu0 0
    %4052 = vmatpush1.bf16.msra.mxu0 0
    %4053 = vmatprep.subr.bf16.mxu0 0
    %4054 = vmatpush1.bf16.msra.mxu0 0
    %4055 = vmatprep.subr.bf16.mxu0 0
    %4056 = vmatpush1.bf16.msra.mxu0 0
    %4057 = vmatprep.subr.bf16.mxu0 0
    %4058 = vmatpush1.bf16.msra.mxu0 0
    %4059 = vmatprep.subr.bf16.mxu0 0
    %4060 = vmatpush1.bf16.msra.mxu0 0
    %4061 = vmatprep.subr.bf16.mxu0 0
    %4062 = vmatpush1.bf16.msra.mxu0 0
    %4063 = vmatprep.subr.bf16.mxu0 0
    %4064 = vmatpush1.bf16.msra.mxu0 0
    %4065 = vmatprep.mubr.bf16.mxu0 0
    %4066 = vmatmul.mubr.bf16.gmra.mrb[0].mxu0 %v3991
    %v4067 = vpop.f32.mrb[0].mxu0
    %v4068 = vadd.f32 0.0, %v4067
    %v4069 = vpop.f32.mrb[0].mxu0
    %v4070 = vadd.f32 0.0, %v4069
    %v4071 = vpop.f32.mrb[0].mxu0
    %v4072 = vpop.f32.mrb[0].mxu0
    %4073 = vdwg.mxu0
    %v4074 = vadd.f32 %v3987, %v4027
    %v4075 = vadd.f32 %v3988, %v4029
    %v4076 = vadd.f32 %v3989, %v4068
    %v4077 = vadd.f32 %v3990, %v4070
    %v4078 = vxor.u32 %v4074, 2147483648
    %v4079 = vmul.f32 %v4078, 1.442695
    %v4080 = vpow.pop %v4079
    %v4081 = vadd.f32 %v4080, 1.0
    %v4082 = vrcp.pop %v4081
    %v4083 = vmul.f32 1.0, %v4082
    %v4084 = vxor.u32 %v4075, 2147483648
    %v4085 = vmul.f32 %v4084, 1.442695
    %v4086 = vpow.pop %v4085
    %v4087 = vadd.f32 %v4086, 1.0
    %v4088 = vrcp.pop %v4087
    %v4089 = vmul.f32 1.0, %v4088
    %v4090 = vtanh.pop %v4076
    %v4091 = vxor.u32 %v4077, 2147483648
    %v4092 = vmul.f32 %v4091, 1.442695
    %v4093 = vpow.pop %v4092
    %v4094 = vadd.f32 %v4093, 1.0
    %v4095 = vrcp.pop %v4094
    %v4096 = vmul.f32 1.0, %v4095
    %v4097 = vmul.f32 %v4089, %v3984
    %v4098 = vmul.f32 %v4083, %v4090
    %v4099 = vadd.f32 %v4097, %v4098
    %v4100 = vtanh.pop %v4099
    %v4101 = vmul.f32 %v4096, %v4100
    %s4102 = smul.u32 %s2909, 1
    %s4103 = sshll.u32 %s4102, 4
    %4104 = dma.done %s111, %s4103
    %v4105 = vpack.c.bf16 %v4101, %v4101
    %v4106 = vld [vmem:[#allocation6] sm:$0xff]
    %v4107 = vld [vmem:[#allocation6 + $0x8] sm:$0xff]
    %v4108 = vld [vmem:[#allocation6 + $0x10] sm:$0xff]
    %v4109 = vld [vmem:[#allocation6 + $0x18] sm:$0xff]
    %v4110 = vld [vmem:[#allocation6 + $0x20] sm:$0xff]
    %v4111 = vld [vmem:[#allocation6 + $0x28] sm:$0xff]
    %v4112 = vld [vmem:[#allocation6 + $0x30] sm:$0xff]
    %v4113 = vld [vmem:[#allocation6 + $0x38] sm:$0xff]
    %v4114 = vld [vmem:[%s8] sm:$0x1]
    %v4116 = vlaneseq
    %v4117 = vshrl.u32 %v4116, 7
    %v4118 = vsub.s32 0, %v4117
    %v4119 = vrot.slane %v4114, %v4118
    %4121 = vmatprep.subr.bf16.mxu0 0
    %4122 = vmatpush1.bf16.msra.mxu0 %v4106
    %4123 = vmatprep.subr.bf16.mxu0 0
    %4124 = vmatpush1.bf16.msra.mxu0 %v4107
    %4125 = vmatprep.subr.bf16.mxu0 0
    %4126 = vmatpush1.bf16.msra.mxu0 %v4108
    %4127 = vmatprep.subr.bf16.mxu0 0
    %4128 = vmatpush1.bf16.msra.mxu0 %v4109
    %4129 = vmatprep.subr.bf16.mxu0 0
    %4130 = vmatpush1.bf16.msra.mxu0 %v4110
    %4131 = vmatprep.subr.bf16.mxu0 0
    %4132 = vmatpush1.bf16.msra.mxu0 %v4111
    %4133 = vmatprep.subr.bf16.mxu0 0
    %4134 = vmatpush1.bf16.msra.mxu0 %v4112
    %4135 = vmatprep.subr.bf16.mxu0 0
    %4136 = vmatpush1.bf16.msra.mxu0 %v4113
    %4137 = vmatprep.subr.bf16.mxu0 0
    %4138 = vmatpush1.bf16.msra.mxu0 0
    %4139 = vmatprep.subr.bf16.mxu0 0
    %4140 = vmatpush1.bf16.msra.mxu0 0
    %4141 = vmatprep.subr.bf16.mxu0 0
    %4142 = vmatpush1.bf16.msra.mxu0 0
    %4143 = vmatprep.subr.bf16.mxu0 0
    %4144 = vmatpush1.bf16.msra.mxu0 0
    %4145 = vmatprep.subr.bf16.mxu0 0
    %4146 = vmatpush1.bf16.msra.mxu0 0
    %4147 = vmatprep.subr.bf16.mxu0 0
    %4148 = vmatpush1.bf16.msra.mxu0 0
    %4149 = vmatprep.subr.bf16.mxu0 0
    %4150 = vmatpush1.bf16.msra.mxu0 0
    %4151 = vmatprep.subr.bf16.mxu0 0
    %4152 = vmatpush1.bf16.msra.mxu0 0
    %4153 = vmatprep.mubr.bf16.mxu0 0
    %4154 = vmatmul.mubr.bf16.gmra.mrb[0].mxu0 %v4105
    %v4155 = vpop.f32.mrb[0].mxu0
    %v4156 = vadd.f32 %v4119, %v4155
    %v4157 = vpop.f32.mrb[0].mxu0
    %v4158 = vpop.f32.mrb[0].mxu0
    %v4159 = vpop.f32.mrb[0].mxu0
    %4160 = vdwg.mxu0
    %4161 = vst [vmem:[%s9] sm:$0xff] %v4156
    // Predicated region
    $region64: #{lstm_model_forward.1} parent=1 // pred_check
      _
    $region65: #{lstm_model_forward.1} parent=1 // pred_check_branch
      %4163 = sbr.rel (0) target = $region67
    $region66: #{lstm_model_forward.1} parent=1 // pred_region
      _
    $region67: #{lstm_model_forward.1} parent=1 // pred_fallthru
      _
    // Predicated region
    $region68: #{lstm_model_forward.1} parent=1 // pred_check
      _
    $region69: #{lstm_model_forward.1} parent=1 // pred_check_branch
      %4165 = sbr.rel (0) target = $region71
    $region70: #{lstm_model_forward.1} parent=1 // pred_region
      _
    $region71: #{lstm_model_forward.1} parent=1 // pred_fallthru
      _
    %4166 = vsyncpa [#allocation9], 1
  %4167 = vsyncmov [#allocation7]
  %s4168 = vpop.sfrf %4167
  %p4169 = scmp.eq.s32.totalorder %s4168, 0
  %p4170 = pneg %p4169
  %4172 = shalt.err (%p4170)
  %s4173 = scalar_lea.sflag [#allocation7], 1
  %4174 = vsyncmov %s4173
  %s4175 = vpop.sfrf %4174
  %p4176 = scmp.eq.s32.totalorder %s4175, 0
  %p4177 = pneg %p4176
  %4179 = shalt.err (%p4177)
  %s4180 = scalar_lea.sflag [#allocation7], 2
  %4181 = vsyncmov %s4180
  %s4182 = vpop.sfrf %4181
  %p4183 = scmp.eq.s32.totalorder %s4182, 0
  %p4184 = pneg %p4183
  %4186 = shalt.err (%p4184)

</llo_original>
